<compile_context>
chip_gen: v7x
topology: tpu7x:2x2x1
jax: 0.10.0
libtpu: 0.0.40
codegen_flags: <defaults>
</compile_context>

<pallas_src>
import functools

import numpy as np

import jax
import jax.numpy as jnp
from jax.experimental import pallas as pl
from jax.experimental.pallas import tpu as pltpu


_VMEM_LIMIT_BYTES = 48 * 1024 * 1024          # usable on v7x (64 MiB) and below
_UPSAMPLE_TILE_VMEM_BUDGET = 16 * 1024 * 1024  # per-grid-step block budget (x2 buffers)


# ----------------------------------------------------------------------------
# Constant matrices (numpy, built once per shape)
# ----------------------------------------------------------------------------
@functools.lru_cache(maxsize=None)
def _gather_matrix_np(wp, wo):
    """0/1 selection matrix (Wp, 2*Wo+1): columns [0, Wo] gather even input
    columns w = 2j, columns [Wo+1, 2*Wo] gather odd columns w = 2j+1.
    Used inside the conv kernel to do the stride-2 deinterleave on the MXU."""
    u = np.zeros((wp, 2 * wo + 1), np.float32)
    for j in range(wo + 1):
        u[2 * j, j] = 1.0
    for j in range(wo):
        u[2 * j + 1, wo + 1 + j] = 1.0
    return u


@functools.lru_cache(maxsize=None)
def _interp_matrix(out_size, in_size):
    """Row-stochastic (out, in) matrix reproducing F.interpolate bilinear,
    align_corners=False, along one axis."""
    scale = in_size / out_size
    src = np.maximum((np.arange(out_size, dtype=np.float64) + 0.5) * scale - 0.5, 0.0)
    i0 = np.clip(np.floor(src).astype(np.int64), 0, in_size - 1)
    i1 = np.clip(i0 + 1, 0, in_size - 1)
    w1 = (src - i0).astype(np.float32)
    w0 = 1.0 - w1
    rows = np.arange(out_size)
    a = np.zeros((out_size, in_size), np.float32)
    a[rows, i0] += w0
    a[rows, i1] += w1
    return a


# ----------------------------------------------------------------------------
# Kernel 1: fused (3x3 stride-2 conv + bias + ReLU) + (1x1 head conv + bias)
# ----------------------------------------------------------------------------
def _conv3x3s2_head_kernel(x_ref, u_ref, w_ref, b_ref, wh_ref, bh_ref, *refs,
                           Ho, Wo, emit_feat):
    """Per-image block.

    x_ref : (Hp, Cin, Wp) bf16   zero-padded input (pad=1), W on lanes
    u_ref : (Wp, 2*Wo+1) bf16    0/1 even/odd gather matrix (resident)
    w_ref : (Cout, 9*Cin) bf16   conv taps, column index = (kh*3+kw)*Cin + c
    b_ref : (Cout, 1)  f32
    wh_ref: (ncls, Cout) bf16    1x1 head weights (resident)
    bh_ref: (ncls, 1)  f32
    refs  : [feat_ref (Ho+2, Cout, Wo+2) bf16 if emit_feat,]
            logit_ref (ncls, Ho*Wo) bf16,
            cols_ref  (9*Cin, Ho*Wo) bf16 VMEM scratch
    """
    if emit_feat:
        feat_ref, logit_ref, cols_ref = refs
    else:
        logit_ref, cols_ref = refs
    cin = x_ref.shape[1]

    # ---- fused im2col ------------------------------------------------------
    # Stride-2 deinterleave along W via a 0/1 selection matmul per padded
    # input row (idle-MXU work instead of an HBM space-to-depth pass).
    u = u_ref[...]
    gathered = []
    for r in range(2 * Ho + 1):                      # only rows 0 .. 2*Ho are used
        g = jnp.dot(x_ref[r], u, preferred_element_type=jnp.float32)
        gathered.append(g.astype(jnp.bfloat16))      # (Cin, 2*Wo+1): [even | odd]
    # column offset of horizontal tap kw inside a gathered row
    kw_off = (0, Wo + 1, 1)                          # kw=0 even, kw=1 odd, kw=2 even+1
    for ho in range(Ho):
        for kh in range(3):
            g = gathered[2 * ho + kh]
            for kw in range(3):
                t = kh * 3 + kw
                cols_ref[t * cin:(t + 1) * cin, ho * Wo:(ho + 1) * Wo] = (
                    g[:, kw_off[kw]:kw_off[kw] + Wo])
    cols = cols_ref[...]                             # (9*Cin, Ho*Wo)

    # ---- single K = 9*Cin contraction; weights stay MXU-stationary ---------
    acc = jnp.dot(w_ref[...], cols, preferred_element_type=jnp.float32)  # (Cout, Ho*Wo)
    feat = jnp.maximum(acc + b_ref[...], 0.0)
    feat_bf = feat.astype(jnp.bfloat16)

    # ---- fused 1x1 classifier head, lane-dense (ncls, Ho*Wo) ---------------
    logits = jnp.dot(wh_ref[...], feat_bf, preferred_element_type=jnp.float32)
    logit_ref[...] = (logits + bh_ref[...]).astype(logit_ref.dtype)

    if emit_feat:
        # Emit features already zero-padded (pad=1) in exactly the layout the
        # next conv stage reads -> no inter-stage HBM relayout pass.
        feat_ref[...] = jnp.zeros(feat_ref.shape, feat_ref.dtype)
        for ho in range(Ho):
            feat_ref[1 + ho, :, 1:1 + Wo] = feat_bf[:, ho * Wo:(ho + 1) * Wo]


def conv3x3s2_head(x_pad, w_conv, b_conv, w_head, b_head, *, emit_feat):
    """Fused 3x3/s2/p1 conv + bias + ReLU + 1x1 head.

    x_pad: (N, Hp, Cin, Wp) bf16, already zero-padded by 1 on H and W
           (either by the wrapper for stage 1 or by the previous stage).
    Returns (feat_pad or None, logits):
      feat_pad: (N, Ho+2, Cout, Wo+2) bf16  -- padded input for the next stage
      logits  : (N, ncls, Ho, Wo) bf16
    """
    n, hp, cin, wp = x_pad.shape
    cout = w_conv.shape[0]
    ncls = w_head.shape[0]
    assert w_conv.shape == (cout, cin, 3, 3)
    ho = (hp - 3) // 2 + 1
    wo = (wp - 3) // 2 + 1

    u = jnp.asarray(_gather_matrix_np(wp, wo)).astype(jnp.bfloat16)
    # (Cout, Cin, 3, 3) -> (Cout, 9*Cin) with flat index (kh*3+kw)*Cin + c
    w2d = jnp.transpose(w_conv, (0, 2, 3, 1)).reshape(cout, 9 * cin).astype(jnp.bfloat16)
    bc = b_conv.reshape(cout, 1).astype(jnp.float32)
    wh = w_head.reshape(ncls, cout).astype(jnp.bfloat16)
    bh = b_head.reshape(ncls, 1).astype(jnp.float32)

    logit_shape = jax.ShapeDtypeStruct((n, ncls, ho * wo), jnp.bfloat16)
    logit_spec = pl.BlockSpec((None, ncls, ho * wo), lambda i: (i, 0, 0))
    if emit_feat:
        out_shape = (jax.ShapeDtypeStruct((n, ho + 2, cout, wo + 2), jnp.bfloat16),
                     logit_shape)
        out_specs = (pl.BlockSpec((None, ho + 2, cout, wo + 2), lambda i: (i, 0, 0, 0)),
                     logit_spec)
    else:
        out_shape = logit_shape
        out_specs = logit_spec

    kernel = functools.partial(_conv3x3s2_head_kernel, Ho=ho, Wo=wo, emit_feat=emit_feat)
    # TODO(synk): for large images, additionally tile the grid over output-row
    # blocks (halo'd input windows via manual DMA) so the per-step working set
    # fits v7x's 64 MiB VMEM; at these shapes one image per step is tiny.
    outs = pl.pallas_call(
        kernel,
        out_shape=out_shape,
        grid=(n,),
        in_specs=[
            pl.BlockSpec((None, hp, cin, wp), lambda i: (i, 0, 0, 0)),
            pl.BlockSpec((wp, 2 * wo + 1), lambda i: (0, 0)),   # resident gather mat
            pl.BlockSpec((cout, 9 * cin), lambda i: (0, 0)),    # resident conv W
            pl.BlockSpec((cout, 1), lambda i: (0, 0)),          # resident conv b
            pl.BlockSpec((ncls, cout), lambda i: (0, 0)),       # resident head W
            pl.BlockSpec((ncls, 1), lambda i: (0, 0)),          # resident head b
        ],
        out_specs=out_specs,
        scratch_shapes=[pltpu.VMEM((9 * cin, ho * wo), jnp.bfloat16)],
        compiler_params=pltpu.CompilerParams(
            dimension_semantics=("parallel",),
            vmem_limit_bytes=_VMEM_LIMIT_BYTES),
    )(x_pad, u, w2d, bc, wh, bh)

    if emit_feat:
        feat_pad, logits = outs
    else:
        feat_pad, logits = None, outs
    return feat_pad, logits.reshape(n, ncls, ho, wo)


# ----------------------------------------------------------------------------
# Kernel 2: batched separable bilinear resize (align_corners=False)
# ----------------------------------------------------------------------------
def _bilinear_kernel(ah_ref, x_ref, awt_ref, o_ref, *, fold_batch):
    bt, _, _ = x_ref.shape
    out_h = ah_ref.shape[0]
    ah = ah_ref[...]
    awt = awt_ref[...]
    # Row interpolation: shared LHS (no broadcast), one small dot per slice.
    rows = [jnp.dot(ah, x_ref[b], preferred_element_type=jnp.float32).astype(jnp.bfloat16)
            for b in range(bt)]
    if fold_batch:
        # Column interpolation with the batch tile folded into the free dim:
        # (bt*out_h, wf) @ (wf, out_w) -- a single lane-dense matmul.
        t = jnp.concatenate(rows, axis=0)
        y = jnp.dot(t, awt, preferred_element_type=jnp.float32)
        for b in range(bt):
            o_ref[b] = y[b * out_h:(b + 1) * out_h]
    else:
        for b in range(bt):
            o_ref[b] = jnp.dot(rows[b], awt, preferred_element_type=jnp.float32)


def upsample_bilinear(logits, out_h, out_w):
    """(N, C, hf, wf) -> (N, C, out_h, out_w) f32, bilinear align_corners=False."""
    n, c, hf, wf = logits.shape
    b = n * c
    x = logits.reshape(b, hf, wf).astype(jnp.bfloat16)
    ah = jnp.asarray(_interp_matrix(out_h, hf)).astype(jnp.bfloat16)
    awt = jnp.asarray(_interp_matrix(out_w, wf).T).astype(jnp.bfloat16)

    # Budget-derived batch tile (double-buffered blocks must fit VMEM budget).
    per_slice = 2 * hf * wf + 4 * out_h * out_w
    bt = int(max(1, min(b, _UPSAMPLE_TILE_VMEM_BUDGET // (2 * per_slice), 32)))
    b_pad = pl.cdiv(b, bt) * bt
    if b_pad != b:
        x = jnp.pad(x, ((0, b_pad - b), (0, 0), (0, 0)))   # guard OOB reads

    kernel = functools.partial(_bilinear_kernel,
                               fold_batch=(out_h % 8 == 0 and bt > 1))
    y = pl.pallas_call(
        kernel,
        out_shape=jax.ShapeDtypeStruct((b_pad, out_h, out_w), jnp.float32),
        grid=(b_pad // bt,),
        in_specs=[
            pl.BlockSpec((out_h, hf), lambda i: (0, 0)),       # resident row interp
            pl.BlockSpec((bt, hf, wf), lambda i: (i, 0, 0)),
            pl.BlockSpec((wf, out_w), lambda i: (0, 0)),       # resident col interp
        ],
        out_specs=pl.BlockSpec((bt, out_h, out_w), lambda i: (i, 0, 0)),
        compiler_params=pltpu.CompilerParams(
            dimension_semantics=("parallel",),
            vmem_limit_bytes=_VMEM_LIMIT_BYTES),
    )(ah, x, awt)
    return y[:b].reshape(n, c, out_h, out_w)


# ----------------------------------------------------------------------------
# _SimpleSegmentationModel forward
# ----------------------------------------------------------------------------
def init_params(key, c_in=4, c1=8, c2=16, num_classes=3):
    ks = jax.random.split(key, 4)
    return {
        "bb1_w": 0.1 * jax.random.normal(ks[0], (c1, c_in, 3, 3), jnp.float32),
        "bb1_b": 0.01 * jnp.arange(c1, dtype=jnp.float32),
        "bb2_w": 0.1 * jax.random.normal(ks[1], (c2, c1, 3, 3), jnp.float32),
        "bb2_b": 0.01 * jnp.arange(c2, dtype=jnp.float32),
        "cls_w": 0.1 * jax.random.normal(ks[2], (num_classes, c2, 1, 1), jnp.float32),
        "cls_b": 0.01 * jnp.arange(num_classes, dtype=jnp.float32),
        "aux_w": 0.1 * jax.random.normal(ks[3], (num_classes, c1, 1, 1), jnp.float32),
        "aux_b": 0.01 * jnp.arange(num_classes, dtype=jnp.float32),
    }


def simple_segmentation_forward(params, x):
    """Mirrors _SimpleSegmentationModel.forward: returns (out, aux).  x: NCHW f32."""
    n, cin, h, w = x.shape
    # Model-boundary layout change + zero pad (pad=1) for the first conv stage.
    xh = jnp.transpose(x, (0, 2, 1, 3)).astype(jnp.bfloat16)          # (N, H, C, W)
    x_pad = jnp.pad(xh, ((0, 0), (1, 1), (0, 0), (1, 1)))

    # backbone stage 1 -> features['aux'], with the aux 1x1 classifier fused in;
    # emits its features already padded for stage 2 (no inter-stage HBM pass).
    feat1_pad, aux_logits = conv3x3s2_head(
        x_pad, params["bb1_w"], params["bb1_b"], params["aux_w"], params["aux_b"],
        emit_feat=True)
    # backbone stage 2 -> features['out'], with the main classifier fused in.
    _, cls_logits = conv3x3s2_head(
        feat1_pad, params["bb2_w"], params["bb2_b"], params["cls_w"], params["cls_b"],
        emit_feat=False)

    out = upsample_bilinear(cls_logits, h, w)   # F.interpolate(classifier(out))
    aux = upsample_bilinear(aux_logits, h, w)   # F.interpolate(aux_classifier(aux))
    return out, aux


# ----------------------------------------------------------------------------
# Pure-JAX f32 reference (for a tolerance check against the bf16 kernels)
# ----------------------------------------------------------------------------
def _ref_conv(x, w, b, stride, pad):
    y = jax.lax.conv_general_dilated(
        x, w, (stride, stride), ((pad, pad), (pad, pad)),
        dimension_numbers=("NCHW", "OIHW", "NCHW"),
        precision=jax.lax.Precision.HIGHEST)
    return y + b.reshape(1, -1, 1, 1)


def _ref_resize(x, out_h, out_w):
    ah = jnp.asarray(_interp_matrix(out_h, x.shape[2]))
    aw = jnp.asarray(_interp_matrix(out_w, x.shape[3]))
    return jnp.einsum("yh,nchw,xw->ncyx", ah, x, aw)


def _ref_forward(params, x):
    h, w = x.shape[-2:]
    f1 = jax.nn.relu(_ref_conv(x, params["bb1_w"], params["bb1_b"], 2, 1))
    f2 = jax.nn.relu(_ref_conv(f1, params["bb2_w"], params["bb2_b"], 2, 1))
    out = _ref_resize(_ref_conv(f2, params["cls_w"], params["cls_b"], 1, 0), h, w)
    aux = _ref_resize(_ref_conv(f1, params["aux_w"], params["aux_b"], 1, 0), h, w)
    return out, aux


if __name__ == "__main__":
    key = jax.random.PRNGKey(0)
    k_x, k_p = jax.random.split(key)
    x = jax.random.normal(k_x, (2, 4, 16, 16), dtype=jnp.float32)  # NCHW
    params = init_params(k_p)

    fwd = jax.jit(simple_segmentation_forward)
    out, aux = fwd(params, x)
    out = jax.block_until_ready(out)
    aux = jax.block_until_ready(aux)

    assert out.shape == (2, 3, 16, 16), out.shape
    assert aux.shape == (2, 3, 16, 16), aux.shape
    assert jnp.all(jnp.isfinite(out)) and jnp.all(jnp.isfinite(aux))

    # bf16 activations/weights in the kernels vs f32 reference -> loose tolerance.
    ref_out, ref_aux = _ref_forward(params, x)
    np.testing.assert_allclose(np.asarray(out), np.asarray(ref_out), atol=0.1, rtol=0.1)
    np.testing.assert_allclose(np.asarray(aux), np.asarray(ref_aux), atol=0.1, rtol=0.1)

    print("KERNEL_OK")
</pallas_src>

<mosaic_0001>
module attributes {stable_mosaic.version = 11 : i64} {
  func.func @_conv3x3s2_head_kernel(%arg0: i32, %arg1: memref<1x10x8x10xbf16, #tpu.memory_space<vmem>>, %arg2: memref<10x9xbf16, #tpu.memory_space<vmem>>, %arg3: memref<16x72xbf16, #tpu.memory_space<vmem>>, %arg4: memref<16x1xf32, #tpu.memory_space<vmem>>, %arg5: memref<3x16xbf16, #tpu.memory_space<vmem>>, %arg6: memref<3x1xf32, #tpu.memory_space<vmem>>, %arg7: memref<1x3x16xbf16, #tpu.memory_space<vmem>>, %arg8: memref<72x16xbf16, #tpu.memory_space<vmem>>) attributes {dimension_semantics = [#tpu.dimension_semantics<parallel>], iteration_bounds = array<i64: 2>, scalar_prefetch = 0 : i64, scratch_operands = 1 : i64, tpu.core_type = #tpu.core_type<tc>, window_params = [{transform_indices = @transform_0, window_bounds = array<i64: 1, 10, 8, 10>}, {pipeline_mode = #tpu.pipeline_mode<synchronous>, transform_indices = @transform_1, window_bounds = array<i64: 10, 9>}, {pipeline_mode = #tpu.pipeline_mode<synchronous>, transform_indices = @transform_2, window_bounds = array<i64: 16, 72>}, {pipeline_mode = #tpu.pipeline_mode<synchronous>, transform_indices = @transform_3, window_bounds = array<i64: 16, 1>}, {pipeline_mode = #tpu.pipeline_mode<synchronous>, transform_indices = @transform_4, window_bounds = array<i64: 3, 16>}, {pipeline_mode = #tpu.pipeline_mode<synchronous>, transform_indices = @transform_5, window_bounds = array<i64: 3, 1>}, {transform_indices = @transform_6, window_bounds = array<i64: 1, 3, 16>}]} {
    %c0 = arith.constant 0 : index
    %c0_0 = arith.constant 0 : index
    %0 = vector.load %arg2[%c0, %c0_0] : memref<10x9xbf16, #tpu.memory_space<vmem>>, vector<10x9xbf16>
    %c0_1 = arith.constant 0 : index
    %c0_2 = arith.constant 0 : index
    %c0_3 = arith.constant 0 : index
    %c0_4 = arith.constant 0 : index
    %1 = vector.load %arg1[%c0_1, %c0_2, %c0_3, %c0_4] : memref<1x10x8x10xbf16, #tpu.memory_space<vmem>>, vector<1x1x8x10xbf16>
    %2 = vector.shape_cast %1 : vector<1x1x8x10xbf16> to vector<8x10xbf16>
    %cst = arith.constant dense<0.000000e+00> : vector<8x9xf32>
    %3 = tpu.matmul %2, %0, %cst {dimension_numbers = #tpu.dot_dimension_numbers<[1], [0], [0], [1], [0, 0, 1, 1], [], []>} : vector<8x10xbf16>, vector<10x9xbf16>, vector<8x9xf32> -> vector<8x9xf32>
    %4 = arith.truncf %3 : vector<8x9xf32> to vector<8x9xbf16>
    %c0_5 = arith.constant 0 : index
    %c1 = arith.constant 1 : index
    %c0_6 = arith.constant 0 : index
    %c0_7 = arith.constant 0 : index
    %5 = vector.load %arg1[%c0_5, %c1, %c0_6, %c0_7] : memref<1x10x8x10xbf16, #tpu.memory_space<vmem>>, vector<1x1x8x10xbf16>
    %6 = vector.shape_cast %5 : vector<1x1x8x10xbf16> to vector<8x10xbf16>
    %cst_8 = arith.constant dense<0.000000e+00> : vector<8x9xf32>
    %7 = tpu.matmul %6, %0, %cst_8 {dimension_numbers = #tpu.dot_dimension_numbers<[1], [0], [0], [1], [0, 0, 1, 1], [], []>} : vector<8x10xbf16>, vector<10x9xbf16>, vector<8x9xf32> -> vector<8x9xf32>
    %8 = arith.truncf %7 : vector<8x9xf32> to vector<8x9xbf16>
    %c0_9 = arith.constant 0 : index
    %c2 = arith.constant 2 : index
    %c0_10 = arith.constant 0 : index
    %c0_11 = arith.constant 0 : index
    %9 = vector.load %arg1[%c0_9, %c2, %c0_10, %c0_11] : memref<1x10x8x10xbf16, #tpu.memory_space<vmem>>, vector<1x1x8x10xbf16>
    %10 = vector.shape_cast %9 : vector<1x1x8x10xbf16> to vector<8x10xbf16>
    %cst_12 = arith.constant dense<0.000000e+00> : vector<8x9xf32>
    %11 = tpu.matmul %10, %0, %cst_12 {dimension_numbers = #tpu.dot_dimension_numbers<[1], [0], [0], [1], [0, 0, 1, 1], [], []>} : vector<8x10xbf16>, vector<10x9xbf16>, vector<8x9xf32> -> vector<8x9xf32>
    %12 = arith.truncf %11 : vector<8x9xf32> to vector<8x9xbf16>
    %c0_13 = arith.constant 0 : index
    %c3 = arith.constant 3 : index
    %c0_14 = arith.constant 0 : index
    %c0_15 = arith.constant 0 : index
    %13 = vector.load %arg1[%c0_13, %c3, %c0_14, %c0_15] : memref<1x10x8x10xbf16, #tpu.memory_space<vmem>>, vector<1x1x8x10xbf16>
    %14 = vector.shape_cast %13 : vector<1x1x8x10xbf16> to vector<8x10xbf16>
    %cst_16 = arith.constant dense<0.000000e+00> : vector<8x9xf32>
    %15 = tpu.matmul %14, %0, %cst_16 {dimension_numbers = #tpu.dot_dimension_numbers<[1], [0], [0], [1], [0, 0, 1, 1], [], []>} : vector<8x10xbf16>, vector<10x9xbf16>, vector<8x9xf32> -> vector<8x9xf32>
    %16 = arith.truncf %15 : vector<8x9xf32> to vector<8x9xbf16>
    %c0_17 = arith.constant 0 : index
    %c4 = arith.constant 4 : index
    %c0_18 = arith.constant 0 : index
    %c0_19 = arith.constant 0 : index
    %17 = vector.load %arg1[%c0_17, %c4, %c0_18, %c0_19] : memref<1x10x8x10xbf16, #tpu.memory_space<vmem>>, vector<1x1x8x10xbf16>
    %18 = vector.shape_cast %17 : vector<1x1x8x10xbf16> to vector<8x10xbf16>
    %cst_20 = arith.constant dense<0.000000e+00> : vector<8x9xf32>
    %19 = tpu.matmul %18, %0, %cst_20 {dimension_numbers = #tpu.dot_dimension_numbers<[1], [0], [0], [1], [0, 0, 1, 1], [], []>} : vector<8x10xbf16>, vector<10x9xbf16>, vector<8x9xf32> -> vector<8x9xf32>
    %20 = arith.truncf %19 : vector<8x9xf32> to vector<8x9xbf16>
    %c0_21 = arith.constant 0 : index
    %c5 = arith.constant 5 : index
    %c0_22 = arith.constant 0 : index
    %c0_23 = arith.constant 0 : index
    %21 = vector.load %arg1[%c0_21, %c5, %c0_22, %c0_23] : memref<1x10x8x10xbf16, #tpu.memory_space<vmem>>, vector<1x1x8x10xbf16>
    %22 = vector.shape_cast %21 : vector<1x1x8x10xbf16> to vector<8x10xbf16>
    %cst_24 = arith.constant dense<0.000000e+00> : vector<8x9xf32>
    %23 = tpu.matmul %22, %0, %cst_24 {dimension_numbers = #tpu.dot_dimension_numbers<[1], [0], [0], [1], [0, 0, 1, 1], [], []>} : vector<8x10xbf16>, vector<10x9xbf16>, vector<8x9xf32> -> vector<8x9xf32>
    %24 = arith.truncf %23 : vector<8x9xf32> to vector<8x9xbf16>
    %c0_25 = arith.constant 0 : index
    %c6 = arith.constant 6 : index
    %c0_26 = arith.constant 0 : index
    %c0_27 = arith.constant 0 : index
    %25 = vector.load %arg1[%c0_25, %c6, %c0_26, %c0_27] : memref<1x10x8x10xbf16, #tpu.memory_space<vmem>>, vector<1x1x8x10xbf16>
    %26 = vector.shape_cast %25 : vector<1x1x8x10xbf16> to vector<8x10xbf16>
    %cst_28 = arith.constant dense<0.000000e+00> : vector<8x9xf32>
    %27 = tpu.matmul %26, %0, %cst_28 {dimension_numbers = #tpu.dot_dimension_numbers<[1], [0], [0], [1], [0, 0, 1, 1], [], []>} : vector<8x10xbf16>, vector<10x9xbf16>, vector<8x9xf32> -> vector<8x9xf32>
    %28 = arith.truncf %27 : vector<8x9xf32> to vector<8x9xbf16>
    %c0_29 = arith.constant 0 : index
    %c7 = arith.constant 7 : index
    %c0_30 = arith.constant 0 : index
    %c0_31 = arith.constant 0 : index
    %29 = vector.load %arg1[%c0_29, %c7, %c0_30, %c0_31] : memref<1x10x8x10xbf16, #tpu.memory_space<vmem>>, vector<1x1x8x10xbf16>
    %30 = vector.shape_cast %29 : vector<1x1x8x10xbf16> to vector<8x10xbf16>
    %cst_32 = arith.constant dense<0.000000e+00> : vector<8x9xf32>
    %31 = tpu.matmul %30, %0, %cst_32 {dimension_numbers = #tpu.dot_dimension_numbers<[1], [0], [0], [1], [0, 0, 1, 1], [], []>} : vector<8x10xbf16>, vector<10x9xbf16>, vector<8x9xf32> -> vector<8x9xf32>
    %32 = arith.truncf %31 : vector<8x9xf32> to vector<8x9xbf16>
    %c0_33 = arith.constant 0 : index
    %c8 = arith.constant 8 : index
    %c0_34 = arith.constant 0 : index
    %c0_35 = arith.constant 0 : index
    %33 = vector.load %arg1[%c0_33, %c8, %c0_34, %c0_35] : memref<1x10x8x10xbf16, #tpu.memory_space<vmem>>, vector<1x1x8x10xbf16>
    %34 = vector.shape_cast %33 : vector<1x1x8x10xbf16> to vector<8x10xbf16>
    %cst_36 = arith.constant dense<0.000000e+00> : vector<8x9xf32>
    %35 = tpu.matmul %34, %0, %cst_36 {dimension_numbers = #tpu.dot_dimension_numbers<[1], [0], [0], [1], [0, 0, 1, 1], [], []>} : vector<8x10xbf16>, vector<10x9xbf16>, vector<8x9xf32> -> vector<8x9xf32>
    %36 = arith.truncf %35 : vector<8x9xf32> to vector<8x9xbf16>
    %37 = vector.extract_strided_slice %4 {offsets = [0, 0], sizes = [8, 4], strides = [1, 1]} : vector<8x9xbf16> to vector<8x4xbf16>
    %c0_37 = arith.constant 0 : index
    %c0_38 = arith.constant 0 : index
    %38 = vector.load %arg8[%c0_37, %c0_38] : memref<72x16xbf16, #tpu.memory_space<vmem>>, vector<8x4xbf16>
    tpu.vector_store %arg8[%c0_37, %c0_38], %37 {strides = array<i32>} : memref<72x16xbf16, #tpu.memory_space<vmem>>, vector<8x4xbf16>,
    %39 = vector.extract_strided_slice %4 {offsets = [0, 5], sizes = [8, 4], strides = [1, 1]} : vector<8x9xbf16> to vector<8x4xbf16>
    %c8_39 = arith.constant 8 : index
    %c0_40 = arith.constant 0 : index
    %40 = vector.load %arg8[%c8_39, %c0_40] : memref<72x16xbf16, #tpu.memory_space<vmem>>, vector<8x4xbf16>
    tpu.vector_store %arg8[%c8_39, %c0_40], %39 {strides = array<i32>} : memref<72x16xbf16, #tpu.memory_space<vmem>>, vector<8x4xbf16>,
    %41 = vector.extract_strided_slice %4 {offsets = [0, 1], sizes = [8, 4], strides = [1, 1]} : vector<8x9xbf16> to vector<8x4xbf16>
    %c16 = arith.constant 16 : index
    %c0_41 = arith.constant 0 : index
    %42 = vector.load %arg8[%c16, %c0_41] : memref<72x16xbf16, #tpu.memory_space<vmem>>, vector<8x4xbf16>
    tpu.vector_store %arg8[%c16, %c0_41], %41 {strides = array<i32>} : memref<72x16xbf16, #tpu.memory_space<vmem>>, vector<8x4xbf16>,
    %43 = vector.extract_strided_slice %8 {offsets = [0, 0], sizes = [8, 4], strides = [1, 1]} : vector<8x9xbf16> to vector<8x4xbf16>
    %c24 = arith.constant 24 : index
    %c0_42 = arith.constant 0 : index
    %44 = vector.load %arg8[%c24, %c0_42] : memref<72x16xbf16, #tpu.memory_space<vmem>>, vector<8x4xbf16>
    tpu.vector_store %arg8[%c24, %c0_42], %43 {strides = array<i32>} : memref<72x16xbf16, #tpu.memory_space<vmem>>, vector<8x4xbf16>,
    %45 = vector.extract_strided_slice %8 {offsets = [0, 5], sizes = [8, 4], strides = [1, 1]} : vector<8x9xbf16> to vector<8x4xbf16>
    %c32 = arith.constant 32 : index
    %c0_43 = arith.constant 0 : index
    %46 = vector.load %arg8[%c32, %c0_43] : memref<72x16xbf16, #tpu.memory_space<vmem>>, vector<8x4xbf16>
    tpu.vector_store %arg8[%c32, %c0_43], %45 {strides = array<i32>} : memref<72x16xbf16, #tpu.memory_space<vmem>>, vector<8x4xbf16>,
    %47 = vector.extract_strided_slice %8 {offsets = [0, 1], sizes = [8, 4], strides = [1, 1]} : vector<8x9xbf16> to vector<8x4xbf16>
    %c40 = arith.constant 40 : index
    %c0_44 = arith.constant 0 : index
    %48 = vector.load %arg8[%c40, %c0_44] : memref<72x16xbf16, #tpu.memory_space<vmem>>, vector<8x4xbf16>
    tpu.vector_store %arg8[%c40, %c0_44], %47 {strides = array<i32>} : memref<72x16xbf16, #tpu.memory_space<vmem>>, vector<8x4xbf16>,
    %49 = vector.extract_strided_slice %12 {offsets = [0, 0], sizes = [8, 4], strides = [1, 1]} : vector<8x9xbf16> to vector<8x4xbf16>
    %c48 = arith.constant 48 : index
    %c0_45 = arith.constant 0 : index
    %50 = vector.load %arg8[%c48, %c0_45] : memref<72x16xbf16, #tpu.memory_space<vmem>>, vector<8x4xbf16>
    tpu.vector_store %arg8[%c48, %c0_45], %49 {strides = array<i32>} : memref<72x16xbf16, #tpu.memory_space<vmem>>, vector<8x4xbf16>,
    %51 = vector.extract_strided_slice %12 {offsets = [0, 5], sizes = [8, 4], strides = [1, 1]} : vector<8x9xbf16> to vector<8x4xbf16>
    %c56 = arith.constant 56 : index
    %c0_46 = arith.constant 0 : index
    %52 = vector.load %arg8[%c56, %c0_46] : memref<72x16xbf16, #tpu.memory_space<vmem>>, vector<8x4xbf16>
    tpu.vector_store %arg8[%c56, %c0_46], %51 {strides = array<i32>} : memref<72x16xbf16, #tpu.memory_space<vmem>>, vector<8x4xbf16>,
    %53 = vector.extract_strided_slice %12 {offsets = [0, 1], sizes = [8, 4], strides = [1, 1]} : vector<8x9xbf16> to vector<8x4xbf16>
    %c64 = arith.constant 64 : index
    %c0_47 = arith.constant 0 : index
    %54 = vector.load %arg8[%c64, %c0_47] : memref<72x16xbf16, #tpu.memory_space<vmem>>, vector<8x4xbf16>
    tpu.vector_store %arg8[%c64, %c0_47], %53 {strides = array<i32>} : memref<72x16xbf16, #tpu.memory_space<vmem>>, vector<8x4xbf16>,
    %55 = vector.extract_strided_slice %12 {offsets = [0, 0], sizes = [8, 4], strides = [1, 1]} : vector<8x9xbf16> to vector<8x4xbf16>
    %c0_48 = arith.constant 0 : index
    %c4_49 = arith.constant 4 : index
    %56 = vector.load %arg8[%c0_48, %c4_49] : memref<72x16xbf16, #tpu.memory_space<vmem>>, vector<8x4xbf16>
    tpu.vector_store %arg8[%c0_48, %c4_49], %55 {strides = array<i32>} : memref<72x16xbf16, #tpu.memory_space<vmem>>, vector<8x4xbf16>,
    %57 = vector.extract_strided_slice %12 {offsets = [0, 5], sizes = [8, 4], strides = [1, 1]} : vector<8x9xbf16> to vector<8x4xbf16>
    %c8_50 = arith.constant 8 : index
    %c4_51 = arith.constant 4 : index
    %58 = vector.load %arg8[%c8_50, %c4_51] : memref<72x16xbf16, #tpu.memory_space<vmem>>, vector<8x4xbf16>
    tpu.vector_store %arg8[%c8_50, %c4_51], %57 {strides = array<i32>} : memref<72x16xbf16, #tpu.memory_space<vmem>>, vector<8x4xbf16>,
    %59 = vector.extract_strided_slice %12 {offsets = [0, 1], sizes = [8, 4], strides = [1, 1]} : vector<8x9xbf16> to vector<8x4xbf16>
    %c16_52 = arith.constant 16 : index
    %c4_53 = arith.constant 4 : index
    %60 = vector.load %arg8[%c16_52, %c4_53] : memref<72x16xbf16, #tpu.memory_space<vmem>>, vector<8x4xbf16>
    tpu.vector_store %arg8[%c16_52, %c4_53], %59 {strides = array<i32>} : memref<72x16xbf16, #tpu.memory_space<vmem>>, vector<8x4xbf16>,
    %61 = vector.extract_strided_slice %16 {offsets = [0, 0], sizes = [8, 4], strides = [1, 1]} : vector<8x9xbf16> to vector<8x4xbf16>
    %c24_54 = arith.constant 24 : index
    %c4_55 = arith.constant 4 : index
    %62 = vector.load %arg8[%c24_54, %c4_55] : memref<72x16xbf16, #tpu.memory_space<vmem>>, vector<8x4xbf16>
    tpu.vector_store %arg8[%c24_54, %c4_55], %61 {strides = array<i32>} : memref<72x16xbf16, #tpu.memory_space<vmem>>, vector<8x4xbf16>,
    %63 = vector.extract_strided_slice %16 {offsets = [0, 5], sizes = [8, 4], strides = [1, 1]} : vector<8x9xbf16> to vector<8x4xbf16>
    %c32_56 = arith.constant 32 : index
    %c4_57 = arith.constant 4 : index
    %64 = vector.load %arg8[%c32_56, %c4_57] : memref<72x16xbf16, #tpu.memory_space<vmem>>, vector<8x4xbf16>
    tpu.vector_store %arg8[%c32_56, %c4_57], %63 {strides = array<i32>} : memref<72x16xbf16, #tpu.memory_space<vmem>>, vector<8x4xbf16>,
    %65 = vector.extract_strided_slice %16 {offsets = [0, 1], sizes = [8, 4], strides = [1, 1]} : vector<8x9xbf16> to vector<8x4xbf16>
    %c40_58 = arith.constant 40 : index
    %c4_59 = arith.constant 4 : index
    %66 = vector.load %arg8[%c40_58, %c4_59] : memref<72x16xbf16, #tpu.memory_space<vmem>>, vector<8x4xbf16>
    tpu.vector_store %arg8[%c40_58, %c4_59], %65 {strides = array<i32>} : memref<72x16xbf16, #tpu.memory_space<vmem>>, vector<8x4xbf16>,
    %67 = vector.extract_strided_slice %20 {offsets = [0, 0], sizes = [8, 4], strides = [1, 1]} : vector<8x9xbf16> to vector<8x4xbf16>
    %c48_60 = arith.constant 48 : index
    %c4_61 = arith.constant 4 : index
    %68 = vector.load %arg8[%c48_60, %c4_61] : memref<72x16xbf16, #tpu.memory_space<vmem>>, vector<8x4xbf16>
    tpu.vector_store %arg8[%c48_60, %c4_61], %67 {strides = array<i32>} : memref<72x16xbf16, #tpu.memory_space<vmem>>, vector<8x4xbf16>,
    %69 = vector.extract_strided_slice %20 {offsets = [0, 5], sizes = [8, 4], strides = [1, 1]} : vector<8x9xbf16> to vector<8x4xbf16>
    %c56_62 = arith.constant 56 : index
    %c4_63 = arith.constant 4 : index
    %70 = vector.load %arg8[%c56_62, %c4_63] : memref<72x16xbf16, #tpu.memory_space<vmem>>, vector<8x4xbf16>
    tpu.vector_store %arg8[%c56_62, %c4_63], %69 {strides = array<i32>} : memref<72x16xbf16, #tpu.memory_space<vmem>>, vector<8x4xbf16>,
    %71 = vector.extract_strided_slice %20 {offsets = [0, 1], sizes = [8, 4], strides = [1, 1]} : vector<8x9xbf16> to vector<8x4xbf16>
    %c64_64 = arith.constant 64 : index
    %c4_65 = arith.constant 4 : index
    %72 = vector.load %arg8[%c64_64, %c4_65] : memref<72x16xbf16, #tpu.memory_space<vmem>>, vector<8x4xbf16>
    tpu.vector_store %arg8[%c64_64, %c4_65], %71 {strides = array<i32>} : memref<72x16xbf16, #tpu.memory_space<vmem>>, vector<8x4xbf16>,
    %73 = vector.extract_strided_slice %20 {offsets = [0, 0], sizes = [8, 4], strides = [1, 1]} : vector<8x9xbf16> to vector<8x4xbf16>
    %c0_66 = arith.constant 0 : index
    %c8_67 = arith.constant 8 : index
    %74 = vector.load %arg8[%c0_66, %c8_67] : memref<72x16xbf16, #tpu.memory_space<vmem>>, vector<8x4xbf16>
    tpu.vector_store %arg8[%c0_66, %c8_67], %73 {strides = array<i32>} : memref<72x16xbf16, #tpu.memory_space<vmem>>, vector<8x4xbf16>,
    %75 = vector.extract_strided_slice %20 {offsets = [0, 5], sizes = [8, 4], strides = [1, 1]} : vector<8x9xbf16> to vector<8x4xbf16>
    %c8_68 = arith.constant 8 : index
    %c8_69 = arith.constant 8 : index
    %76 = vector.load %arg8[%c8_68, %c8_69] : memref<72x16xbf16, #tpu.memory_space<vmem>>, vector<8x4xbf16>
    tpu.vector_store %arg8[%c8_68, %c8_69], %75 {strides = array<i32>} : memref<72x16xbf16, #tpu.memory_space<vmem>>, vector<8x4xbf16>,
    %77 = vector.extract_strided_slice %20 {offsets = [0, 1], sizes = [8, 4], strides = [1, 1]} : vector<8x9xbf16> to vector<8x4xbf16>
    %c16_70 = arith.constant 16 : index
    %c8_71 = arith.constant 8 : index
    %78 = vector.load %arg8[%c16_70, %c8_71] : memref<72x16xbf16, #tpu.memory_space<vmem>>, vector<8x4xbf16>
    tpu.vector_store %arg8[%c16_70, %c8_71], %77 {strides = array<i32>} : memref<72x16xbf16, #tpu.memory_space<vmem>>, vector<8x4xbf16>,
    %79 = vector.extract_strided_slice %24 {offsets = [0, 0], sizes = [8, 4], strides = [1, 1]} : vector<8x9xbf16> to vector<8x4xbf16>
    %c24_72 = arith.constant 24 : index
    %c8_73 = arith.constant 8 : index
    %80 = vector.load %arg8[%c24_72, %c8_73] : memref<72x16xbf16, #tpu.memory_space<vmem>>, vector<8x4xbf16>
    tpu.vector_store %arg8[%c24_72, %c8_73], %79 {strides = array<i32>} : memref<72x16xbf16, #tpu.memory_space<vmem>>, vector<8x4xbf16>,
    %81 = vector.extract_strided_slice %24 {offsets = [0, 5], sizes = [8, 4], strides = [1, 1]} : vector<8x9xbf16> to vector<8x4xbf16>
    %c32_74 = arith.constant 32 : index
    %c8_75 = arith.constant 8 : index
    %82 = vector.load %arg8[%c32_74, %c8_75] : memref<72x16xbf16, #tpu.memory_space<vmem>>, vector<8x4xbf16>
    tpu.vector_store %arg8[%c32_74, %c8_75], %81 {strides = array<i32>} : memref<72x16xbf16, #tpu.memory_space<vmem>>, vector<8x4xbf16>,
    %83 = vector.extract_strided_slice %24 {offsets = [0, 1], sizes = [8, 4], strides = [1, 1]} : vector<8x9xbf16> to vector<8x4xbf16>
    %c40_76 = arith.constant 40 : index
    %c8_77 = arith.constant 8 : index
    %84 = vector.load %arg8[%c40_76, %c8_77] : memref<72x16xbf16, #tpu.memory_space<vmem>>, vector<8x4xbf16>
    tpu.vector_store %arg8[%c40_76, %c8_77], %83 {strides = array<i32>} : memref<72x16xbf16, #tpu.memory_space<vmem>>, vector<8x4xbf16>,
    %85 = vector.extract_strided_slice %28 {offsets = [0, 0], sizes = [8, 4], strides = [1, 1]} : vector<8x9xbf16> to vector<8x4xbf16>
    %c48_78 = arith.constant 48 : index
    %c8_79 = arith.constant 8 : index
    %86 = vector.load %arg8[%c48_78, %c8_79] : memref<72x16xbf16, #tpu.memory_space<vmem>>, vector<8x4xbf16>
    tpu.vector_store %arg8[%c48_78, %c8_79], %85 {strides = array<i32>} : memref<72x16xbf16, #tpu.memory_space<vmem>>, vector<8x4xbf16>,
    %87 = vector.extract_strided_slice %28 {offsets = [0, 5], sizes = [8, 4], strides = [1, 1]} : vector<8x9xbf16> to vector<8x4xbf16>
    %c56_80 = arith.constant 56 : index
    %c8_81 = arith.constant 8 : index
    %88 = vector.load %arg8[%c56_80, %c8_81] : memref<72x16xbf16, #tpu.memory_space<vmem>>, vector<8x4xbf16>
    tpu.vector_store %arg8[%c56_80, %c8_81], %87 {strides = array<i32>} : memref<72x16xbf16, #tpu.memory_space<vmem>>, vector<8x4xbf16>,
    %89 = vector.extract_strided_slice %28 {offsets = [0, 1], sizes = [8, 4], strides = [1, 1]} : vector<8x9xbf16> to vector<8x4xbf16>
    %c64_82 = arith.constant 64 : index
    %c8_83 = arith.constant 8 : index
    %90 = vector.load %arg8[%c64_82, %c8_83] : memref<72x16xbf16, #tpu.memory_space<vmem>>, vector<8x4xbf16>
    tpu.vector_store %arg8[%c64_82, %c8_83], %89 {strides = array<i32>} : memref<72x16xbf16, #tpu.memory_space<vmem>>, vector<8x4xbf16>,
    %91 = vector.extract_strided_slice %28 {offsets = [0, 0], sizes = [8, 4], strides = [1, 1]} : vector<8x9xbf16> to vector<8x4xbf16>
    %c0_84 = arith.constant 0 : index
    %c12 = arith.constant 12 : index
    %92 = vector.load %arg8[%c0_84, %c12] : memref<72x16xbf16, #tpu.memory_space<vmem>>, vector<8x4xbf16>
    tpu.vector_store %arg8[%c0_84, %c12], %91 {strides = array<i32>} : memref<72x16xbf16, #tpu.memory_space<vmem>>, vector<8x4xbf16>,
    %93 = vector.extract_strided_slice %28 {offsets = [0, 5], sizes = [8, 4], strides = [1, 1]} : vector<8x9xbf16> to vector<8x4xbf16>
    %c8_85 = arith.constant 8 : index
    %c12_86 = arith.constant 12 : index
    %94 = vector.load %arg8[%c8_85, %c12_86] : memref<72x16xbf16, #tpu.memory_space<vmem>>, vector<8x4xbf16>
    tpu.vector_store %arg8[%c8_85, %c12_86], %93 {strides = array<i32>} : memref<72x16xbf16, #tpu.memory_space<vmem>>, vector<8x4xbf16>,
    %95 = vector.extract_strided_slice %28 {offsets = [0, 1], sizes = [8, 4], strides = [1, 1]} : vector<8x9xbf16> to vector<8x4xbf16>
    %c16_87 = arith.constant 16 : index
    %c12_88 = arith.constant 12 : index
    %96 = vector.load %arg8[%c16_87, %c12_88] : memref<72x16xbf16, #tpu.memory_space<vmem>>, vector<8x4xbf16>
    tpu.vector_store %arg8[%c16_87, %c12_88], %95 {strides = array<i32>} : memref<72x16xbf16, #tpu.memory_space<vmem>>, vector<8x4xbf16>,
    %97 = vector.extract_strided_slice %32 {offsets = [0, 0], sizes = [8, 4], strides = [1, 1]} : vector<8x9xbf16> to vector<8x4xbf16>
    %c24_89 = arith.constant 24 : index
    %c12_90 = arith.constant 12 : index
    %98 = vector.load %arg8[%c24_89, %c12_90] : memref<72x16xbf16, #tpu.memory_space<vmem>>, vector<8x4xbf16>
    tpu.vector_store %arg8[%c24_89, %c12_90], %97 {strides = array<i32>} : memref<72x16xbf16, #tpu.memory_space<vmem>>, vector<8x4xbf16>,
    %99 = vector.extract_strided_slice %32 {offsets = [0, 5], sizes = [8, 4], strides = [1, 1]} : vector<8x9xbf16> to vector<8x4xbf16>
    %c32_91 = arith.constant 32 : index
    %c12_92 = arith.constant 12 : index
    %100 = vector.load %arg8[%c32_91, %c12_92] : memref<72x16xbf16, #tpu.memory_space<vmem>>, vector<8x4xbf16>
    tpu.vector_store %arg8[%c32_91, %c12_92], %99 {strides = array<i32>} : memref<72x16xbf16, #tpu.memory_space<vmem>>, vector<8x4xbf16>,
    %101 = vector.extract_strided_slice %32 {offsets = [0, 1], sizes = [8, 4], strides = [1, 1]} : vector<8x9xbf16> to vector<8x4xbf16>
    %c40_93 = arith.constant 40 : index
    %c12_94 = arith.constant 12 : index
    %102 = vector.load %arg8[%c40_93, %c12_94] : memref<72x16xbf16, #tpu.memory_space<vmem>>, vector<8x4xbf16>
    tpu.vector_store %arg8[%c40_93, %c12_94], %101 {strides = array<i32>} : memref<72x16xbf16, #tpu.memory_space<vmem>>, vector<8x4xbf16>,
    %103 = vector.extract_strided_slice %36 {offsets = [0, 0], sizes = [8, 4], strides = [1, 1]} : vector<8x9xbf16> to vector<8x4xbf16>
    %c48_95 = arith.constant 48 : index
    %c12_96 = arith.constant 12 : index
    %104 = vector.load %arg8[%c48_95, %c12_96] : memref<72x16xbf16, #tpu.memory_space<vmem>>, vector<8x4xbf16>
    tpu.vector_store %arg8[%c48_95, %c12_96], %103 {strides = array<i32>} : memref<72x16xbf16, #tpu.memory_space<vmem>>, vector<8x4xbf16>,
    %105 = vector.extract_strided_slice %36 {offsets = [0, 5], sizes = [8, 4], strides = [1, 1]} : vector<8x9xbf16> to vector<8x4xbf16>
    %c56_97 = arith.constant 56 : index
    %c12_98 = arith.constant 12 : index
    %106 = vector.load %arg8[%c56_97, %c12_98] : memref<72x16xbf16, #tpu.memory_space<vmem>>, vector<8x4xbf16>
    tpu.vector_store %arg8[%c56_97, %c12_98], %105 {strides = array<i32>} : memref<72x16xbf16, #tpu.memory_space<vmem>>, vector<8x4xbf16>,
    %107 = vector.extract_strided_slice %36 {offsets = [0, 1], sizes = [8, 4], strides = [1, 1]} : vector<8x9xbf16> to vector<8x4xbf16>
    %c64_99 = arith.constant 64 : index
    %c12_100 = arith.constant 12 : index
    %108 = vector.load %arg8[%c64_99, %c12_100] : memref<72x16xbf16, #tpu.memory_space<vmem>>, vector<8x4xbf16>
    tpu.vector_store %arg8[%c64_99, %c12_100], %107 {strides = array<i32>} : memref<72x16xbf16, #tpu.memory_space<vmem>>, vector<8x4xbf16>,
    %c0_101 = arith.constant 0 : index
    %c0_102 = arith.constant 0 : index
    %109 = vector.load %arg8[%c0_101, %c0_102] : memref<72x16xbf16, #tpu.memory_space<vmem>>, vector<72x16xbf16>
    %c0_103 = arith.constant 0 : index
    %c0_104 = arith.constant 0 : index
    %110 = vector.load %arg3[%c0_103, %c0_104] : memref<16x72xbf16, #tpu.memory_space<vmem>>, vector<16x72xbf16>
    %cst_105 = arith.constant dense<0.000000e+00> : vector<16x16xf32>
    %111 = tpu.matmul %110, %109, %cst_105 {dimension_numbers = #tpu.dot_dimension_numbers<[1], [0], [0], [1], [0, 0, 1, 1], [], []>} : vector<16x72xbf16>, vector<72x16xbf16>, vector<16x16xf32> -> vector<16x16xf32>
    %c0_106 = arith.constant 0 : index
    %c0_107 = arith.constant 0 : index
    %112 = vector.load %arg4[%c0_106, %c0_107] : memref<16x1xf32, #tpu.memory_space<vmem>>, vector<16x1xf32>
    %113 = vector.broadcast %112 : vector<16x1xf32> to vector<16x16xf32>
    %114 = arith.addf %111, %113 : vector<16x16xf32>
    %cst_108 = arith.constant 0.000000e+00 : f32
    %115 = vector.broadcast %cst_108 : f32 to vector<16x16xf32>
    %116 = arith.maximumf %114, %115 : vector<16x16xf32>
    %117 = arith.truncf %116 : vector<16x16xf32> to vector<16x16xbf16>
    %c0_109 = arith.constant 0 : index
    %c0_110 = arith.constant 0 : index
    %118 = vector.load %arg5[%c0_109, %c0_110] : memref<3x16xbf16, #tpu.memory_space<vmem>>, vector<3x16xbf16>
    %cst_111 = arith.constant dense<0.000000e+00> : vector<3x16xf32>
    %119 = tpu.matmul %118, %117, %cst_111 {dimension_numbers = #tpu.dot_dimension_numbers<[1], [0], [0], [1], [0, 0, 1, 1], [], []>} : vector<3x16xbf16>, vector<16x16xbf16>, vector<3x16xf32> -> vector<3x16xf32>
    %c0_112 = arith.constant 0 : index
    %c0_113 = arith.constant 0 : index
    %120 = vector.load %arg6[%c0_112, %c0_113] : memref<3x1xf32, #tpu.memory_space<vmem>>, vector<3x1xf32>
    %121 = vector.broadcast %120 : vector<3x1xf32> to vector<3x16xf32>
    %122 = arith.addf %119, %121 : vector<3x16xf32>
    %123 = arith.truncf %122 : vector<3x16xf32> to vector<3x16xbf16>
    %c0_114 = arith.constant 0 : index
    %c0_115 = arith.constant 0 : index
    %c0_116 = arith.constant 0 : index
    %124 = vector.load %arg7[%c0_114, %c0_115, %c0_116] : memref<1x3x16xbf16, #tpu.memory_space<vmem>>, vector<1x3x16xbf16>
    %125 = vector.shape_cast %124 : vector<1x3x16xbf16> to vector<3x16xbf16>
    %126 = vector.shape_cast %123 : vector<3x16xbf16> to vector<1x3x16xbf16>
    tpu.vector_store %arg7[%c0_114, %c0_115, %c0_116], %126 {strides = array<i32>} : memref<1x3x16xbf16, #tpu.memory_space<vmem>>, vector<1x3x16xbf16>,
    return
  }
  func.func @transform_0(%arg0: i32) -> (i32, i32, i32, i32) {
    %c0_i32 = arith.constant 0 : i32
    %c0_i32_0 = arith.constant 0 : i32
    %c0_i32_1 = arith.constant 0 : i32
    %c0_i32_2 = arith.constant 0 : i32
    return %arg0, %c0_i32, %c0_i32_0, %c0_i32_1 : i32, i32, i32, i32
  }
  func.func @transform_1(%arg0: i32) -> (i32, i32) {
    %c0_i32 = arith.constant 0 : i32
    %c0_i32_0 = arith.constant 0 : i32
    %c0_i32_1 = arith.constant 0 : i32
    return %c0_i32, %c0_i32_0 : i32, i32
  }
  func.func @transform_2(%arg0: i32) -> (i32, i32) {
    %c0_i32 = arith.constant 0 : i32
    %c0_i32_0 = arith.constant 0 : i32
    %c0_i32_1 = arith.constant 0 : i32
    return %c0_i32, %c0_i32_0 : i32, i32
  }
  func.func @transform_3(%arg0: i32) -> (i32, i32) {
    %c0_i32 = arith.constant 0 : i32
    %c0_i32_0 = arith.constant 0 : i32
    %c0_i32_1 = arith.constant 0 : i32
    return %c0_i32, %c0_i32_0 : i32, i32
  }
  func.func @transform_4(%arg0: i32) -> (i32, i32) {
    %c0_i32 = arith.constant 0 : i32
    %c0_i32_0 = arith.constant 0 : i32
    %c0_i32_1 = arith.constant 0 : i32
    return %c0_i32, %c0_i32_0 : i32, i32
  }
  func.func @transform_5(%arg0: i32) -> (i32, i32) {
    %c0_i32 = arith.constant 0 : i32
    %c0_i32_0 = arith.constant 0 : i32
    %c0_i32_1 = arith.constant 0 : i32
    return %c0_i32, %c0_i32_0 : i32, i32
  }
  func.func @transform_6(%arg0: i32) -> (i32, i32, i32) {
    %c0_i32 = arith.constant 0 : i32
    %c0_i32_0 = arith.constant 0 : i32
    %c0_i32_1 = arith.constant 0 : i32
    return %arg0, %c0_i32, %c0_i32_0 : i32, i32, i32
  }
}

module attributes {stable_mosaic.version = 11 : i64} {
  func.func @_conv3x3s2_head_kernel(%arg0: i32, %arg1: memref<1x18x4x18xbf16, #tpu.memory_space<vmem>>, %arg2: memref<18x17xbf16, #tpu.memory_space<vmem>>, %arg3: memref<8x36xbf16, #tpu.memory_space<vmem>>, %arg4: memref<8x1xf32, #tpu.memory_space<vmem>>, %arg5: memref<3x8xbf16, #tpu.memory_space<vmem>>, %arg6: memref<3x1xf32, #tpu.memory_space<vmem>>, %arg7: memref<1x10x8x10xbf16, #tpu.memory_space<vmem>>, %arg8: memref<1x3x64xbf16, #tpu.memory_space<vmem>>, %arg9: memref<36x64xbf16, #tpu.memory_space<vmem>>) attributes {dimension_semantics = [#tpu.dimension_semantics<parallel>], iteration_bounds = array<i64: 2>, scalar_prefetch = 0 : i64, scratch_operands = 1 : i64, tpu.core_type = #tpu.core_type<tc>, window_params = [{transform_indices = @transform_0, window_bounds = array<i64: 1, 18, 4, 18>}, {pipeline_mode = #tpu.pipeline_mode<synchronous>, transform_indices = @transform_1, window_bounds = array<i64: 18, 17>}, {pipeline_mode = #tpu.pipeline_mode<synchronous>, transform_indices = @transform_2, window_bounds = array<i64: 8, 36>}, {pipeline_mode = #tpu.pipeline_mode<synchronous>, transform_indices = @transform_3, window_bounds = array<i64: 8, 1>}, {pipeline_mode = #tpu.pipeline_mode<synchronous>, transform_indices = @transform_4, window_bounds = array<i64: 3, 8>}, {pipeline_mode = #tpu.pipeline_mode<synchronous>, transform_indices = @transform_5, window_bounds = array<i64: 3, 1>}, {transform_indices = @transform_6, window_bounds = array<i64: 1, 10, 8, 10>}, {transform_indices = @transform_7, window_bounds = array<i64: 1, 3, 64>}]} {
    %c0 = arith.constant 0 : index
    %c0_0 = arith.constant 0 : index
    %0 = vector.load %arg2[%c0, %c0_0] : memref<18x17xbf16, #tpu.memory_space<vmem>>, vector<18x17xbf16>
    %c0_1 = arith.constant 0 : index
    %c0_2 = arith.constant 0 : index
    %c0_3 = arith.constant 0 : index
    %c0_4 = arith.constant 0 : index
    %1 = vector.load %arg1[%c0_1, %c0_2, %c0_3, %c0_4] : memref<1x18x4x18xbf16, #tpu.memory_space<vmem>>, vector<1x1x4x18xbf16>
    %2 = vector.shape_cast %1 : vector<1x1x4x18xbf16> to vector<4x18xbf16>
    %cst = arith.constant dense<0.000000e+00> : vector<4x17xf32>
    %3 = tpu.matmul %2, %0, %cst {dimension_numbers = #tpu.dot_dimension_numbers<[1], [0], [0], [1], [0, 0, 1, 1], [], []>} : vector<4x18xbf16>, vector<18x17xbf16>, vector<4x17xf32> -> vector<4x17xf32>
    %4 = arith.truncf %3 : vector<4x17xf32> to vector<4x17xbf16>
    %c0_5 = arith.constant 0 : index
    %c1 = arith.constant 1 : index
    %c0_6 = arith.constant 0 : index
    %c0_7 = arith.constant 0 : index
    %5 = vector.load %arg1[%c0_5, %c1, %c0_6, %c0_7] : memref<1x18x4x18xbf16, #tpu.memory_space<vmem>>, vector<1x1x4x18xbf16>
    %6 = vector.shape_cast %5 : vector<1x1x4x18xbf16> to vector<4x18xbf16>
    %cst_8 = arith.constant dense<0.000000e+00> : vector<4x17xf32>
    %7 = tpu.matmul %6, %0, %cst_8 {dimension_numbers = #tpu.dot_dimension_numbers<[1], [0], [0], [1], [0, 0, 1, 1], [], []>} : vector<4x18xbf16>, vector<18x17xbf16>, vector<4x17xf32> -> vector<4x17xf32>
    %8 = arith.truncf %7 : vector<4x17xf32> to vector<4x17xbf16>
    %c0_9 = arith.constant 0 : index
    %c2 = arith.constant 2 : index
    %c0_10 = arith.constant 0 : index
    %c0_11 = arith.constant 0 : index
    %9 = vector.load %arg1[%c0_9, %c2, %c0_10, %c0_11] : memref<1x18x4x18xbf16, #tpu.memory_space<vmem>>, vector<1x1x4x18xbf16>
    %10 = vector.shape_cast %9 : vector<1x1x4x18xbf16> to vector<4x18xbf16>
    %cst_12 = arith.constant dense<0.000000e+00> : vector<4x17xf32>
    %11 = tpu.matmul %10, %0, %cst_12 {dimension_numbers = #tpu.dot_dimension_numbers<[1], [0], [0], [1], [0, 0, 1, 1], [], []>} : vector<4x18xbf16>, vector<18x17xbf16>, vector<4x17xf32> -> vector<4x17xf32>
    %12 = arith.truncf %11 : vector<4x17xf32> to vector<4x17xbf16>
    %c0_13 = arith.constant 0 : index
    %c3 = arith.constant 3 : index
    %c0_14 = arith.constant 0 : index
    %c0_15 = arith.constant 0 : index
    %13 = vector.load %arg1[%c0_13, %c3, %c0_14, %c0_15] : memref<1x18x4x18xbf16, #tpu.memory_space<vmem>>, vector<1x1x4x18xbf16>
    %14 = vector.shape_cast %13 : vector<1x1x4x18xbf16> to vector<4x18xbf16>
    %cst_16 = arith.constant dense<0.000000e+00> : vector<4x17xf32>
    %15 = tpu.matmul %14, %0, %cst_16 {dimension_numbers = #tpu.dot_dimension_numbers<[1], [0], [0], [1], [0, 0, 1, 1], [], []>} : vector<4x18xbf16>, vector<18x17xbf16>, vector<4x17xf32> -> vector<4x17xf32>
    %16 = arith.truncf %15 : vector<4x17xf32> to vector<4x17xbf16>
    %c0_17 = arith.constant 0 : index
    %c4 = arith.constant 4 : index
    %c0_18 = arith.constant 0 : index
    %c0_19 = arith.constant 0 : index
    %17 = vector.load %arg1[%c0_17, %c4, %c0_18, %c0_19] : memref<1x18x4x18xbf16, #tpu.memory_space<vmem>>, vector<1x1x4x18xbf16>
    %18 = vector.shape_cast %17 : vector<1x1x4x18xbf16> to vector<4x18xbf16>
    %cst_20 = arith.constant dense<0.000000e+00> : vector<4x17xf32>
    %19 = tpu.matmul %18, %0, %cst_20 {dimension_numbers = #tpu.dot_dimension_numbers<[1], [0], [0], [1], [0, 0, 1, 1], [], []>} : vector<4x18xbf16>, vector<18x17xbf16>, vector<4x17xf32> -> vector<4x17xf32>
    %20 = arith.truncf %19 : vector<4x17xf32> to vector<4x17xbf16>
    %c0_21 = arith.constant 0 : index
    %c5 = arith.constant 5 : index
    %c0_22 = arith.constant 0 : index
    %c0_23 = arith.constant 0 : index
    %21 = vector.load %arg1[%c0_21, %c5, %c0_22, %c0_23] : memref<1x18x4x18xbf16, #tpu.memory_space<vmem>>, vector<1x1x4x18xbf16>
    %22 = vector.shape_cast %21 : vector<1x1x4x18xbf16> to vector<4x18xbf16>
    %cst_24 = arith.constant dense<0.000000e+00> : vector<4x17xf32>
    %23 = tpu.matmul %22, %0, %cst_24 {dimension_numbers = #tpu.dot_dimension_numbers<[1], [0], [0], [1], [0, 0, 1, 1], [], []>} : vector<4x18xbf16>, vector<18x17xbf16>, vector<4x17xf32> -> vector<4x17xf32>
    %24 = arith.truncf %23 : vector<4x17xf32> to vector<4x17xbf16>
    %c0_25 = arith.constant 0 : index
    %c6 = arith.constant 6 : index
    %c0_26 = arith.constant 0 : index
    %c0_27 = arith.constant 0 : index
    %25 = vector.load %arg1[%c0_25, %c6, %c0_26, %c0_27] : memref<1x18x4x18xbf16, #tpu.memory_space<vmem>>, vector<1x1x4x18xbf16>
    %26 = vector.shape_cast %25 : vector<1x1x4x18xbf16> to vector<4x18xbf16>
    %cst_28 = arith.constant dense<0.000000e+00> : vector<4x17xf32>
    %27 = tpu.matmul %26, %0, %cst_28 {dimension_numbers = #tpu.dot_dimension_numbers<[1], [0], [0], [1], [0, 0, 1, 1], [], []>} : vector<4x18xbf16>, vector<18x17xbf16>, vector<4x17xf32> -> vector<4x17xf32>
    %28 = arith.truncf %27 : vector<4x17xf32> to vector<4x17xbf16>
    %c0_29 = arith.constant 0 : index
    %c7 = arith.constant 7 : index
    %c0_30 = arith.constant 0 : index
    %c0_31 = arith.constant 0 : index
    %29 = vector.load %arg1[%c0_29, %c7, %c0_30, %c0_31] : memref<1x18x4x18xbf16, #tpu.memory_space<vmem>>, vector<1x1x4x18xbf16>
    %30 = vector.shape_cast %29 : vector<1x1x4x18xbf16> to vector<4x18xbf16>
    %cst_32 = arith.constant dense<0.000000e+00> : vector<4x17xf32>
    %31 = tpu.matmul %30, %0, %cst_32 {dimension_numbers = #tpu.dot_dimension_numbers<[1], [0], [0], [1], [0, 0, 1, 1], [], []>} : vector<4x18xbf16>, vector<18x17xbf16>, vector<4x17xf32> -> vector<4x17xf32>
    %32 = arith.truncf %31 : vector<4x17xf32> to vector<4x17xbf16>
    %c0_33 = arith.constant 0 : index
    %c8 = arith.constant 8 : index
    %c0_34 = arith.constant 0 : index
    %c0_35 = arith.constant 0 : index
    %33 = vector.load %arg1[%c0_33, %c8, %c0_34, %c0_35] : memref<1x18x4x18xbf16, #tpu.memory_space<vmem>>, vector<1x1x4x18xbf16>
    %34 = vector.shape_cast %33 : vector<1x1x4x18xbf16> to vector<4x18xbf16>
    %cst_36 = arith.constant dense<0.000000e+00> : vector<4x17xf32>
    %35 = tpu.matmul %34, %0, %cst_36 {dimension_numbers = #tpu.dot_dimension_numbers<[1], [0], [0], [1], [0, 0, 1, 1], [], []>} : vector<4x18xbf16>, vector<18x17xbf16>, vector<4x17xf32> -> vector<4x17xf32>
    %36 = arith.truncf %35 : vector<4x17xf32> to vector<4x17xbf16>
    %c0_37 = arith.constant 0 : index
    %c9 = arith.constant 9 : index
    %c0_38 = arith.constant 0 : index
    %c0_39 = arith.constant 0 : index
    %37 = vector.load %arg1[%c0_37, %c9, %c0_38, %c0_39] : memref<1x18x4x18xbf16, #tpu.memory_space<vmem>>, vector<1x1x4x18xbf16>
    %38 = vector.shape_cast %37 : vector<1x1x4x18xbf16> to vector<4x18xbf16>
    %cst_40 = arith.constant dense<0.000000e+00> : vector<4x17xf32>
    %39 = tpu.matmul %38, %0, %cst_40 {dimension_numbers = #tpu.dot_dimension_numbers<[1], [0], [0], [1], [0, 0, 1, 1], [], []>} : vector<4x18xbf16>, vector<18x17xbf16>, vector<4x17xf32> -> vector<4x17xf32>
    %40 = arith.truncf %39 : vector<4x17xf32> to vector<4x17xbf16>
    %c0_41 = arith.constant 0 : index
    %c10 = arith.constant 10 : index
    %c0_42 = arith.constant 0 : index
    %c0_43 = arith.constant 0 : index
    %41 = vector.load %arg1[%c0_41, %c10, %c0_42, %c0_43] : memref<1x18x4x18xbf16, #tpu.memory_space<vmem>>, vector<1x1x4x18xbf16>
    %42 = vector.shape_cast %41 : vector<1x1x4x18xbf16> to vector<4x18xbf16>
    %cst_44 = arith.constant dense<0.000000e+00> : vector<4x17xf32>
    %43 = tpu.matmul %42, %0, %cst_44 {dimension_numbers = #tpu.dot_dimension_numbers<[1], [0], [0], [1], [0, 0, 1, 1], [], []>} : vector<4x18xbf16>, vector<18x17xbf16>, vector<4x17xf32> -> vector<4x17xf32>
    %44 = arith.truncf %43 : vector<4x17xf32> to vector<4x17xbf16>
    %c0_45 = arith.constant 0 : index
    %c11 = arith.constant 11 : index
    %c0_46 = arith.constant 0 : index
    %c0_47 = arith.constant 0 : index
    %45 = vector.load %arg1[%c0_45, %c11, %c0_46, %c0_47] : memref<1x18x4x18xbf16, #tpu.memory_space<vmem>>, vector<1x1x4x18xbf16>
    %46 = vector.shape_cast %45 : vector<1x1x4x18xbf16> to vector<4x18xbf16>
    %cst_48 = arith.constant dense<0.000000e+00> : vector<4x17xf32>
    %47 = tpu.matmul %46, %0, %cst_48 {dimension_numbers = #tpu.dot_dimension_numbers<[1], [0], [0], [1], [0, 0, 1, 1], [], []>} : vector<4x18xbf16>, vector<18x17xbf16>, vector<4x17xf32> -> vector<4x17xf32>
    %48 = arith.truncf %47 : vector<4x17xf32> to vector<4x17xbf16>
    %c0_49 = arith.constant 0 : index
    %c12 = arith.constant 12 : index
    %c0_50 = arith.constant 0 : index
    %c0_51 = arith.constant 0 : index
    %49 = vector.load %arg1[%c0_49, %c12, %c0_50, %c0_51] : memref<1x18x4x18xbf16, #tpu.memory_space<vmem>>, vector<1x1x4x18xbf16>
    %50 = vector.shape_cast %49 : vector<1x1x4x18xbf16> to vector<4x18xbf16>
    %cst_52 = arith.constant dense<0.000000e+00> : vector<4x17xf32>
    %51 = tpu.matmul %50, %0, %cst_52 {dimension_numbers = #tpu.dot_dimension_numbers<[1], [0], [0], [1], [0, 0, 1, 1], [], []>} : vector<4x18xbf16>, vector<18x17xbf16>, vector<4x17xf32> -> vector<4x17xf32>
    %52 = arith.truncf %51 : vector<4x17xf32> to vector<4x17xbf16>
    %c0_53 = arith.constant 0 : index
    %c13 = arith.constant 13 : index
    %c0_54 = arith.constant 0 : index
    %c0_55 = arith.constant 0 : index
    %53 = vector.load %arg1[%c0_53, %c13, %c0_54, %c0_55] : memref<1x18x4x18xbf16, #tpu.memory_space<vmem>>, vector<1x1x4x18xbf16>
    %54 = vector.shape_cast %53 : vector<1x1x4x18xbf16> to vector<4x18xbf16>
    %cst_56 = arith.constant dense<0.000000e+00> : vector<4x17xf32>
    %55 = tpu.matmul %54, %0, %cst_56 {dimension_numbers = #tpu.dot_dimension_numbers<[1], [0], [0], [1], [0, 0, 1, 1], [], []>} : vector<4x18xbf16>, vector<18x17xbf16>, vector<4x17xf32> -> vector<4x17xf32>
    %56 = arith.truncf %55 : vector<4x17xf32> to vector<4x17xbf16>
    %c0_57 = arith.constant 0 : index
    %c14 = arith.constant 14 : index
    %c0_58 = arith.constant 0 : index
    %c0_59 = arith.constant 0 : index
    %57 = vector.load %arg1[%c0_57, %c14, %c0_58, %c0_59] : memref<1x18x4x18xbf16, #tpu.memory_space<vmem>>, vector<1x1x4x18xbf16>
    %58 = vector.shape_cast %57 : vector<1x1x4x18xbf16> to vector<4x18xbf16>
    %cst_60 = arith.constant dense<0.000000e+00> : vector<4x17xf32>
    %59 = tpu.matmul %58, %0, %cst_60 {dimension_numbers = #tpu.dot_dimension_numbers<[1], [0], [0], [1], [0, 0, 1, 1], [], []>} : vector<4x18xbf16>, vector<18x17xbf16>, vector<4x17xf32> -> vector<4x17xf32>
    %60 = arith.truncf %59 : vector<4x17xf32> to vector<4x17xbf16>
    %c0_61 = arith.constant 0 : index
    %c15 = arith.constant 15 : index
    %c0_62 = arith.constant 0 : index
    %c0_63 = arith.constant 0 : index
    %61 = vector.load %arg1[%c0_61, %c15, %c0_62, %c0_63] : memref<1x18x4x18xbf16, #tpu.memory_space<vmem>>, vector<1x1x4x18xbf16>
    %62 = vector.shape_cast %61 : vector<1x1x4x18xbf16> to vector<4x18xbf16>
    %cst_64 = arith.constant dense<0.000000e+00> : vector<4x17xf32>
    %63 = tpu.matmul %62, %0, %cst_64 {dimension_numbers = #tpu.dot_dimension_numbers<[1], [0], [0], [1], [0, 0, 1, 1], [], []>} : vector<4x18xbf16>, vector<18x17xbf16>, vector<4x17xf32> -> vector<4x17xf32>
    %64 = arith.truncf %63 : vector<4x17xf32> to vector<4x17xbf16>
    %c0_65 = arith.constant 0 : index
    %c16 = arith.constant 16 : index
    %c0_66 = arith.constant 0 : index
    %c0_67 = arith.constant 0 : index
    %65 = vector.load %arg1[%c0_65, %c16, %c0_66, %c0_67] : memref<1x18x4x18xbf16, #tpu.memory_space<vmem>>, vector<1x1x4x18xbf16>
    %66 = vector.shape_cast %65 : vector<1x1x4x18xbf16> to vector<4x18xbf16>
    %cst_68 = arith.constant dense<0.000000e+00> : vector<4x17xf32>
    %67 = tpu.matmul %66, %0, %cst_68 {dimension_numbers = #tpu.dot_dimension_numbers<[1], [0], [0], [1], [0, 0, 1, 1], [], []>} : vector<4x18xbf16>, vector<18x17xbf16>, vector<4x17xf32> -> vector<4x17xf32>
    %68 = arith.truncf %67 : vector<4x17xf32> to vector<4x17xbf16>
    %69 = vector.extract_strided_slice %4 {offsets = [0, 0], sizes = [4, 8], strides = [1, 1]} : vector<4x17xbf16> to vector<4x8xbf16>
    %c0_69 = arith.constant 0 : index
    %c0_70 = arith.constant 0 : index
    %70 = vector.load %arg9[%c0_69, %c0_70] : memref<36x64xbf16, #tpu.memory_space<vmem>>, vector<4x8xbf16>
    tpu.vector_store %arg9[%c0_69, %c0_70], %69 {strides = array<i32>} : memref<36x64xbf16, #tpu.memory_space<vmem>>, vector<4x8xbf16>,
    %71 = vector.extract_strided_slice %4 {offsets = [0, 9], sizes = [4, 8], strides = [1, 1]} : vector<4x17xbf16> to vector<4x8xbf16>
    %c4_71 = arith.constant 4 : index
    %c0_72 = arith.constant 0 : index
    %72 = vector.load %arg9[%c4_71, %c0_72] : memref<36x64xbf16, #tpu.memory_space<vmem>>, vector<4x8xbf16>
    tpu.vector_store %arg9[%c4_71, %c0_72], %71 {strides = array<i32>} : memref<36x64xbf16, #tpu.memory_space<vmem>>, vector<4x8xbf16>,
    %73 = vector.extract_strided_slice %4 {offsets = [0, 1], sizes = [4, 8], strides = [1, 1]} : vector<4x17xbf16> to vector<4x8xbf16>
    %c8_73 = arith.constant 8 : index
    %c0_74 = arith.constant 0 : index
    %74 = vector.load %arg9[%c8_73, %c0_74] : memref<36x64xbf16, #tpu.memory_space<vmem>>, vector<4x8xbf16>
    tpu.vector_store %arg9[%c8_73, %c0_74], %73 {strides = array<i32>} : memref<36x64xbf16, #tpu.memory_space<vmem>>, vector<4x8xbf16>,
    %75 = vector.extract_strided_slice %8 {offsets = [0, 0], sizes = [4, 8], strides = [1, 1]} : vector<4x17xbf16> to vector<4x8xbf16>
    %c12_75 = arith.constant 12 : index
    %c0_76 = arith.constant 0 : index
    %76 = vector.load %arg9[%c12_75, %c0_76] : memref<36x64xbf16, #tpu.memory_space<vmem>>, vector<4x8xbf16>
    tpu.vector_store %arg9[%c12_75, %c0_76], %75 {strides = array<i32>} : memref<36x64xbf16, #tpu.memory_space<vmem>>, vector<4x8xbf16>,
    %77 = vector.extract_strided_slice %8 {offsets = [0, 9], sizes = [4, 8], strides = [1, 1]} : vector<4x17xbf16> to vector<4x8xbf16>
    %c16_77 = arith.constant 16 : index
    %c0_78 = arith.constant 0 : index
    %78 = vector.load %arg9[%c16_77, %c0_78] : memref<36x64xbf16, #tpu.memory_space<vmem>>, vector<4x8xbf16>
    tpu.vector_store %arg9[%c16_77, %c0_78], %77 {strides = array<i32>} : memref<36x64xbf16, #tpu.memory_space<vmem>>, vector<4x8xbf16>,
    %79 = vector.extract_strided_slice %8 {offsets = [0, 1], sizes = [4, 8], strides = [1, 1]} : vector<4x17xbf16> to vector<4x8xbf16>
    %c20 = arith.constant 20 : index
    %c0_79 = arith.constant 0 : index
    %80 = vector.load %arg9[%c20, %c0_79] : memref<36x64xbf16, #tpu.memory_space<vmem>>, vector<4x8xbf16>
    tpu.vector_store %arg9[%c20, %c0_79], %79 {strides = array<i32>} : memref<36x64xbf16, #tpu.memory_space<vmem>>, vector<4x8xbf16>,
    %81 = vector.extract_strided_slice %12 {offsets = [0, 0], sizes = [4, 8], strides = [1, 1]} : vector<4x17xbf16> to vector<4x8xbf16>
    %c24 = arith.constant 24 : index
    %c0_80 = arith.constant 0 : index
    %82 = vector.load %arg9[%c24, %c0_80] : memref<36x64xbf16, #tpu.memory_space<vmem>>, vector<4x8xbf16>
    tpu.vector_store %arg9[%c24, %c0_80], %81 {strides = array<i32>} : memref<36x64xbf16, #tpu.memory_space<vmem>>, vector<4x8xbf16>,
    %83 = vector.extract_strided_slice %12 {offsets = [0, 9], sizes = [4, 8], strides = [1, 1]} : vector<4x17xbf16> to vector<4x8xbf16>
    %c28 = arith.constant 28 : index
    %c0_81 = arith.constant 0 : index
    %84 = vector.load %arg9[%c28, %c0_81] : memref<36x64xbf16, #tpu.memory_space<vmem>>, vector<4x8xbf16>
    tpu.vector_store %arg9[%c28, %c0_81], %83 {strides = array<i32>} : memref<36x64xbf16, #tpu.memory_space<vmem>>, vector<4x8xbf16>,
    %85 = vector.extract_strided_slice %12 {offsets = [0, 1], sizes = [4, 8], strides = [1, 1]} : vector<4x17xbf16> to vector<4x8xbf16>
    %c32 = arith.constant 32 : index
    %c0_82 = arith.constant 0 : index
    %86 = vector.load %arg9[%c32, %c0_82] : memref<36x64xbf16, #tpu.memory_space<vmem>>, vector<4x8xbf16>
    tpu.vector_store %arg9[%c32, %c0_82], %85 {strides = array<i32>} : memref<36x64xbf16, #tpu.memory_space<vmem>>, vector<4x8xbf16>,
    %87 = vector.extract_strided_slice %12 {offsets = [0, 0], sizes = [4, 8], strides = [1, 1]} : vector<4x17xbf16> to vector<4x8xbf16>
    %c0_83 = arith.constant 0 : index
    %c8_84 = arith.constant 8 : index
    %88 = vector.load %arg9[%c0_83, %c8_84] : memref<36x64xbf16, #tpu.memory_space<vmem>>, vector<4x8xbf16>
    tpu.vector_store %arg9[%c0_83, %c8_84], %87 {strides = array<i32>} : memref<36x64xbf16, #tpu.memory_space<vmem>>, vector<4x8xbf16>,
    %89 = vector.extract_strided_slice %12 {offsets = [0, 9], sizes = [4, 8], strides = [1, 1]} : vector<4x17xbf16> to vector<4x8xbf16>
    %c4_85 = arith.constant 4 : index
    %c8_86 = arith.constant 8 : index
    %90 = vector.load %arg9[%c4_85, %c8_86] : memref<36x64xbf16, #tpu.memory_space<vmem>>, vector<4x8xbf16>
    tpu.vector_store %arg9[%c4_85, %c8_86], %89 {strides = array<i32>} : memref<36x64xbf16, #tpu.memory_space<vmem>>, vector<4x8xbf16>,
    %91 = vector.extract_strided_slice %12 {offsets = [0, 1], sizes = [4, 8], strides = [1, 1]} : vector<4x17xbf16> to vector<4x8xbf16>
    %c8_87 = arith.constant 8 : index
    %c8_88 = arith.constant 8 : index
    %92 = vector.load %arg9[%c8_87, %c8_88] : memref<36x64xbf16, #tpu.memory_space<vmem>>, vector<4x8xbf16>
    tpu.vector_store %arg9[%c8_87, %c8_88], %91 {strides = array<i32>} : memref<36x64xbf16, #tpu.memory_space<vmem>>, vector<4x8xbf16>,
    %93 = vector.extract_strided_slice %16 {offsets = [0, 0], sizes = [4, 8], strides = [1, 1]} : vector<4x17xbf16> to vector<4x8xbf16>
    %c12_89 = arith.constant 12 : index
    %c8_90 = arith.constant 8 : index
    %94 = vector.load %arg9[%c12_89, %c8_90] : memref<36x64xbf16, #tpu.memory_space<vmem>>, vector<4x8xbf16>
    tpu.vector_store %arg9[%c12_89, %c8_90], %93 {strides = array<i32>} : memref<36x64xbf16, #tpu.memory_space<vmem>>, vector<4x8xbf16>,
    %95 = vector.extract_strided_slice %16 {offsets = [0, 9], sizes = [4, 8], strides = [1, 1]} : vector<4x17xbf16> to vector<4x8xbf16>
    %c16_91 = arith.constant 16 : index
    %c8_92 = arith.constant 8 : index
    %96 = vector.load %arg9[%c16_91, %c8_92] : memref<36x64xbf16, #tpu.memory_space<vmem>>, vector<4x8xbf16>
    tpu.vector_store %arg9[%c16_91, %c8_92], %95 {strides = array<i32>} : memref<36x64xbf16, #tpu.memory_space<vmem>>, vector<4x8xbf16>,
    %97 = vector.extract_strided_slice %16 {offsets = [0, 1], sizes = [4, 8], strides = [1, 1]} : vector<4x17xbf16> to vector<4x8xbf16>
    %c20_93 = arith.constant 20 : index
    %c8_94 = arith.constant 8 : index
    %98 = vector.load %arg9[%c20_93, %c8_94] : memref<36x64xbf16, #tpu.memory_space<vmem>>, vector<4x8xbf16>
    tpu.vector_store %arg9[%c20_93, %c8_94], %97 {strides = array<i32>} : memref<36x64xbf16, #tpu.memory_space<vmem>>, vector<4x8xbf16>,
    %99 = vector.extract_strided_slice %20 {offsets = [0, 0], sizes = [4, 8], strides = [1, 1]} : vector<4x17xbf16> to vector<4x8xbf16>
    %c24_95 = arith.constant 24 : index
    %c8_96 = arith.constant 8 : index
    %100 = vector.load %arg9[%c24_95, %c8_96] : memref<36x64xbf16, #tpu.memory_space<vmem>>, vector<4x8xbf16>
    tpu.vector_store %arg9[%c24_95, %c8_96], %99 {strides = array<i32>} : memref<36x64xbf16, #tpu.memory_space<vmem>>, vector<4x8xbf16>,
    %101 = vector.extract_strided_slice %20 {offsets = [0, 9], sizes = [4, 8], strides = [1, 1]} : vector<4x17xbf16> to vector<4x8xbf16>
    %c28_97 = arith.constant 28 : index
    %c8_98 = arith.constant 8 : index
    %102 = vector.load %arg9[%c28_97, %c8_98] : memref<36x64xbf16, #tpu.memory_space<vmem>>, vector<4x8xbf16>
    tpu.vector_store %arg9[%c28_97, %c8_98], %101 {strides = array<i32>} : memref<36x64xbf16, #tpu.memory_space<vmem>>, vector<4x8xbf16>,
    %103 = vector.extract_strided_slice %20 {offsets = [0, 1], sizes = [4, 8], strides = [1, 1]} : vector<4x17xbf16> to vector<4x8xbf16>
    %c32_99 = arith.constant 32 : index
    %c8_100 = arith.constant 8 : index
    %104 = vector.load %arg9[%c32_99, %c8_100] : memref<36x64xbf16, #tpu.memory_space<vmem>>, vector<4x8xbf16>
    tpu.vector_store %arg9[%c32_99, %c8_100], %103 {strides = array<i32>} : memref<36x64xbf16, #tpu.memory_space<vmem>>, vector<4x8xbf16>,
    %105 = vector.extract_strided_slice %20 {offsets = [0, 0], sizes = [4, 8], strides = [1, 1]} : vector<4x17xbf16> to vector<4x8xbf16>
    %c0_101 = arith.constant 0 : index
    %c16_102 = arith.constant 16 : index
    %106 = vector.load %arg9[%c0_101, %c16_102] : memref<36x64xbf16, #tpu.memory_space<vmem>>, vector<4x8xbf16>
    tpu.vector_store %arg9[%c0_101, %c16_102], %105 {strides = array<i32>} : memref<36x64xbf16, #tpu.memory_space<vmem>>, vector<4x8xbf16>,
    %107 = vector.extract_strided_slice %20 {offsets = [0, 9], sizes = [4, 8], strides = [1, 1]} : vector<4x17xbf16> to vector<4x8xbf16>
    %c4_103 = arith.constant 4 : index
    %c16_104 = arith.constant 16 : index
    %108 = vector.load %arg9[%c4_103, %c16_104] : memref<36x64xbf16, #tpu.memory_space<vmem>>, vector<4x8xbf16>
    tpu.vector_store %arg9[%c4_103, %c16_104], %107 {strides = array<i32>} : memref<36x64xbf16, #tpu.memory_space<vmem>>, vector<4x8xbf16>,
    %109 = vector.extract_strided_slice %20 {offsets = [0, 1], sizes = [4, 8], strides = [1, 1]} : vector<4x17xbf16> to vector<4x8xbf16>
    %c8_105 = arith.constant 8 : index
    %c16_106 = arith.constant 16 : index
    %110 = vector.load %arg9[%c8_105, %c16_106] : memref<36x64xbf16, #tpu.memory_space<vmem>>, vector<4x8xbf16>
    tpu.vector_store %arg9[%c8_105, %c16_106], %109 {strides = array<i32>} : memref<36x64xbf16, #tpu.memory_space<vmem>>, vector<4x8xbf16>,
    %111 = vector.extract_strided_slice %24 {offsets = [0, 0], sizes = [4, 8], strides = [1, 1]} : vector<4x17xbf16> to vector<4x8xbf16>
    %c12_107 = arith.constant 12 : index
    %c16_108 = arith.constant 16 : index
    %112 = vector.load %arg9[%c12_107, %c16_108] : memref<36x64xbf16, #tpu.memory_space<vmem>>, vector<4x8xbf16>
    tpu.vector_store %arg9[%c12_107, %c16_108], %111 {strides = array<i32>} : memref<36x64xbf16, #tpu.memory_space<vmem>>, vector<4x8xbf16>,
    %113 = vector.extract_strided_slice %24 {offsets = [0, 9], sizes = [4, 8], strides = [1, 1]} : vector<4x17xbf16> to vector<4x8xbf16>
    %c16_109 = arith.constant 16 : index
    %c16_110 = arith.constant 16 : index
    %114 = vector.load %arg9[%c16_109, %c16_110] : memref<36x64xbf16, #tpu.memory_space<vmem>>, vector<4x8xbf16>
    tpu.vector_store %arg9[%c16_109, %c16_110], %113 {strides = array<i32>} : memref<36x64xbf16, #tpu.memory_space<vmem>>, vector<4x8xbf16>,
    %115 = vector.extract_strided_slice %24 {offsets = [0, 1], sizes = [4, 8], strides = [1, 1]} : vector<4x17xbf16> to vector<4x8xbf16>
    %c20_111 = arith.constant 20 : index
    %c16_112 = arith.constant 16 : index
    %116 = vector.load %arg9[%c20_111, %c16_112] : memref<36x64xbf16, #tpu.memory_space<vmem>>, vector<4x8xbf16>
    tpu.vector_store %arg9[%c20_111, %c16_112], %115 {strides = array<i32>} : memref<36x64xbf16, #tpu.memory_space<vmem>>, vector<4x8xbf16>,
    %117 = vector.extract_strided_slice %28 {offsets = [0, 0], sizes = [4, 8], strides = [1, 1]} : vector<4x17xbf16> to vector<4x8xbf16>
    %c24_113 = arith.constant 24 : index
    %c16_114 = arith.constant 16 : index
    %118 = vector.load %arg9[%c24_113, %c16_114] : memref<36x64xbf16, #tpu.memory_space<vmem>>, vector<4x8xbf16>
    tpu.vector_store %arg9[%c24_113, %c16_114], %117 {strides = array<i32>} : memref<36x64xbf16, #tpu.memory_space<vmem>>, vector<4x8xbf16>,
    %119 = vector.extract_strided_slice %28 {offsets = [0, 9], sizes = [4, 8], strides = [1, 1]} : vector<4x17xbf16> to vector<4x8xbf16>
    %c28_115 = arith.constant 28 : index
    %c16_116 = arith.constant 16 : index
    %120 = vector.load %arg9[%c28_115, %c16_116] : memref<36x64xbf16, #tpu.memory_space<vmem>>, vector<4x8xbf16>
    tpu.vector_store %arg9[%c28_115, %c16_116], %119 {strides = array<i32>} : memref<36x64xbf16, #tpu.memory_space<vmem>>, vector<4x8xbf16>,
    %121 = vector.extract_strided_slice %28 {offsets = [0, 1], sizes = [4, 8], strides = [1, 1]} : vector<4x17xbf16> to vector<4x8xbf16>
    %c32_117 = arith.constant 32 : index
    %c16_118 = arith.constant 16 : index
    %122 = vector.load %arg9[%c32_117, %c16_118] : memref<36x64xbf16, #tpu.memory_space<vmem>>, vector<4x8xbf16>
    tpu.vector_store %arg9[%c32_117, %c16_118], %121 {strides = array<i32>} : memref<36x64xbf16, #tpu.memory_space<vmem>>, vector<4x8xbf16>,
    %123 = vector.extract_strided_slice %28 {offsets = [0, 0], sizes = [4, 8], strides = [1, 1]} : vector<4x17xbf16> to vector<4x8xbf16>
    %c0_119 = arith.constant 0 : index
    %c24_120 = arith.constant 24 : index
    %124 = vector.load %arg9[%c0_119, %c24_120] : memref<36x64xbf16, #tpu.memory_space<vmem>>, vector<4x8xbf16>
    tpu.vector_store %arg9[%c0_119, %c24_120], %123 {strides = array<i32>} : memref<36x64xbf16, #tpu.memory_space<vmem>>, vector<4x8xbf16>,
    %125 = vector.extract_strided_slice %28 {offsets = [0, 9], sizes = [4, 8], strides = [1, 1]} : vector<4x17xbf16> to vector<4x8xbf16>
    %c4_121 = arith.constant 4 : index
    %c24_122 = arith.constant 24 : index
    %126 = vector.load %arg9[%c4_121, %c24_122] : memref<36x64xbf16, #tpu.memory_space<vmem>>, vector<4x8xbf16>
    tpu.vector_store %arg9[%c4_121, %c24_122], %125 {strides = array<i32>} : memref<36x64xbf16, #tpu.memory_space<vmem>>, vector<4x8xbf16>,
    %127 = vector.extract_strided_slice %28 {offsets = [0, 1], sizes = [4, 8], strides = [1, 1]} : vector<4x17xbf16> to vector<4x8xbf16>
    %c8_123 = arith.constant 8 : index
    %c24_124 = arith.constant 24 : index
    %128 = vector.load %arg9[%c8_123, %c24_124] : memref<36x64xbf16, #tpu.memory_space<vmem>>, vector<4x8xbf16>
    tpu.vector_store %arg9[%c8_123, %c24_124], %127 {strides = array<i32>} : memref<36x64xbf16, #tpu.memory_space<vmem>>, vector<4x8xbf16>,
    %129 = vector.extract_strided_slice %32 {offsets = [0, 0], sizes = [4, 8], strides = [1, 1]} : vector<4x17xbf16> to vector<4x8xbf16>
    %c12_125 = arith.constant 12 : index
    %c24_126 = arith.constant 24 : index
    %130 = vector.load %arg9[%c12_125, %c24_126] : memref<36x64xbf16, #tpu.memory_space<vmem>>, vector<4x8xbf16>
    tpu.vector_store %arg9[%c12_125, %c24_126], %129 {strides = array<i32>} : memref<36x64xbf16, #tpu.memory_space<vmem>>, vector<4x8xbf16>,
    %131 = vector.extract_strided_slice %32 {offsets = [0, 9], sizes = [4, 8], strides = [1, 1]} : vector<4x17xbf16> to vector<4x8xbf16>
    %c16_127 = arith.constant 16 : index
    %c24_128 = arith.constant 24 : index
    %132 = vector.load %arg9[%c16_127, %c24_128] : memref<36x64xbf16, #tpu.memory_space<vmem>>, vector<4x8xbf16>
    tpu.vector_store %arg9[%c16_127, %c24_128], %131 {strides = array<i32>} : memref<36x64xbf16, #tpu.memory_space<vmem>>, vector<4x8xbf16>,
    %133 = vector.extract_strided_slice %32 {offsets = [0, 1], sizes = [4, 8], strides = [1, 1]} : vector<4x17xbf16> to vector<4x8xbf16>
    %c20_129 = arith.constant 20 : index
    %c24_130 = arith.constant 24 : index
    %134 = vector.load %arg9[%c20_129, %c24_130] : memref<36x64xbf16, #tpu.memory_space<vmem>>, vector<4x8xbf16>
    tpu.vector_store %arg9[%c20_129, %c24_130], %133 {strides = array<i32>} : memref<36x64xbf16, #tpu.memory_space<vmem>>, vector<4x8xbf16>,
    %135 = vector.extract_strided_slice %36 {offsets = [0, 0], sizes = [4, 8], strides = [1, 1]} : vector<4x17xbf16> to vector<4x8xbf16>
    %c24_131 = arith.constant 24 : index
    %c24_132 = arith.constant 24 : index
    %136 = vector.load %arg9[%c24_131, %c24_132] : memref<36x64xbf16, #tpu.memory_space<vmem>>, vector<4x8xbf16>
    tpu.vector_store %arg9[%c24_131, %c24_132], %135 {strides = array<i32>} : memref<36x64xbf16, #tpu.memory_space<vmem>>, vector<4x8xbf16>,
    %137 = vector.extract_strided_slice %36 {offsets = [0, 9], sizes = [4, 8], strides = [1, 1]} : vector<4x17xbf16> to vector<4x8xbf16>
    %c28_133 = arith.constant 28 : index
    %c24_134 = arith.constant 24 : index
    %138 = vector.load %arg9[%c28_133, %c24_134] : memref<36x64xbf16, #tpu.memory_space<vmem>>, vector<4x8xbf16>
    tpu.vector_store %arg9[%c28_133, %c24_134], %137 {strides = array<i32>} : memref<36x64xbf16, #tpu.memory_space<vmem>>, vector<4x8xbf16>,
    %139 = vector.extract_strided_slice %36 {offsets = [0, 1], sizes = [4, 8], strides = [1, 1]} : vector<4x17xbf16> to vector<4x8xbf16>
    %c32_135 = arith.constant 32 : index
    %c24_136 = arith.constant 24 : index
    %140 = vector.load %arg9[%c32_135, %c24_136] : memref<36x64xbf16, #tpu.memory_space<vmem>>, vector<4x8xbf16>
    tpu.vector_store %arg9[%c32_135, %c24_136], %139 {strides = array<i32>} : memref<36x64xbf16, #tpu.memory_space<vmem>>, vector<4x8xbf16>,
    %141 = vector.extract_strided_slice %36 {offsets = [0, 0], sizes = [4, 8], strides = [1, 1]} : vector<4x17xbf16> to vector<4x8xbf16>
    %c0_137 = arith.constant 0 : index
    %c32_138 = arith.constant 32 : index
    %142 = vector.load %arg9[%c0_137, %c32_138] : memref<36x64xbf16, #tpu.memory_space<vmem>>, vector<4x8xbf16>
    tpu.vector_store %arg9[%c0_137, %c32_138], %141 {strides = array<i32>} : memref<36x64xbf16, #tpu.memory_space<vmem>>, vector<4x8xbf16>,
    %143 = vector.extract_strided_slice %36 {offsets = [0, 9], sizes = [4, 8], strides = [1, 1]} : vector<4x17xbf16> to vector<4x8xbf16>
    %c4_139 = arith.constant 4 : index
    %c32_140 = arith.constant 32 : index
    %144 = vector.load %arg9[%c4_139, %c32_140] : memref<36x64xbf16, #tpu.memory_space<vmem>>, vector<4x8xbf16>
    tpu.vector_store %arg9[%c4_139, %c32_140], %143 {strides = array<i32>} : memref<36x64xbf16, #tpu.memory_space<vmem>>, vector<4x8xbf16>,
    %145 = vector.extract_strided_slice %36 {offsets = [0, 1], sizes = [4, 8], strides = [1, 1]} : vector<4x17xbf16> to vector<4x8xbf16>
    %c8_141 = arith.constant 8 : index
    %c32_142 = arith.constant 32 : index
    %146 = vector.load %arg9[%c8_141, %c32_142] : memref<36x64xbf16, #tpu.memory_space<vmem>>, vector<4x8xbf16>
    tpu.vector_store %arg9[%c8_141, %c32_142], %145 {strides = array<i32>} : memref<36x64xbf16, #tpu.memory_space<vmem>>, vector<4x8xbf16>,
    %147 = vector.extract_strided_slice %40 {offsets = [0, 0], sizes = [4, 8], strides = [1, 1]} : vector<4x17xbf16> to vector<4x8xbf16>
    %c12_143 = arith.constant 12 : index
    %c32_144 = arith.constant 32 : index
    %148 = vector.load %arg9[%c12_143, %c32_144] : memref<36x64xbf16, #tpu.memory_space<vmem>>, vector<4x8xbf16>
    tpu.vector_store %arg9[%c12_143, %c32_144], %147 {strides = array<i32>} : memref<36x64xbf16, #tpu.memory_space<vmem>>, vector<4x8xbf16>,
    %149 = vector.extract_strided_slice %40 {offsets = [0, 9], sizes = [4, 8], strides = [1, 1]} : vector<4x17xbf16> to vector<4x8xbf16>
    %c16_145 = arith.constant 16 : index
    %c32_146 = arith.constant 32 : index
    %150 = vector.load %arg9[%c16_145, %c32_146] : memref<36x64xbf16, #tpu.memory_space<vmem>>, vector<4x8xbf16>
    tpu.vector_store %arg9[%c16_145, %c32_146], %149 {strides = array<i32>} : memref<36x64xbf16, #tpu.memory_space<vmem>>, vector<4x8xbf16>,
    %151 = vector.extract_strided_slice %40 {offsets = [0, 1], sizes = [4, 8], strides = [1, 1]} : vector<4x17xbf16> to vector<4x8xbf16>
    %c20_147 = arith.constant 20 : index
    %c32_148 = arith.constant 32 : index
    %152 = vector.load %arg9[%c20_147, %c32_148] : memref<36x64xbf16, #tpu.memory_space<vmem>>, vector<4x8xbf16>
    tpu.vector_store %arg9[%c20_147, %c32_148], %151 {strides = array<i32>} : memref<36x64xbf16, #tpu.memory_space<vmem>>, vector<4x8xbf16>,
    %153 = vector.extract_strided_slice %44 {offsets = [0, 0], sizes = [4, 8], strides = [1, 1]} : vector<4x17xbf16> to vector<4x8xbf16>
    %c24_149 = arith.constant 24 : index
    %c32_150 = arith.constant 32 : index
    %154 = vector.load %arg9[%c24_149, %c32_150] : memref<36x64xbf16, #tpu.memory_space<vmem>>, vector<4x8xbf16>
    tpu.vector_store %arg9[%c24_149, %c32_150], %153 {strides = array<i32>} : memref<36x64xbf16, #tpu.memory_space<vmem>>, vector<4x8xbf16>,
    %155 = vector.extract_strided_slice %44 {offsets = [0, 9], sizes = [4, 8], strides = [1, 1]} : vector<4x17xbf16> to vector<4x8xbf16>
    %c28_151 = arith.constant 28 : index
    %c32_152 = arith.constant 32 : index
    %156 = vector.load %arg9[%c28_151, %c32_152] : memref<36x64xbf16, #tpu.memory_space<vmem>>, vector<4x8xbf16>
    tpu.vector_store %arg9[%c28_151, %c32_152], %155 {strides = array<i32>} : memref<36x64xbf16, #tpu.memory_space<vmem>>, vector<4x8xbf16>,
    %157 = vector.extract_strided_slice %44 {offsets = [0, 1], sizes = [4, 8], strides = [1, 1]} : vector<4x17xbf16> to vector<4x8xbf16>
    %c32_153 = arith.constant 32 : index
    %c32_154 = arith.constant 32 : index
    %158 = vector.load %arg9[%c32_153, %c32_154] : memref<36x64xbf16, #tpu.memory_space<vmem>>, vector<4x8xbf16>
    tpu.vector_store %arg9[%c32_153, %c32_154], %157 {strides = array<i32>} : memref<36x64xbf16, #tpu.memory_space<vmem>>, vector<4x8xbf16>,
    %159 = vector.extract_strided_slice %44 {offsets = [0, 0], sizes = [4, 8], strides = [1, 1]} : vector<4x17xbf16> to vector<4x8xbf16>
    %c0_155 = arith.constant 0 : index
    %c40 = arith.constant 40 : index
    %160 = vector.load %arg9[%c0_155, %c40] : memref<36x64xbf16, #tpu.memory_space<vmem>>, vector<4x8xbf16>
    tpu.vector_store %arg9[%c0_155, %c40], %159 {strides = array<i32>} : memref<36x64xbf16, #tpu.memory_space<vmem>>, vector<4x8xbf16>,
    %161 = vector.extract_strided_slice %44 {offsets = [0, 9], sizes = [4, 8], strides = [1, 1]} : vector<4x17xbf16> to vector<4x8xbf16>
    %c4_156 = arith.constant 4 : index
    %c40_157 = arith.constant 40 : index
    %162 = vector.load %arg9[%c4_156, %c40_157] : memref<36x64xbf16, #tpu.memory_space<vmem>>, vector<4x8xbf16>
    tpu.vector_store %arg9[%c4_156, %c40_157], %161 {strides = array<i32>} : memref<36x64xbf16, #tpu.memory_space<vmem>>, vector<4x8xbf16>,
    %163 = vector.extract_strided_slice %44 {offsets = [0, 1], sizes = [4, 8], strides = [1, 1]} : vector<4x17xbf16> to vector<4x8xbf16>
    %c8_158 = arith.constant 8 : index
    %c40_159 = arith.constant 40 : index
    %164 = vector.load %arg9[%c8_158, %c40_159] : memref<36x64xbf16, #tpu.memory_space<vmem>>, vector<4x8xbf16>
    tpu.vector_store %arg9[%c8_158, %c40_159], %163 {strides = array<i32>} : memref<36x64xbf16, #tpu.memory_space<vmem>>, vector<4x8xbf16>,
    %165 = vector.extract_strided_slice %48 {offsets = [0, 0], sizes = [4, 8], strides = [1, 1]} : vector<4x17xbf16> to vector<4x8xbf16>
    %c12_160 = arith.constant 12 : index
    %c40_161 = arith.constant 40 : index
    %166 = vector.load %arg9[%c12_160, %c40_161] : memref<36x64xbf16, #tpu.memory_space<vmem>>, vector<4x8xbf16>
    tpu.vector_store %arg9[%c12_160, %c40_161], %165 {strides = array<i32>} : memref<36x64xbf16, #tpu.memory_space<vmem>>, vector<4x8xbf16>,
    %167 = vector.extract_strided_slice %48 {offsets = [0, 9], sizes = [4, 8], strides = [1, 1]} : vector<4x17xbf16> to vector<4x8xbf16>
    %c16_162 = arith.constant 16 : index
    %c40_163 = arith.constant 40 : index
    %168 = vector.load %arg9[%c16_162, %c40_163] : memref<36x64xbf16, #tpu.memory_space<vmem>>, vector<4x8xbf16>
    tpu.vector_store %arg9[%c16_162, %c40_163], %167 {strides = array<i32>} : memref<36x64xbf16, #tpu.memory_space<vmem>>, vector<4x8xbf16>,
    %169 = vector.extract_strided_slice %48 {offsets = [0, 1], sizes = [4, 8], strides = [1, 1]} : vector<4x17xbf16> to vector<4x8xbf16>
    %c20_164 = arith.constant 20 : index
    %c40_165 = arith.constant 40 : index
    %170 = vector.load %arg9[%c20_164, %c40_165] : memref<36x64xbf16, #tpu.memory_space<vmem>>, vector<4x8xbf16>
    tpu.vector_store %arg9[%c20_164, %c40_165], %169 {strides = array<i32>} : memref<36x64xbf16, #tpu.memory_space<vmem>>, vector<4x8xbf16>,
    %171 = vector.extract_strided_slice %52 {offsets = [0, 0], sizes = [4, 8], strides = [1, 1]} : vector<4x17xbf16> to vector<4x8xbf16>
    %c24_166 = arith.constant 24 : index
    %c40_167 = arith.constant 40 : index
    %172 = vector.load %arg9[%c24_166, %c40_167] : memref<36x64xbf16, #tpu.memory_space<vmem>>, vector<4x8xbf16>
    tpu.vector_store %arg9[%c24_166, %c40_167], %171 {strides = array<i32>} : memref<36x64xbf16, #tpu.memory_space<vmem>>, vector<4x8xbf16>,
    %173 = vector.extract_strided_slice %52 {offsets = [0, 9], sizes = [4, 8], strides = [1, 1]} : vector<4x17xbf16> to vector<4x8xbf16>
    %c28_168 = arith.constant 28 : index
    %c40_169 = arith.constant 40 : index
    %174 = vector.load %arg9[%c28_168, %c40_169] : memref<36x64xbf16, #tpu.memory_space<vmem>>, vector<4x8xbf16>
    tpu.vector_store %arg9[%c28_168, %c40_169], %173 {strides = array<i32>} : memref<36x64xbf16, #tpu.memory_space<vmem>>, vector<4x8xbf16>,
    %175 = vector.extract_strided_slice %52 {offsets = [0, 1], sizes = [4, 8], strides = [1, 1]} : vector<4x17xbf16> to vector<4x8xbf16>
    %c32_170 = arith.constant 32 : index
    %c40_171 = arith.constant 40 : index
    %176 = vector.load %arg9[%c32_170, %c40_171] : memref<36x64xbf16, #tpu.memory_space<vmem>>, vector<4x8xbf16>
    tpu.vector_store %arg9[%c32_170, %c40_171], %175 {strides = array<i32>} : memref<36x64xbf16, #tpu.memory_space<vmem>>, vector<4x8xbf16>,
    %177 = vector.extract_strided_slice %52 {offsets = [0, 0], sizes = [4, 8], strides = [1, 1]} : vector<4x17xbf16> to vector<4x8xbf16>
    %c0_172 = arith.constant 0 : index
    %c48 = arith.constant 48 : index
    %178 = vector.load %arg9[%c0_172, %c48] : memref<36x64xbf16, #tpu.memory_space<vmem>>, vector<4x8xbf16>
    tpu.vector_store %arg9[%c0_172, %c48], %177 {strides = array<i32>} : memref<36x64xbf16, #tpu.memory_space<vmem>>, vector<4x8xbf16>,
    %179 = vector.extract_strided_slice %52 {offsets = [0, 9], sizes = [4, 8], strides = [1, 1]} : vector<4x17xbf16> to vector<4x8xbf16>
    %c4_173 = arith.constant 4 : index
    %c48_174 = arith.constant 48 : index
    %180 = vector.load %arg9[%c4_173, %c48_174] : memref<36x64xbf16, #tpu.memory_space<vmem>>, vector<4x8xbf16>
    tpu.vector_store %arg9[%c4_173, %c48_174], %179 {strides = array<i32>} : memref<36x64xbf16, #tpu.memory_space<vmem>>, vector<4x8xbf16>,
    %181 = vector.extract_strided_slice %52 {offsets = [0, 1], sizes = [4, 8], strides = [1, 1]} : vector<4x17xbf16> to vector<4x8xbf16>
    %c8_175 = arith.constant 8 : index
    %c48_176 = arith.constant 48 : index
    %182 = vector.load %arg9[%c8_175, %c48_176] : memref<36x64xbf16, #tpu.memory_space<vmem>>, vector<4x8xbf16>
    tpu.vector_store %arg9[%c8_175, %c48_176], %181 {strides = array<i32>} : memref<36x64xbf16, #tpu.memory_space<vmem>>, vector<4x8xbf16>,
    %183 = vector.extract_strided_slice %56 {offsets = [0, 0], sizes = [4, 8], strides = [1, 1]} : vector<4x17xbf16> to vector<4x8xbf16>
    %c12_177 = arith.constant 12 : index
    %c48_178 = arith.constant 48 : index
    %184 = vector.load %arg9[%c12_177, %c48_178] : memref<36x64xbf16, #tpu.memory_space<vmem>>, vector<4x8xbf16>
    tpu.vector_store %arg9[%c12_177, %c48_178], %183 {strides = array<i32>} : memref<36x64xbf16, #tpu.memory_space<vmem>>, vector<4x8xbf16>,
    %185 = vector.extract_strided_slice %56 {offsets = [0, 9], sizes = [4, 8], strides = [1, 1]} : vector<4x17xbf16> to vector<4x8xbf16>
    %c16_179 = arith.constant 16 : index
    %c48_180 = arith.constant 48 : index
    %186 = vector.load %arg9[%c16_179, %c48_180] : memref<36x64xbf16, #tpu.memory_space<vmem>>, vector<4x8xbf16>
    tpu.vector_store %arg9[%c16_179, %c48_180], %185 {strides = array<i32>} : memref<36x64xbf16, #tpu.memory_space<vmem>>, vector<4x8xbf16>,
    %187 = vector.extract_strided_slice %56 {offsets = [0, 1], sizes = [4, 8], strides = [1, 1]} : vector<4x17xbf16> to vector<4x8xbf16>
    %c20_181 = arith.constant 20 : index
    %c48_182 = arith.constant 48 : index
    %188 = vector.load %arg9[%c20_181, %c48_182] : memref<36x64xbf16, #tpu.memory_space<vmem>>, vector<4x8xbf16>
    tpu.vector_store %arg9[%c20_181, %c48_182], %187 {strides = array<i32>} : memref<36x64xbf16, #tpu.memory_space<vmem>>, vector<4x8xbf16>,
    %189 = vector.extract_strided_slice %60 {offsets = [0, 0], sizes = [4, 8], strides = [1, 1]} : vector<4x17xbf16> to vector<4x8xbf16>
    %c24_183 = arith.constant 24 : index
    %c48_184 = arith.constant 48 : index
    %190 = vector.load %arg9[%c24_183, %c48_184] : memref<36x64xbf16, #tpu.memory_space<vmem>>, vector<4x8xbf16>
    tpu.vector_store %arg9[%c24_183, %c48_184], %189 {strides = array<i32>} : memref<36x64xbf16, #tpu.memory_space<vmem>>, vector<4x8xbf16>,
    %191 = vector.extract_strided_slice %60 {offsets = [0, 9], sizes = [4, 8], strides = [1, 1]} : vector<4x17xbf16> to vector<4x8xbf16>
    %c28_185 = arith.constant 28 : index
    %c48_186 = arith.constant 48 : index
    %192 = vector.load %arg9[%c28_185, %c48_186] : memref<36x64xbf16, #tpu.memory_space<vmem>>, vector<4x8xbf16>
    tpu.vector_store %arg9[%c28_185, %c48_186], %191 {strides = array<i32>} : memref<36x64xbf16, #tpu.memory_space<vmem>>, vector<4x8xbf16>,
    %193 = vector.extract_strided_slice %60 {offsets = [0, 1], sizes = [4, 8], strides = [1, 1]} : vector<4x17xbf16> to vector<4x8xbf16>
    %c32_187 = arith.constant 32 : index
    %c48_188 = arith.constant 48 : index
    %194 = vector.load %arg9[%c32_187, %c48_188] : memref<36x64xbf16, #tpu.memory_space<vmem>>, vector<4x8xbf16>
    tpu.vector_store %arg9[%c32_187, %c48_188], %193 {strides = array<i32>} : memref<36x64xbf16, #tpu.memory_space<vmem>>, vector<4x8xbf16>,
    %195 = vector.extract_strided_slice %60 {offsets = [0, 0], sizes = [4, 8], strides = [1, 1]} : vector<4x17xbf16> to vector<4x8xbf16>
    %c0_189 = arith.constant 0 : index
    %c56 = arith.constant 56 : index
    %196 = vector.load %arg9[%c0_189, %c56] : memref<36x64xbf16, #tpu.memory_space<vmem>>, vector<4x8xbf16>
    tpu.vector_store %arg9[%c0_189, %c56], %195 {strides = array<i32>} : memref<36x64xbf16, #tpu.memory_space<vmem>>, vector<4x8xbf16>,
    %197 = vector.extract_strided_slice %60 {offsets = [0, 9], sizes = [4, 8], strides = [1, 1]} : vector<4x17xbf16> to vector<4x8xbf16>
    %c4_190 = arith.constant 4 : index
    %c56_191 = arith.constant 56 : index
    %198 = vector.load %arg9[%c4_190, %c56_191] : memref<36x64xbf16, #tpu.memory_space<vmem>>, vector<4x8xbf16>
    tpu.vector_store %arg9[%c4_190, %c56_191], %197 {strides = array<i32>} : memref<36x64xbf16, #tpu.memory_space<vmem>>, vector<4x8xbf16>,
    %199 = vector.extract_strided_slice %60 {offsets = [0, 1], sizes = [4, 8], strides = [1, 1]} : vector<4x17xbf16> to vector<4x8xbf16>
    %c8_192 = arith.constant 8 : index
    %c56_193 = arith.constant 56 : index
    %200 = vector.load %arg9[%c8_192, %c56_193] : memref<36x64xbf16, #tpu.memory_space<vmem>>, vector<4x8xbf16>
    tpu.vector_store %arg9[%c8_192, %c56_193], %199 {strides = array<i32>} : memref<36x64xbf16, #tpu.memory_space<vmem>>, vector<4x8xbf16>,
    %201 = vector.extract_strided_slice %64 {offsets = [0, 0], sizes = [4, 8], strides = [1, 1]} : vector<4x17xbf16> to vector<4x8xbf16>
    %c12_194 = arith.constant 12 : index
    %c56_195 = arith.constant 56 : index
    %202 = vector.load %arg9[%c12_194, %c56_195] : memref<36x64xbf16, #tpu.memory_space<vmem>>, vector<4x8xbf16>
    tpu.vector_store %arg9[%c12_194, %c56_195], %201 {strides = array<i32>} : memref<36x64xbf16, #tpu.memory_space<vmem>>, vector<4x8xbf16>,
    %203 = vector.extract_strided_slice %64 {offsets = [0, 9], sizes = [4, 8], strides = [1, 1]} : vector<4x17xbf16> to vector<4x8xbf16>
    %c16_196 = arith.constant 16 : index
    %c56_197 = arith.constant 56 : index
    %204 = vector.load %arg9[%c16_196, %c56_197] : memref<36x64xbf16, #tpu.memory_space<vmem>>, vector<4x8xbf16>
    tpu.vector_store %arg9[%c16_196, %c56_197], %203 {strides = array<i32>} : memref<36x64xbf16, #tpu.memory_space<vmem>>, vector<4x8xbf16>,
    %205 = vector.extract_strided_slice %64 {offsets = [0, 1], sizes = [4, 8], strides = [1, 1]} : vector<4x17xbf16> to vector<4x8xbf16>
    %c20_198 = arith.constant 20 : index
    %c56_199 = arith.constant 56 : index
    %206 = vector.load %arg9[%c20_198, %c56_199] : memref<36x64xbf16, #tpu.memory_space<vmem>>, vector<4x8xbf16>
    tpu.vector_store %arg9[%c20_198, %c56_199], %205 {strides = array<i32>} : memref<36x64xbf16, #tpu.memory_space<vmem>>, vector<4x8xbf16>,
    %207 = vector.extract_strided_slice %68 {offsets = [0, 0], sizes = [4, 8], strides = [1, 1]} : vector<4x17xbf16> to vector<4x8xbf16>
    %c24_200 = arith.constant 24 : index
    %c56_201 = arith.constant 56 : index
    %208 = vector.load %arg9[%c24_200, %c56_201] : memref<36x64xbf16, #tpu.memory_space<vmem>>, vector<4x8xbf16>
    tpu.vector_store %arg9[%c24_200, %c56_201], %207 {strides = array<i32>} : memref<36x64xbf16, #tpu.memory_space<vmem>>, vector<4x8xbf16>,
    %209 = vector.extract_strided_slice %68 {offsets = [0, 9], sizes = [4, 8], strides = [1, 1]} : vector<4x17xbf16> to vector<4x8xbf16>
    %c28_202 = arith.constant 28 : index
    %c56_203 = arith.constant 56 : index
    %210 = vector.load %arg9[%c28_202, %c56_203] : memref<36x64xbf16, #tpu.memory_space<vmem>>, vector<4x8xbf16>
    tpu.vector_store %arg9[%c28_202, %c56_203], %209 {strides = array<i32>} : memref<36x64xbf16, #tpu.memory_space<vmem>>, vector<4x8xbf16>,
    %211 = vector.extract_strided_slice %68 {offsets = [0, 1], sizes = [4, 8], strides = [1, 1]} : vector<4x17xbf16> to vector<4x8xbf16>
    %c32_204 = arith.constant 32 : index
    %c56_205 = arith.constant 56 : index
    %212 = vector.load %arg9[%c32_204, %c56_205] : memref<36x64xbf16, #tpu.memory_space<vmem>>, vector<4x8xbf16>
    tpu.vector_store %arg9[%c32_204, %c56_205], %211 {strides = array<i32>} : memref<36x64xbf16, #tpu.memory_space<vmem>>, vector<4x8xbf16>,
    %c0_206 = arith.constant 0 : index
    %c0_207 = arith.constant 0 : index
    %213 = vector.load %arg9[%c0_206, %c0_207] : memref<36x64xbf16, #tpu.memory_space<vmem>>, vector<36x64xbf16>
    %c0_208 = arith.constant 0 : index
    %c0_209 = arith.constant 0 : index
    %214 = vector.load %arg3[%c0_208, %c0_209] : memref<8x36xbf16, #tpu.memory_space<vmem>>, vector<8x36xbf16>
    %cst_210 = arith.constant dense<0.000000e+00> : vector<8x64xf32>
    %215 = tpu.matmul %214, %213, %cst_210 {dimension_numbers = #tpu.dot_dimension_numbers<[1], [0], [0], [1], [0, 0, 1, 1], [], []>} : vector<8x36xbf16>, vector<36x64xbf16>, vector<8x64xf32> -> vector<8x64xf32>
    %c0_211 = arith.constant 0 : index
    %c0_212 = arith.constant 0 : index
    %216 = vector.load %arg4[%c0_211, %c0_212] : memref<8x1xf32, #tpu.memory_space<vmem>>, vector<8x1xf32>
    %217 = vector.broadcast %216 : vector<8x1xf32> to vector<8x64xf32>
    %218 = arith.addf %215, %217 : vector<8x64xf32>
    %cst_213 = arith.constant 0.000000e+00 : f32
    %219 = vector.broadcast %cst_213 : f32 to vector<8x64xf32>
    %220 = arith.maximumf %218, %219 : vector<8x64xf32>
    %221 = arith.truncf %220 : vector<8x64xf32> to vector<8x64xbf16>
    %c0_214 = arith.constant 0 : index
    %c0_215 = arith.constant 0 : index
    %222 = vector.load %arg5[%c0_214, %c0_215] : memref<3x8xbf16, #tpu.memory_space<vmem>>, vector<3x8xbf16>
    %cst_216 = arith.constant dense<0.000000e+00> : vector<3x64xf32>
    %223 = tpu.matmul %222, %221, %cst_216 {dimension_numbers = #tpu.dot_dimension_numbers<[1], [0], [0], [1], [0, 0, 1, 1], [], []>} : vector<3x8xbf16>, vector<8x64xbf16>, vector<3x64xf32> -> vector<3x64xf32>
    %c0_217 = arith.constant 0 : index
    %c0_218 = arith.constant 0 : index
    %224 = vector.load %arg6[%c0_217, %c0_218] : memref<3x1xf32, #tpu.memory_space<vmem>>, vector<3x1xf32>
    %225 = vector.broadcast %224 : vector<3x1xf32> to vector<3x64xf32>
    %226 = arith.addf %223, %225 : vector<3x64xf32>
    %227 = arith.truncf %226 : vector<3x64xf32> to vector<3x64xbf16>
    %c0_219 = arith.constant 0 : index
    %c0_220 = arith.constant 0 : index
    %c0_221 = arith.constant 0 : index
    %228 = vector.load %arg8[%c0_219, %c0_220, %c0_221] : memref<1x3x64xbf16, #tpu.memory_space<vmem>>, vector<1x3x64xbf16>
    %229 = vector.shape_cast %228 : vector<1x3x64xbf16> to vector<3x64xbf16>
    %230 = vector.shape_cast %227 : vector<3x64xbf16> to vector<1x3x64xbf16>
    tpu.vector_store %arg8[%c0_219, %c0_220, %c0_221], %230 {strides = array<i32>} : memref<1x3x64xbf16, #tpu.memory_space<vmem>>, vector<1x3x64xbf16>,
    %cst_222 = arith.constant 0.000000e+00 : bf16
    %231 = vector.broadcast %cst_222 : bf16 to vector<10x8x10xbf16>
    %c0_223 = arith.constant 0 : index
    %c0_224 = arith.constant 0 : index
    %c0_225 = arith.constant 0 : index
    %c0_226 = arith.constant 0 : index
    %232 = vector.load %arg7[%c0_223, %c0_224, %c0_225, %c0_226] : memref<1x10x8x10xbf16, #tpu.memory_space<vmem>>, vector<1x10x8x10xbf16>
    %233 = vector.shape_cast %232 : vector<1x10x8x10xbf16> to vector<10x8x10xbf16>
    %234 = vector.shape_cast %231 : vector<10x8x10xbf16> to vector<1x10x8x10xbf16>
    tpu.vector_store %arg7[%c0_223, %c0_224, %c0_225, %c0_226], %234 {strides = array<i32>} : memref<1x10x8x10xbf16, #tpu.memory_space<vmem>>, vector<1x10x8x10xbf16>,
    %235 = vector.extract_strided_slice %221 {offsets = [0, 0], sizes = [8, 8], strides = [1, 1]} : vector<8x64xbf16> to vector<8x8xbf16>
    %c0_227 = arith.constant 0 : index
    %c1_228 = arith.constant 1 : index
    %c0_229 = arith.constant 0 : index
    %c1_230 = arith.constant 1 : index
    %236 = vector.load %arg7[%c0_227, %c1_228, %c0_229, %c1_230] : memref<1x10x8x10xbf16, #tpu.memory_space<vmem>>, vector<1x1x8x8xbf16>
    %237 = vector.shape_cast %236 : vector<1x1x8x8xbf16> to vector<8x8xbf16>
    %238 = vector.shape_cast %235 : vector<8x8xbf16> to vector<1x1x8x8xbf16>
    tpu.vector_store %arg7[%c0_227, %c1_228, %c0_229, %c1_230], %238 {strides = array<i32>} : memref<1x10x8x10xbf16, #tpu.memory_space<vmem>>, vector<1x1x8x8xbf16>,
    %239 = vector.extract_strided_slice %221 {offsets = [0, 8], sizes = [8, 8], strides = [1, 1]} : vector<8x64xbf16> to vector<8x8xbf16>
    %c0_231 = arith.constant 0 : index
    %c2_232 = arith.constant 2 : index
    %c0_233 = arith.constant 0 : index
    %c1_234 = arith.constant 1 : index
    %240 = vector.load %arg7[%c0_231, %c2_232, %c0_233, %c1_234] : memref<1x10x8x10xbf16, #tpu.memory_space<vmem>>, vector<1x1x8x8xbf16>
    %241 = vector.shape_cast %240 : vector<1x1x8x8xbf16> to vector<8x8xbf16>
    %242 = vector.shape_cast %239 : vector<8x8xbf16> to vector<1x1x8x8xbf16>
    tpu.vector_store %arg7[%c0_231, %c2_232, %c0_233, %c1_234], %242 {strides = array<i32>} : memref<1x10x8x10xbf16, #tpu.memory_space<vmem>>, vector<1x1x8x8xbf16>,
    %243 = vector.extract_strided_slice %221 {offsets = [0, 16], sizes = [8, 8], strides = [1, 1]} : vector<8x64xbf16> to vector<8x8xbf16>
    %c0_235 = arith.constant 0 : index
    %c3_236 = arith.constant 3 : index
    %c0_237 = arith.constant 0 : index
    %c1_238 = arith.constant 1 : index
    %244 = vector.load %arg7[%c0_235, %c3_236, %c0_237, %c1_238] : memref<1x10x8x10xbf16, #tpu.memory_space<vmem>>, vector<1x1x8x8xbf16>
    %245 = vector.shape_cast %244 : vector<1x1x8x8xbf16> to vector<8x8xbf16>
    %246 = vector.shape_cast %243 : vector<8x8xbf16> to vector<1x1x8x8xbf16>
    tpu.vector_store %arg7[%c0_235, %c3_236, %c0_237, %c1_238], %246 {strides = array<i32>} : memref<1x10x8x10xbf16, #tpu.memory_space<vmem>>, vector<1x1x8x8xbf16>,
    %247 = vector.extract_strided_slice %221 {offsets = [0, 24], sizes = [8, 8], strides = [1, 1]} : vector<8x64xbf16> to vector<8x8xbf16>
    %c0_239 = arith.constant 0 : index
    %c4_240 = arith.constant 4 : index
    %c0_241 = arith.constant 0 : index
    %c1_242 = arith.constant 1 : index
    %248 = vector.load %arg7[%c0_239, %c4_240, %c0_241, %c1_242] : memref<1x10x8x10xbf16, #tpu.memory_space<vmem>>, vector<1x1x8x8xbf16>
    %249 = vector.shape_cast %248 : vector<1x1x8x8xbf16> to vector<8x8xbf16>
    %250 = vector.shape_cast %247 : vector<8x8xbf16> to vector<1x1x8x8xbf16>
    tpu.vector_store %arg7[%c0_239, %c4_240, %c0_241, %c1_242], %250 {strides = array<i32>} : memref<1x10x8x10xbf16, #tpu.memory_space<vmem>>, vector<1x1x8x8xbf16>,
    %251 = vector.extract_strided_slice %221 {offsets = [0, 32], sizes = [8, 8], strides = [1, 1]} : vector<8x64xbf16> to vector<8x8xbf16>
    %c0_243 = arith.constant 0 : index
    %c5_244 = arith.constant 5 : index
    %c0_245 = arith.constant 0 : index
    %c1_246 = arith.constant 1 : index
    %252 = vector.load %arg7[%c0_243, %c5_244, %c0_245, %c1_246] : memref<1x10x8x10xbf16, #tpu.memory_space<vmem>>, vector<1x1x8x8xbf16>
    %253 = vector.shape_cast %252 : vector<1x1x8x8xbf16> to vector<8x8xbf16>
    %254 = vector.shape_cast %251 : vector<8x8xbf16> to vector<1x1x8x8xbf16>
    tpu.vector_store %arg7[%c0_243, %c5_244, %c0_245, %c1_246], %254 {strides = array<i32>} : memref<1x10x8x10xbf16, #tpu.memory_space<vmem>>, vector<1x1x8x8xbf16>,
    %255 = vector.extract_strided_slice %221 {offsets = [0, 40], sizes = [8, 8], strides = [1, 1]} : vector<8x64xbf16> to vector<8x8xbf16>
    %c0_247 = arith.constant 0 : index
    %c6_248 = arith.constant 6 : index
    %c0_249 = arith.constant 0 : index
    %c1_250 = arith.constant 1 : index
    %256 = vector.load %arg7[%c0_247, %c6_248, %c0_249, %c1_250] : memref<1x10x8x10xbf16, #tpu.memory_space<vmem>>, vector<1x1x8x8xbf16>
    %257 = vector.shape_cast %256 : vector<1x1x8x8xbf16> to vector<8x8xbf16>
    %258 = vector.shape_cast %255 : vector<8x8xbf16> to vector<1x1x8x8xbf16>
    tpu.vector_store %arg7[%c0_247, %c6_248, %c0_249, %c1_250], %258 {strides = array<i32>} : memref<1x10x8x10xbf16, #tpu.memory_space<vmem>>, vector<1x1x8x8xbf16>,
    %259 = vector.extract_strided_slice %221 {offsets = [0, 48], sizes = [8, 8], strides = [1, 1]} : vector<8x64xbf16> to vector<8x8xbf16>
    %c0_251 = arith.constant 0 : index
    %c7_252 = arith.constant 7 : index
    %c0_253 = arith.constant 0 : index
    %c1_254 = arith.constant 1 : index
    %260 = vector.load %arg7[%c0_251, %c7_252, %c0_253, %c1_254] : memref<1x10x8x10xbf16, #tpu.memory_space<vmem>>, vector<1x1x8x8xbf16>
    %261 = vector.shape_cast %260 : vector<1x1x8x8xbf16> to vector<8x8xbf16>
    %262 = vector.shape_cast %259 : vector<8x8xbf16> to vector<1x1x8x8xbf16>
    tpu.vector_store %arg7[%c0_251, %c7_252, %c0_253, %c1_254], %262 {strides = array<i32>} : memref<1x10x8x10xbf16, #tpu.memory_space<vmem>>, vector<1x1x8x8xbf16>,
    %263 = vector.extract_strided_slice %221 {offsets = [0, 56], sizes = [8, 8], strides = [1, 1]} : vector<8x64xbf16> to vector<8x8xbf16>
    %c0_255 = arith.constant 0 : index
    %c8_256 = arith.constant 8 : index
    %c0_257 = arith.constant 0 : index
    %c1_258 = arith.constant 1 : index
    %264 = vector.load %arg7[%c0_255, %c8_256, %c0_257, %c1_258] : memref<1x10x8x10xbf16, #tpu.memory_space<vmem>>, vector<1x1x8x8xbf16>
    %265 = vector.shape_cast %264 : vector<1x1x8x8xbf16> to vector<8x8xbf16>
    %266 = vector.shape_cast %263 : vector<8x8xbf16> to vector<1x1x8x8xbf16>
    tpu.vector_store %arg7[%c0_255, %c8_256, %c0_257, %c1_258], %266 {strides = array<i32>} : memref<1x10x8x10xbf16, #tpu.memory_space<vmem>>, vector<1x1x8x8xbf16>,
    return
  }
  func.func @transform_0(%arg0: i32) -> (i32, i32, i32, i32) {
    %c0_i32 = arith.constant 0 : i32
    %c0_i32_0 = arith.constant 0 : i32
    %c0_i32_1 = arith.constant 0 : i32
    %c0_i32_2 = arith.constant 0 : i32
    return %arg0, %c0_i32, %c0_i32_0, %c0_i32_1 : i32, i32, i32, i32
  }
  func.func @transform_1(%arg0: i32) -> (i32, i32) {
    %c0_i32 = arith.constant 0 : i32
    %c0_i32_0 = arith.constant 0 : i32
    %c0_i32_1 = arith.constant 0 : i32
    return %c0_i32, %c0_i32_0 : i32, i32
  }
  func.func @transform_2(%arg0: i32) -> (i32, i32) {
    %c0_i32 = arith.constant 0 : i32
    %c0_i32_0 = arith.constant 0 : i32
    %c0_i32_1 = arith.constant 0 : i32
    return %c0_i32, %c0_i32_0 : i32, i32
  }
  func.func @transform_3(%arg0: i32) -> (i32, i32) {
    %c0_i32 = arith.constant 0 : i32
    %c0_i32_0 = arith.constant 0 : i32
    %c0_i32_1 = arith.constant 0 : i32
    return %c0_i32, %c0_i32_0 : i32, i32
  }
  func.func @transform_4(%arg0: i32) -> (i32, i32) {
    %c0_i32 = arith.constant 0 : i32
    %c0_i32_0 = arith.constant 0 : i32
    %c0_i32_1 = arith.constant 0 : i32
    return %c0_i32, %c0_i32_0 : i32, i32
  }
  func.func @transform_5(%arg0: i32) -> (i32, i32) {
    %c0_i32 = arith.constant 0 : i32
    %c0_i32_0 = arith.constant 0 : i32
    %c0_i32_1 = arith.constant 0 : i32
    return %c0_i32, %c0_i32_0 : i32, i32
  }
  func.func @transform_6(%arg0: i32) -> (i32, i32, i32, i32) {
    %c0_i32 = arith.constant 0 : i32
    %c0_i32_0 = arith.constant 0 : i32
    %c0_i32_1 = arith.constant 0 : i32
    %c0_i32_2 = arith.constant 0 : i32
    return %arg0, %c0_i32, %c0_i32_0, %c0_i32_1 : i32, i32, i32, i32
  }
  func.func @transform_7(%arg0: i32) -> (i32, i32, i32) {
    %c0_i32 = arith.constant 0 : i32
    %c0_i32_0 = arith.constant 0 : i32
    %c0_i32_1 = arith.constant 0 : i32
    return %arg0, %c0_i32, %c0_i32_0 : i32, i32, i32
  }
}

module attributes {stable_mosaic.version = 11 : i64} {
  func.func @_bilinear_kernel(%arg0: i32, %arg1: memref<16x8xbf16, #tpu.memory_space<vmem>>, %arg2: memref<6x8x8xbf16, #tpu.memory_space<vmem>>, %arg3: memref<8x16xbf16, #tpu.memory_space<vmem>>, %arg4: memref<6x16x16xf32, #tpu.memory_space<vmem>>) attributes {dimension_semantics = [#tpu.dimension_semantics<parallel>], iteration_bounds = array<i64: 1>, scalar_prefetch = 0 : i64, scratch_operands = 0 : i64, tpu.core_type = #tpu.core_type<tc>, window_params = [{pipeline_mode = #tpu.pipeline_mode<synchronous>, transform_indices = @transform_0, window_bounds = array<i64: 16, 8>}, {transform_indices = @transform_1, window_bounds = array<i64: 6, 8, 8>}, {pipeline_mode = #tpu.pipeline_mode<synchronous>, transform_indices = @transform_2, window_bounds = array<i64: 8, 16>}, {transform_indices = @transform_3, window_bounds = array<i64: 6, 16, 16>}]} {
    %c0 = arith.constant 0 : index
    %c0_0 = arith.constant 0 : index
    %0 = vector.load %arg1[%c0, %c0_0] : memref<16x8xbf16, #tpu.memory_space<vmem>>, vector<16x8xbf16>
    %c0_1 = arith.constant 0 : index
    %c0_2 = arith.constant 0 : index
    %1 = vector.load %arg3[%c0_1, %c0_2] : memref<8x16xbf16, #tpu.memory_space<vmem>>, vector<8x16xbf16>
    %c0_3 = arith.constant 0 : index
    %c0_4 = arith.constant 0 : index
    %c0_5 = arith.constant 0 : index
    %2 = vector.load %arg2[%c0_3, %c0_4, %c0_5] : memref<6x8x8xbf16, #tpu.memory_space<vmem>>, vector<1x8x8xbf16>
    %3 = vector.shape_cast %2 : vector<1x8x8xbf16> to vector<8x8xbf16>
    %cst = arith.constant dense<0.000000e+00> : vector<16x8xf32>
    %4 = tpu.matmul %0, %3, %cst {dimension_numbers = #tpu.dot_dimension_numbers<[1], [0], [0], [1], [0, 0, 1, 1], [], []>} : vector<16x8xbf16>, vector<8x8xbf16>, vector<16x8xf32> -> vector<16x8xf32>
    %5 = arith.truncf %4 : vector<16x8xf32> to vector<16x8xbf16>
    %c1 = arith.constant 1 : index
    %c0_6 = arith.constant 0 : index
    %c0_7 = arith.constant 0 : index
    %6 = vector.load %arg2[%c1, %c0_6, %c0_7] : memref<6x8x8xbf16, #tpu.memory_space<vmem>>, vector<1x8x8xbf16>
    %7 = vector.shape_cast %6 : vector<1x8x8xbf16> to vector<8x8xbf16>
    %cst_8 = arith.constant dense<0.000000e+00> : vector<16x8xf32>
    %8 = tpu.matmul %0, %7, %cst_8 {dimension_numbers = #tpu.dot_dimension_numbers<[1], [0], [0], [1], [0, 0, 1, 1], [], []>} : vector<16x8xbf16>, vector<8x8xbf16>, vector<16x8xf32> -> vector<16x8xf32>
    %9 = arith.truncf %8 : vector<16x8xf32> to vector<16x8xbf16>
    %c2 = arith.constant 2 : index
    %c0_9 = arith.constant 0 : index
    %c0_10 = arith.constant 0 : index
    %10 = vector.load %arg2[%c2, %c0_9, %c0_10] : memref<6x8x8xbf16, #tpu.memory_space<vmem>>, vector<1x8x8xbf16>
    %11 = vector.shape_cast %10 : vector<1x8x8xbf16> to vector<8x8xbf16>
    %cst_11 = arith.constant dense<0.000000e+00> : vector<16x8xf32>
    %12 = tpu.matmul %0, %11, %cst_11 {dimension_numbers = #tpu.dot_dimension_numbers<[1], [0], [0], [1], [0, 0, 1, 1], [], []>} : vector<16x8xbf16>, vector<8x8xbf16>, vector<16x8xf32> -> vector<16x8xf32>
    %13 = arith.truncf %12 : vector<16x8xf32> to vector<16x8xbf16>
    %c3 = arith.constant 3 : index
    %c0_12 = arith.constant 0 : index
    %c0_13 = arith.constant 0 : index
    %14 = vector.load %arg2[%c3, %c0_12, %c0_13] : memref<6x8x8xbf16, #tpu.memory_space<vmem>>, vector<1x8x8xbf16>
    %15 = vector.shape_cast %14 : vector<1x8x8xbf16> to vector<8x8xbf16>
    %cst_14 = arith.constant dense<0.000000e+00> : vector<16x8xf32>
    %16 = tpu.matmul %0, %15, %cst_14 {dimension_numbers = #tpu.dot_dimension_numbers<[1], [0], [0], [1], [0, 0, 1, 1], [], []>} : vector<16x8xbf16>, vector<8x8xbf16>, vector<16x8xf32> -> vector<16x8xf32>
    %17 = arith.truncf %16 : vector<16x8xf32> to vector<16x8xbf16>
    %c4 = arith.constant 4 : index
    %c0_15 = arith.constant 0 : index
    %c0_16 = arith.constant 0 : index
    %18 = vector.load %arg2[%c4, %c0_15, %c0_16] : memref<6x8x8xbf16, #tpu.memory_space<vmem>>, vector<1x8x8xbf16>
    %19 = vector.shape_cast %18 : vector<1x8x8xbf16> to vector<8x8xbf16>
    %cst_17 = arith.constant dense<0.000000e+00> : vector<16x8xf32>
    %20 = tpu.matmul %0, %19, %cst_17 {dimension_numbers = #tpu.dot_dimension_numbers<[1], [0], [0], [1], [0, 0, 1, 1], [], []>} : vector<16x8xbf16>, vector<8x8xbf16>, vector<16x8xf32> -> vector<16x8xf32>
    %21 = arith.truncf %20 : vector<16x8xf32> to vector<16x8xbf16>
    %c5 = arith.constant 5 : index
    %c0_18 = arith.constant 0 : index
    %c0_19 = arith.constant 0 : index
    %22 = vector.load %arg2[%c5, %c0_18, %c0_19] : memref<6x8x8xbf16, #tpu.memory_space<vmem>>, vector<1x8x8xbf16>
    %23 = vector.shape_cast %22 : vector<1x8x8xbf16> to vector<8x8xbf16>
    %cst_20 = arith.constant dense<0.000000e+00> : vector<16x8xf32>
    %24 = tpu.matmul %0, %23, %cst_20 {dimension_numbers = #tpu.dot_dimension_numbers<[1], [0], [0], [1], [0, 0, 1, 1], [], []>} : vector<16x8xbf16>, vector<8x8xbf16>, vector<16x8xf32> -> vector<16x8xf32>
    %25 = arith.truncf %24 : vector<16x8xf32> to vector<16x8xbf16>
    %26 = tpu.concatenate %5, %9, %13, %17, %21, %25 in 0 : vector<16x8xbf16>, vector<16x8xbf16>, vector<16x8xbf16>, vector<16x8xbf16>, vector<16x8xbf16>, vector<16x8xbf16> -> vector<96x8xbf16>
    %cst_21 = arith.constant dense<0.000000e+00> : vector<96x16xf32>
    %27 = tpu.matmul %26, %1, %cst_21 {dimension_numbers = #tpu.dot_dimension_numbers<[1], [0], [0], [1], [0, 0, 1, 1], [], []>} : vector<96x8xbf16>, vector<8x16xbf16>, vector<96x16xf32> -> vector<96x16xf32>
    %28 = vector.extract_strided_slice %27 {offsets = [0, 0], sizes = [16, 16], strides = [1, 1]} : vector<96x16xf32> to vector<16x16xf32>
    %c0_22 = arith.constant 0 : index
    %c0_23 = arith.constant 0 : index
    %c0_24 = arith.constant 0 : index
    %29 = vector.load %arg4[%c0_22, %c0_23, %c0_24] : memref<6x16x16xf32, #tpu.memory_space<vmem>>, vector<1x16x16xf32>
    %30 = vector.shape_cast %29 : vector<1x16x16xf32> to vector<16x16xf32>
    %31 = vector.shape_cast %28 : vector<16x16xf32> to vector<1x16x16xf32>
    tpu.vector_store %arg4[%c0_22, %c0_23, %c0_24], %31 {strides = array<i32>} : memref<6x16x16xf32, #tpu.memory_space<vmem>>, vector<1x16x16xf32>,
    %32 = vector.extract_strided_slice %27 {offsets = [16, 0], sizes = [16, 16], strides = [1, 1]} : vector<96x16xf32> to vector<16x16xf32>
    %c1_25 = arith.constant 1 : index
    %c0_26 = arith.constant 0 : index
    %c0_27 = arith.constant 0 : index
    %33 = vector.load %arg4[%c1_25, %c0_26, %c0_27] : memref<6x16x16xf32, #tpu.memory_space<vmem>>, vector<1x16x16xf32>
    %34 = vector.shape_cast %33 : vector<1x16x16xf32> to vector<16x16xf32>
    %35 = vector.shape_cast %32 : vector<16x16xf32> to vector<1x16x16xf32>
    tpu.vector_store %arg4[%c1_25, %c0_26, %c0_27], %35 {strides = array<i32>} : memref<6x16x16xf32, #tpu.memory_space<vmem>>, vector<1x16x16xf32>,
    %36 = vector.extract_strided_slice %27 {offsets = [32, 0], sizes = [16, 16], strides = [1, 1]} : vector<96x16xf32> to vector<16x16xf32>
    %c2_28 = arith.constant 2 : index
    %c0_29 = arith.constant 0 : index
    %c0_30 = arith.constant 0 : index
    %37 = vector.load %arg4[%c2_28, %c0_29, %c0_30] : memref<6x16x16xf32, #tpu.memory_space<vmem>>, vector<1x16x16xf32>
    %38 = vector.shape_cast %37 : vector<1x16x16xf32> to vector<16x16xf32>
    %39 = vector.shape_cast %36 : vector<16x16xf32> to vector<1x16x16xf32>
    tpu.vector_store %arg4[%c2_28, %c0_29, %c0_30], %39 {strides = array<i32>} : memref<6x16x16xf32, #tpu.memory_space<vmem>>, vector<1x16x16xf32>,
    %40 = vector.extract_strided_slice %27 {offsets = [48, 0], sizes = [16, 16], strides = [1, 1]} : vector<96x16xf32> to vector<16x16xf32>
    %c3_31 = arith.constant 3 : index
    %c0_32 = arith.constant 0 : index
    %c0_33 = arith.constant 0 : index
    %41 = vector.load %arg4[%c3_31, %c0_32, %c0_33] : memref<6x16x16xf32, #tpu.memory_space<vmem>>, vector<1x16x16xf32>
    %42 = vector.shape_cast %41 : vector<1x16x16xf32> to vector<16x16xf32>
    %43 = vector.shape_cast %40 : vector<16x16xf32> to vector<1x16x16xf32>
    tpu.vector_store %arg4[%c3_31, %c0_32, %c0_33], %43 {strides = array<i32>} : memref<6x16x16xf32, #tpu.memory_space<vmem>>, vector<1x16x16xf32>,
    %44 = vector.extract_strided_slice %27 {offsets = [64, 0], sizes = [16, 16], strides = [1, 1]} : vector<96x16xf32> to vector<16x16xf32>
    %c4_34 = arith.constant 4 : index
    %c0_35 = arith.constant 0 : index
    %c0_36 = arith.constant 0 : index
    %45 = vector.load %arg4[%c4_34, %c0_35, %c0_36] : memref<6x16x16xf32, #tpu.memory_space<vmem>>, vector<1x16x16xf32>
    %46 = vector.shape_cast %45 : vector<1x16x16xf32> to vector<16x16xf32>
    %47 = vector.shape_cast %44 : vector<16x16xf32> to vector<1x16x16xf32>
    tpu.vector_store %arg4[%c4_34, %c0_35, %c0_36], %47 {strides = array<i32>} : memref<6x16x16xf32, #tpu.memory_space<vmem>>, vector<1x16x16xf32>,
    %48 = vector.extract_strided_slice %27 {offsets = [80, 0], sizes = [16, 16], strides = [1, 1]} : vector<96x16xf32> to vector<16x16xf32>
    %c5_37 = arith.constant 5 : index
    %c0_38 = arith.constant 0 : index
    %c0_39 = arith.constant 0 : index
    %49 = vector.load %arg4[%c5_37, %c0_38, %c0_39] : memref<6x16x16xf32, #tpu.memory_space<vmem>>, vector<1x16x16xf32>
    %50 = vector.shape_cast %49 : vector<1x16x16xf32> to vector<16x16xf32>
    %51 = vector.shape_cast %48 : vector<16x16xf32> to vector<1x16x16xf32>
    tpu.vector_store %arg4[%c5_37, %c0_38, %c0_39], %51 {strides = array<i32>} : memref<6x16x16xf32, #tpu.memory_space<vmem>>, vector<1x16x16xf32>,
    return
  }
  func.func @transform_0(%arg0: i32) -> (i32, i32) {
    %c0_i32 = arith.constant 0 : i32
    %c0_i32_0 = arith.constant 0 : i32
    %c0_i32_1 = arith.constant 0 : i32
    return %c0_i32, %c0_i32_0 : i32, i32
  }
  func.func @transform_1(%arg0: i32) -> (i32, i32, i32) {
    %c0_i32 = arith.constant 0 : i32
    %c0_i32_0 = arith.constant 0 : i32
    %c0_i32_1 = arith.constant 0 : i32
    return %arg0, %c0_i32, %c0_i32_0 : i32, i32, i32
  }
  func.func @transform_2(%arg0: i32) -> (i32, i32) {
    %c0_i32 = arith.constant 0 : i32
    %c0_i32_0 = arith.constant 0 : i32
    %c0_i32_1 = arith.constant 0 : i32
    return %c0_i32, %c0_i32_0 : i32, i32
  }
  func.func @transform_3(%arg0: i32) -> (i32, i32, i32) {
    %c0_i32 = arith.constant 0 : i32
    %c0_i32_0 = arith.constant 0 : i32
    %c0_i32_1 = arith.constant 0 : i32
    return %arg0, %c0_i32, %c0_i32_0 : i32, i32, i32
  }
}

module attributes {stable_mosaic.version = 11 : i64} {
  func.func @_bilinear_kernel(%arg0: i32, %arg1: memref<16x4xbf16, #tpu.memory_space<vmem>>, %arg2: memref<6x4x4xbf16, #tpu.memory_space<vmem>>, %arg3: memref<4x16xbf16, #tpu.memory_space<vmem>>, %arg4: memref<6x16x16xf32, #tpu.memory_space<vmem>>) attributes {dimension_semantics = [#tpu.dimension_semantics<parallel>], iteration_bounds = array<i64: 1>, scalar_prefetch = 0 : i64, scratch_operands = 0 : i64, tpu.core_type = #tpu.core_type<tc>, window_params = [{pipeline_mode = #tpu.pipeline_mode<synchronous>, transform_indices = @transform_0, window_bounds = array<i64: 16, 4>}, {transform_indices = @transform_1, window_bounds = array<i64: 6, 4, 4>}, {pipeline_mode = #tpu.pipeline_mode<synchronous>, transform_indices = @transform_2, window_bounds = array<i64: 4, 16>}, {transform_indices = @transform_3, window_bounds = array<i64: 6, 16, 16>}]} {
    %c0 = arith.constant 0 : index
    %c0_0 = arith.constant 0 : index
    %0 = vector.load %arg1[%c0, %c0_0] : memref<16x4xbf16, #tpu.memory_space<vmem>>, vector<16x4xbf16>
    %c0_1 = arith.constant 0 : index
    %c0_2 = arith.constant 0 : index
    %1 = vector.load %arg3[%c0_1, %c0_2] : memref<4x16xbf16, #tpu.memory_space<vmem>>, vector<4x16xbf16>
    %c0_3 = arith.constant 0 : index
    %c0_4 = arith.constant 0 : index
    %c0_5 = arith.constant 0 : index
    %2 = vector.load %arg2[%c0_3, %c0_4, %c0_5] : memref<6x4x4xbf16, #tpu.memory_space<vmem>>, vector<1x4x4xbf16>
    %3 = vector.shape_cast %2 : vector<1x4x4xbf16> to vector<4x4xbf16>
    %cst = arith.constant dense<0.000000e+00> : vector<16x4xf32>
    %4 = tpu.matmul %0, %3, %cst {dimension_numbers = #tpu.dot_dimension_numbers<[1], [0], [0], [1], [0, 0, 1, 1], [], []>} : vector<16x4xbf16>, vector<4x4xbf16>, vector<16x4xf32> -> vector<16x4xf32>
    %5 = arith.truncf %4 : vector<16x4xf32> to vector<16x4xbf16>
    %c1 = arith.constant 1 : index
    %c0_6 = arith.constant 0 : index
    %c0_7 = arith.constant 0 : index
    %6 = vector.load %arg2[%c1, %c0_6, %c0_7] : memref<6x4x4xbf16, #tpu.memory_space<vmem>>, vector<1x4x4xbf16>
    %7 = vector.shape_cast %6 : vector<1x4x4xbf16> to vector<4x4xbf16>
    %cst_8 = arith.constant dense<0.000000e+00> : vector<16x4xf32>
    %8 = tpu.matmul %0, %7, %cst_8 {dimension_numbers = #tpu.dot_dimension_numbers<[1], [0], [0], [1], [0, 0, 1, 1], [], []>} : vector<16x4xbf16>, vector<4x4xbf16>, vector<16x4xf32> -> vector<16x4xf32>
    %9 = arith.truncf %8 : vector<16x4xf32> to vector<16x4xbf16>
    %c2 = arith.constant 2 : index
    %c0_9 = arith.constant 0 : index
    %c0_10 = arith.constant 0 : index
    %10 = vector.load %arg2[%c2, %c0_9, %c0_10] : memref<6x4x4xbf16, #tpu.memory_space<vmem>>, vector<1x4x4xbf16>
    %11 = vector.shape_cast %10 : vector<1x4x4xbf16> to vector<4x4xbf16>
    %cst_11 = arith.constant dense<0.000000e+00> : vector<16x4xf32>
    %12 = tpu.matmul %0, %11, %cst_11 {dimension_numbers = #tpu.dot_dimension_numbers<[1], [0], [0], [1], [0, 0, 1, 1], [], []>} : vector<16x4xbf16>, vector<4x4xbf16>, vector<16x4xf32> -> vector<16x4xf32>
    %13 = arith.truncf %12 : vector<16x4xf32> to vector<16x4xbf16>
    %c3 = arith.constant 3 : index
    %c0_12 = arith.constant 0 : index
    %c0_13 = arith.constant 0 : index
    %14 = vector.load %arg2[%c3, %c0_12, %c0_13] : memref<6x4x4xbf16, #tpu.memory_space<vmem>>, vector<1x4x4xbf16>
    %15 = vector.shape_cast %14 : vector<1x4x4xbf16> to vector<4x4xbf16>
    %cst_14 = arith.constant dense<0.000000e+00> : vector<16x4xf32>
    %16 = tpu.matmul %0, %15, %cst_14 {dimension_numbers = #tpu.dot_dimension_numbers<[1], [0], [0], [1], [0, 0, 1, 1], [], []>} : vector<16x4xbf16>, vector<4x4xbf16>, vector<16x4xf32> -> vector<16x4xf32>
    %17 = arith.truncf %16 : vector<16x4xf32> to vector<16x4xbf16>
    %c4 = arith.constant 4 : index
    %c0_15 = arith.constant 0 : index
    %c0_16 = arith.constant 0 : index
    %18 = vector.load %arg2[%c4, %c0_15, %c0_16] : memref<6x4x4xbf16, #tpu.memory_space<vmem>>, vector<1x4x4xbf16>
    %19 = vector.shape_cast %18 : vector<1x4x4xbf16> to vector<4x4xbf16>
    %cst_17 = arith.constant dense<0.000000e+00> : vector<16x4xf32>
    %20 = tpu.matmul %0, %19, %cst_17 {dimension_numbers = #tpu.dot_dimension_numbers<[1], [0], [0], [1], [0, 0, 1, 1], [], []>} : vector<16x4xbf16>, vector<4x4xbf16>, vector<16x4xf32> -> vector<16x4xf32>
    %21 = arith.truncf %20 : vector<16x4xf32> to vector<16x4xbf16>
    %c5 = arith.constant 5 : index
    %c0_18 = arith.constant 0 : index
    %c0_19 = arith.constant 0 : index
    %22 = vector.load %arg2[%c5, %c0_18, %c0_19] : memref<6x4x4xbf16, #tpu.memory_space<vmem>>, vector<1x4x4xbf16>
    %23 = vector.shape_cast %22 : vector<1x4x4xbf16> to vector<4x4xbf16>
    %cst_20 = arith.constant dense<0.000000e+00> : vector<16x4xf32>
    %24 = tpu.matmul %0, %23, %cst_20 {dimension_numbers = #tpu.dot_dimension_numbers<[1], [0], [0], [1], [0, 0, 1, 1], [], []>} : vector<16x4xbf16>, vector<4x4xbf16>, vector<16x4xf32> -> vector<16x4xf32>
    %25 = arith.truncf %24 : vector<16x4xf32> to vector<16x4xbf16>
    %26 = tpu.concatenate %5, %9, %13, %17, %21, %25 in 0 : vector<16x4xbf16>, vector<16x4xbf16>, vector<16x4xbf16>, vector<16x4xbf16>, vector<16x4xbf16>, vector<16x4xbf16> -> vector<96x4xbf16>
    %cst_21 = arith.constant dense<0.000000e+00> : vector<96x16xf32>
    %27 = tpu.matmul %26, %1, %cst_21 {dimension_numbers = #tpu.dot_dimension_numbers<[1], [0], [0], [1], [0, 0, 1, 1], [], []>} : vector<96x4xbf16>, vector<4x16xbf16>, vector<96x16xf32> -> vector<96x16xf32>
    %28 = vector.extract_strided_slice %27 {offsets = [0, 0], sizes = [16, 16], strides = [1, 1]} : vector<96x16xf32> to vector<16x16xf32>
    %c0_22 = arith.constant 0 : index
    %c0_23 = arith.constant 0 : index
    %c0_24 = arith.constant 0 : index
    %29 = vector.load %arg4[%c0_22, %c0_23, %c0_24] : memref<6x16x16xf32, #tpu.memory_space<vmem>>, vector<1x16x16xf32>
    %30 = vector.shape_cast %29 : vector<1x16x16xf32> to vector<16x16xf32>
    %31 = vector.shape_cast %28 : vector<16x16xf32> to vector<1x16x16xf32>
    tpu.vector_store %arg4[%c0_22, %c0_23, %c0_24], %31 {strides = array<i32>} : memref<6x16x16xf32, #tpu.memory_space<vmem>>, vector<1x16x16xf32>,
    %32 = vector.extract_strided_slice %27 {offsets = [16, 0], sizes = [16, 16], strides = [1, 1]} : vector<96x16xf32> to vector<16x16xf32>
    %c1_25 = arith.constant 1 : index
    %c0_26 = arith.constant 0 : index
    %c0_27 = arith.constant 0 : index
    %33 = vector.load %arg4[%c1_25, %c0_26, %c0_27] : memref<6x16x16xf32, #tpu.memory_space<vmem>>, vector<1x16x16xf32>
    %34 = vector.shape_cast %33 : vector<1x16x16xf32> to vector<16x16xf32>
    %35 = vector.shape_cast %32 : vector<16x16xf32> to vector<1x16x16xf32>
    tpu.vector_store %arg4[%c1_25, %c0_26, %c0_27], %35 {strides = array<i32>} : memref<6x16x16xf32, #tpu.memory_space<vmem>>, vector<1x16x16xf32>,
    %36 = vector.extract_strided_slice %27 {offsets = [32, 0], sizes = [16, 16], strides = [1, 1]} : vector<96x16xf32> to vector<16x16xf32>
    %c2_28 = arith.constant 2 : index
    %c0_29 = arith.constant 0 : index
    %c0_30 = arith.constant 0 : index
    %37 = vector.load %arg4[%c2_28, %c0_29, %c0_30] : memref<6x16x16xf32, #tpu.memory_space<vmem>>, vector<1x16x16xf32>
    %38 = vector.shape_cast %37 : vector<1x16x16xf32> to vector<16x16xf32>
    %39 = vector.shape_cast %36 : vector<16x16xf32> to vector<1x16x16xf32>
    tpu.vector_store %arg4[%c2_28, %c0_29, %c0_30], %39 {strides = array<i32>} : memref<6x16x16xf32, #tpu.memory_space<vmem>>, vector<1x16x16xf32>,
    %40 = vector.extract_strided_slice %27 {offsets = [48, 0], sizes = [16, 16], strides = [1, 1]} : vector<96x16xf32> to vector<16x16xf32>
    %c3_31 = arith.constant 3 : index
    %c0_32 = arith.constant 0 : index
    %c0_33 = arith.constant 0 : index
    %41 = vector.load %arg4[%c3_31, %c0_32, %c0_33] : memref<6x16x16xf32, #tpu.memory_space<vmem>>, vector<1x16x16xf32>
    %42 = vector.shape_cast %41 : vector<1x16x16xf32> to vector<16x16xf32>
    %43 = vector.shape_cast %40 : vector<16x16xf32> to vector<1x16x16xf32>
    tpu.vector_store %arg4[%c3_31, %c0_32, %c0_33], %43 {strides = array<i32>} : memref<6x16x16xf32, #tpu.memory_space<vmem>>, vector<1x16x16xf32>,
    %44 = vector.extract_strided_slice %27 {offsets = [64, 0], sizes = [16, 16], strides = [1, 1]} : vector<96x16xf32> to vector<16x16xf32>
    %c4_34 = arith.constant 4 : index
    %c0_35 = arith.constant 0 : index
    %c0_36 = arith.constant 0 : index
    %45 = vector.load %arg4[%c4_34, %c0_35, %c0_36] : memref<6x16x16xf32, #tpu.memory_space<vmem>>, vector<1x16x16xf32>
    %46 = vector.shape_cast %45 : vector<1x16x16xf32> to vector<16x16xf32>
    %47 = vector.shape_cast %44 : vector<16x16xf32> to vector<1x16x16xf32>
    tpu.vector_store %arg4[%c4_34, %c0_35, %c0_36], %47 {strides = array<i32>} : memref<6x16x16xf32, #tpu.memory_space<vmem>>, vector<1x16x16xf32>,
    %48 = vector.extract_strided_slice %27 {offsets = [80, 0], sizes = [16, 16], strides = [1, 1]} : vector<96x16xf32> to vector<16x16xf32>
    %c5_37 = arith.constant 5 : index
    %c0_38 = arith.constant 0 : index
    %c0_39 = arith.constant 0 : index
    %49 = vector.load %arg4[%c5_37, %c0_38, %c0_39] : memref<6x16x16xf32, #tpu.memory_space<vmem>>, vector<1x16x16xf32>
    %50 = vector.shape_cast %49 : vector<1x16x16xf32> to vector<16x16xf32>
    %51 = vector.shape_cast %48 : vector<16x16xf32> to vector<1x16x16xf32>
    tpu.vector_store %arg4[%c5_37, %c0_38, %c0_39], %51 {strides = array<i32>} : memref<6x16x16xf32, #tpu.memory_space<vmem>>, vector<1x16x16xf32>,
    return
  }
  func.func @transform_0(%arg0: i32) -> (i32, i32) {
    %c0_i32 = arith.constant 0 : i32
    %c0_i32_0 = arith.constant 0 : i32
    %c0_i32_1 = arith.constant 0 : i32
    return %c0_i32, %c0_i32_0 : i32, i32
  }
  func.func @transform_1(%arg0: i32) -> (i32, i32, i32) {
    %c0_i32 = arith.constant 0 : i32
    %c0_i32_0 = arith.constant 0 : i32
    %c0_i32_1 = arith.constant 0 : i32
    return %arg0, %c0_i32, %c0_i32_0 : i32, i32, i32
  }
  func.func @transform_2(%arg0: i32) -> (i32, i32) {
    %c0_i32 = arith.constant 0 : i32
    %c0_i32_0 = arith.constant 0 : i32
    %c0_i32_1 = arith.constant 0 : i32
    return %c0_i32, %c0_i32_0 : i32, i32
  }
  func.func @transform_3(%arg0: i32) -> (i32, i32, i32) {
    %c0_i32 = arith.constant 0 : i32
    %c0_i32_0 = arith.constant 0 : i32
    %c0_i32_1 = arith.constant 0 : i32
    return %arg0, %c0_i32, %c0_i32_0 : i32, i32, i32
  }
}

</mosaic_0001>

<llo_original>
// kernel: simple_segmentation_forward.6
$region0: #{simple_segmentation_forward.6}
  #allocation0 [shape = 'u32[]', space=smem, size = 0x4, offset = 0x4, fixed_abs, tag = 'smem constant byte address 0x4 - core index']
  #allocation1 [shape = 'u32[144,128]{1,0:T(1,128)}', space=vmem, size = 0x12000, scoped, tag = 'internal scratch']
  %s0 = inlined_call_operand.vmem [shape: bf16[16,4], index: 0, kind: input, shape index: {}]
  %s1 = inlined_call_operand.vmem [shape: bf16[6,4,4], index: 1, kind: input, shape index: {}]
  %s2 = inlined_call_operand.vmem [shape: bf16[4,16], index: 2, kind: input, shape index: {}]
  %s3 = inlined_call_operand.hbm [shape: f32[6,16,16], index: 3, kind: output, shape index: {}]
  %s4 = sld [smem:[#allocation0]]
  $region22: #{simple_segmentation_forward.6} parent=0
    _
  %s6 = ssub.s32 1, %s4
  %s7 = scalar_select 0, %s6, %s4
  $region1: #{simple_segmentation_forward.6} parent=0
    #allocation2 [shape = 'u8[49152]{0}', space=vmem, size = 0xc000, scoped, tag = 'output window, operand 0, single buffered']
    #allocation3 [shape = 's32[1]{0}', space=sflag, size = 0x4, scoped, tag = 'scoped memory for simple_segmentation_forward.6']
    %8 = vsyncpa [#allocation3], 0
    // Predicated region
    $region2: #{simple_segmentation_forward.6} parent=1 // pred_check
      _
    $region3: #{simple_segmentation_forward.6} parent=1 // pred_check_branch
      %10 = sbr.rel (0) target = $region5
    $region4: #{simple_segmentation_forward.6} parent=1 // pred_region
      _
    $region5: #{simple_segmentation_forward.6} parent=1 // pred_fallthru
      _
    // Predicated region
    $region6: #{simple_segmentation_forward.6} parent=1 // pred_check
      _
    $region7: #{simple_segmentation_forward.6} parent=1 // pred_check_branch
      %12 = sbr.rel (0) target = $region9
    $region8: #{simple_segmentation_forward.6} parent=1 // pred_region
      _
    $region9: #{simple_segmentation_forward.6} parent=1 // pred_fallthru
      _
    // Predicated region
    $region10: #{simple_segmentation_forward.6} parent=1 // pred_check
      _
    $region11: #{simple_segmentation_forward.6} parent=1 // pred_check_branch
      %14 = sbr.rel (0) target = $region13
    $region12: #{simple_segmentation_forward.6} parent=1 // pred_region
      _
    $region13: #{simple_segmentation_forward.6} parent=1 // pred_fallthru
      _
    %v16 = vld [vmem:[%s0] sm:$0xf]
    %v17 = vld [vmem:[%s0 + $0x4] sm:$0xf]
    %v18 = vld [vmem:[%s2] sm:$0x3]
    %v19 = vld [vmem:[%s1] sm:$0x3]
    %v22 = vunpack.c.l.b16 %v16
    %v23 = vunpack.c.l.b16 %v17
    %v24 = vpack.c.b16 %v23, %v22
    %vm25 = vcmask 31744
    %v27 = vsel %vm25, %v24, 0
    %vm29 = vcmask 1041408
    %v31 = vsel %vm29, %v19, 0
    %33 = vmatprep.subr.bf16.mxu0 0
    %34 = vmatpush1.bf16.msra.mxu0 %v31
    %35 = vmatprep.subr.bf16.mxu0 0
    %36 = vmatpush1.bf16.msra.mxu0 0
    %37 = vmatprep.subr.bf16.mxu0 0
    %38 = vmatpush1.bf16.msra.mxu0 0
    %39 = vmatprep.subr.bf16.mxu0 0
    %40 = vmatpush1.bf16.msra.mxu0 0
    %41 = vmatprep.subr.bf16.mxu0 0
    %42 = vmatpush1.bf16.msra.mxu0 0
    %43 = vmatprep.subr.bf16.mxu0 0
    %44 = vmatpush1.bf16.msra.mxu0 0
    %45 = vmatprep.subr.bf16.mxu0 0
    %46 = vmatpush1.bf16.msra.mxu0 0
    %47 = vmatprep.subr.bf16.mxu0 0
    %48 = vmatpush1.bf16.msra.mxu0 0
    %49 = vmatprep.subr.bf16.mxu0 0
    %50 = vmatpush1.bf16.msra.mxu0 0
    %51 = vmatprep.subr.bf16.mxu0 0
    %52 = vmatpush1.bf16.msra.mxu0 0
    %53 = vmatprep.subr.bf16.mxu0 0
    %54 = vmatpush1.bf16.msra.mxu0 0
    %55 = vmatprep.subr.bf16.mxu0 0
    %56 = vmatpush1.bf16.msra.mxu0 0
    %57 = vmatprep.subr.bf16.mxu0 0
    %58 = vmatpush1.bf16.msra.mxu0 0
    %59 = vmatprep.subr.bf16.mxu0 0
    %60 = vmatpush1.bf16.msra.mxu0 0
    %61 = vmatprep.subr.bf16.mxu0 0
    %62 = vmatpush1.bf16.msra.mxu0 0
    %63 = vmatprep.subr.bf16.mxu0 0
    %64 = vmatpush1.bf16.msra.mxu0 0
    %65 = vmatprep.mubr.bf16.mxu0 0
    %66 = vmatmul.mubr.bf16.gmra.mrb[0].mxu0 %v27
    %v67 = vpop.f32.mrb[0].mxu0
    %v68 = vadd.f32 0.0, %v67
    %v69 = vpop.f32.mrb[0].mxu0
    %v70 = vpop.f32.mrb[0].mxu0
    %v71 = vadd.f32 0.0, %v70
    %v72 = vpop.f32.mrb[0].mxu0
    %73 = vdwg.mxu0
    %v74 = vpack.c.bf16 %v71, %v68
    %s75 = scalar_lea.vmem %s1, 2
    %v76 = vld [vmem:[%s75] sm:$0x3]
    %v78 = vsel %vm29, %v76, 0
    %80 = vmatprep.subr.bf16.mxu0 0
    %81 = vmatpush1.bf16.msra.mxu0 %v78
    %82 = vmatprep.subr.bf16.mxu0 0
    %83 = vmatpush1.bf16.msra.mxu0 0
    %84 = vmatprep.subr.bf16.mxu0 0
    %85 = vmatpush1.bf16.msra.mxu0 0
    %86 = vmatprep.subr.bf16.mxu0 0
    %87 = vmatpush1.bf16.msra.mxu0 0
    %88 = vmatprep.subr.bf16.mxu0 0
    %89 = vmatpush1.bf16.msra.mxu0 0
    %90 = vmatprep.subr.bf16.mxu0 0
    %91 = vmatpush1.bf16.msra.mxu0 0
    %92 = vmatprep.subr.bf16.mxu0 0
    %93 = vmatpush1.bf16.msra.mxu0 0
    %94 = vmatprep.subr.bf16.mxu0 0
    %95 = vmatpush1.bf16.msra.mxu0 0
    %96 = vmatprep.subr.bf16.mxu0 0
    %97 = vmatpush1.bf16.msra.mxu0 0
    %98 = vmatprep.subr.bf16.mxu0 0
    %99 = vmatpush1.bf16.msra.mxu0 0
    %100 = vmatprep.subr.bf16.mxu0 0
    %101 = vmatpush1.bf16.msra.mxu0 0
    %102 = vmatprep.subr.bf16.mxu0 0
    %103 = vmatpush1.bf16.msra.mxu0 0
    %104 = vmatprep.subr.bf16.mxu0 0
    %105 = vmatpush1.bf16.msra.mxu0 0
    %106 = vmatprep.subr.bf16.mxu0 0
    %107 = vmatpush1.bf16.msra.mxu0 0
    %108 = vmatprep.subr.bf16.mxu0 0
    %109 = vmatpush1.bf16.msra.mxu0 0
    %110 = vmatprep.subr.bf16.mxu0 0
    %111 = vmatpush1.bf16.msra.mxu0 0
    %112 = vmatprep.mubr.bf16.mxu0 0
    %113 = vmatmul.mubr.bf16.gmra.mrb[0].mxu0 %v27
    %v114 = vpop.f32.mrb[0].mxu0
    %v115 = vadd.f32 0.0, %v114
    %v116 = vpop.f32.mrb[0].mxu0
    %v117 = vpop.f32.mrb[0].mxu0
    %v118 = vadd.f32 0.0, %v117
    %v119 = vpop.f32.mrb[0].mxu0
    %120 = vdwg.mxu0
    %v121 = vpack.c.bf16 %v118, %v115
    %s122 = scalar_lea.vmem %s1, 4
    %v123 = vld [vmem:[%s122] sm:$0x3]
    %v125 = vsel %vm29, %v123, 0
    %127 = vmatprep.subr.bf16.mxu0 0
    %128 = vmatpush1.bf16.msra.mxu0 %v125
    %129 = vmatprep.subr.bf16.mxu0 0
    %130 = vmatpush1.bf16.msra.mxu0 0
    %131 = vmatprep.subr.bf16.mxu0 0
    %132 = vmatpush1.bf16.msra.mxu0 0
    %133 = vmatprep.subr.bf16.mxu0 0
    %134 = vmatpush1.bf16.msra.mxu0 0
    %135 = vmatprep.subr.bf16.mxu0 0
    %136 = vmatpush1.bf16.msra.mxu0 0
    %137 = vmatprep.subr.bf16.mxu0 0
    %138 = vmatpush1.bf16.msra.mxu0 0
    %139 = vmatprep.subr.bf16.mxu0 0
    %140 = vmatpush1.bf16.msra.mxu0 0
    %141 = vmatprep.subr.bf16.mxu0 0
    %142 = vmatpush1.bf16.msra.mxu0 0
    %143 = vmatprep.subr.bf16.mxu0 0
    %144 = vmatpush1.bf16.msra.mxu0 0
    %145 = vmatprep.subr.bf16.mxu0 0
    %146 = vmatpush1.bf16.msra.mxu0 0
    %147 = vmatprep.subr.bf16.mxu0 0
    %148 = vmatpush1.bf16.msra.mxu0 0
    %149 = vmatprep.subr.bf16.mxu0 0
    %150 = vmatpush1.bf16.msra.mxu0 0
    %151 = vmatprep.subr.bf16.mxu0 0
    %152 = vmatpush1.bf16.msra.mxu0 0
    %153 = vmatprep.subr.bf16.mxu0 0
    %154 = vmatpush1.bf16.msra.mxu0 0
    %155 = vmatprep.subr.bf16.mxu0 0
    %156 = vmatpush1.bf16.msra.mxu0 0
    %157 = vmatprep.subr.bf16.mxu0 0
    %158 = vmatpush1.bf16.msra.mxu0 0
    %159 = vmatprep.mubr.bf16.mxu0 0
    %160 = vmatmul.mubr.bf16.gmra.mrb[0].mxu0 %v27
    %v161 = vpop.f32.mrb[0].mxu0
    %v162 = vadd.f32 0.0, %v161
    %v163 = vpop.f32.mrb[0].mxu0
    %v164 = vpop.f32.mrb[0].mxu0
    %v165 = vadd.f32 0.0, %v164
    %v166 = vpop.f32.mrb[0].mxu0
    %167 = vdwg.mxu0
    %v168 = vpack.c.bf16 %v165, %v162
    %s169 = scalar_lea.vmem %s1, 6
    %v170 = vld [vmem:[%s169] sm:$0x3]
    %v172 = vsel %vm29, %v170, 0
    %174 = vmatprep.subr.bf16.mxu0 0
    %175 = vmatpush1.bf16.msra.mxu0 %v172
    %176 = vmatprep.subr.bf16.mxu0 0
    %177 = vmatpush1.bf16.msra.mxu0 0
    %178 = vmatprep.subr.bf16.mxu0 0
    %179 = vmatpush1.bf16.msra.mxu0 0
    %180 = vmatprep.subr.bf16.mxu0 0
    %181 = vmatpush1.bf16.msra.mxu0 0
    %182 = vmatprep.subr.bf16.mxu0 0
    %183 = vmatpush1.bf16.msra.mxu0 0
    %184 = vmatprep.subr.bf16.mxu0 0
    %185 = vmatpush1.bf16.msra.mxu0 0
    %186 = vmatprep.subr.bf16.mxu0 0
    %187 = vmatpush1.bf16.msra.mxu0 0
    %188 = vmatprep.subr.bf16.mxu0 0
    %189 = vmatpush1.bf16.msra.mxu0 0
    %190 = vmatprep.subr.bf16.mxu0 0
    %191 = vmatpush1.bf16.msra.mxu0 0
    %192 = vmatprep.subr.bf16.mxu0 0
    %193 = vmatpush1.bf16.msra.mxu0 0
    %194 = vmatprep.subr.bf16.mxu0 0
    %195 = vmatpush1.bf16.msra.mxu0 0
    %196 = vmatprep.subr.bf16.mxu0 0
    %197 = vmatpush1.bf16.msra.mxu0 0
    %198 = vmatprep.subr.bf16.mxu0 0
    %199 = vmatpush1.bf16.msra.mxu0 0
    %200 = vmatprep.subr.bf16.mxu0 0
    %201 = vmatpush1.bf16.msra.mxu0 0
    %202 = vmatprep.subr.bf16.mxu0 0
    %203 = vmatpush1.bf16.msra.mxu0 0
    %204 = vmatprep.subr.bf16.mxu0 0
    %205 = vmatpush1.bf16.msra.mxu0 0
    %206 = vmatprep.mubr.bf16.mxu0 0
    %207 = vmatmul.mubr.bf16.gmra.mrb[0].mxu0 %v27
    %v208 = vpop.f32.mrb[0].mxu0
    %v209 = vadd.f32 0.0, %v208
    %v210 = vpop.f32.mrb[0].mxu0
    %v211 = vpop.f32.mrb[0].mxu0
    %v212 = vadd.f32 0.0, %v211
    %v213 = vpop.f32.mrb[0].mxu0
    %214 = vdwg.mxu0
    %v215 = vpack.c.bf16 %v212, %v209
    %s216 = scalar_lea.vmem %s1, 8
    %v217 = vld [vmem:[%s216] sm:$0x3]
    %v219 = vsel %vm29, %v217, 0
    %221 = vmatprep.subr.bf16.mxu0 0
    %222 = vmatpush1.bf16.msra.mxu0 %v219
    %223 = vmatprep.subr.bf16.mxu0 0
    %224 = vmatpush1.bf16.msra.mxu0 0
    %225 = vmatprep.subr.bf16.mxu0 0
    %226 = vmatpush1.bf16.msra.mxu0 0
    %227 = vmatprep.subr.bf16.mxu0 0
    %228 = vmatpush1.bf16.msra.mxu0 0
    %229 = vmatprep.subr.bf16.mxu0 0
    %230 = vmatpush1.bf16.msra.mxu0 0
    %231 = vmatprep.subr.bf16.mxu0 0
    %232 = vmatpush1.bf16.msra.mxu0 0
    %233 = vmatprep.subr.bf16.mxu0 0
    %234 = vmatpush1.bf16.msra.mxu0 0
    %235 = vmatprep.subr.bf16.mxu0 0
    %236 = vmatpush1.bf16.msra.mxu0 0
    %237 = vmatprep.subr.bf16.mxu0 0
    %238 = vmatpush1.bf16.msra.mxu0 0
    %239 = vmatprep.subr.bf16.mxu0 0
    %240 = vmatpush1.bf16.msra.mxu0 0
    %241 = vmatprep.subr.bf16.mxu0 0
    %242 = vmatpush1.bf16.msra.mxu0 0
    %243 = vmatprep.subr.bf16.mxu0 0
    %244 = vmatpush1.bf16.msra.mxu0 0
    %245 = vmatprep.subr.bf16.mxu0 0
    %246 = vmatpush1.bf16.msra.mxu0 0
    %247 = vmatprep.subr.bf16.mxu0 0
    %248 = vmatpush1.bf16.msra.mxu0 0
    %249 = vmatprep.subr.bf16.mxu0 0
    %250 = vmatpush1.bf16.msra.mxu0 0
    %251 = vmatprep.subr.bf16.mxu0 0
    %252 = vmatpush1.bf16.msra.mxu0 0
    %253 = vmatprep.mubr.bf16.mxu0 0
    %254 = vmatmul.mubr.bf16.gmra.mrb[0].mxu0 %v27
    %v255 = vpop.f32.mrb[0].mxu0
    %v256 = vadd.f32 0.0, %v255
    %v257 = vpop.f32.mrb[0].mxu0
    %v258 = vpop.f32.mrb[0].mxu0
    %v259 = vadd.f32 0.0, %v258
    %v260 = vpop.f32.mrb[0].mxu0
    %261 = vdwg.mxu0
    %v262 = vpack.c.bf16 %v259, %v256
    %s263 = scalar_lea.vmem %s1, 10
    %v264 = vld [vmem:[%s263] sm:$0x3]
    %v266 = vsel %vm29, %v264, 0
    %268 = vmatprep.subr.bf16.mxu0 0
    %269 = vmatpush1.bf16.msra.mxu0 %v266
    %270 = vmatprep.subr.bf16.mxu0 0
    %271 = vmatpush1.bf16.msra.mxu0 0
    %272 = vmatprep.subr.bf16.mxu0 0
    %273 = vmatpush1.bf16.msra.mxu0 0
    %274 = vmatprep.subr.bf16.mxu0 0
    %275 = vmatpush1.bf16.msra.mxu0 0
    %276 = vmatprep.subr.bf16.mxu0 0
    %277 = vmatpush1.bf16.msra.mxu0 0
    %278 = vmatprep.subr.bf16.mxu0 0
    %279 = vmatpush1.bf16.msra.mxu0 0
    %280 = vmatprep.subr.bf16.mxu0 0
    %281 = vmatpush1.bf16.msra.mxu0 0
    %282 = vmatprep.subr.bf16.mxu0 0
    %283 = vmatpush1.bf16.msra.mxu0 0
    %284 = vmatprep.subr.bf16.mxu0 0
    %285 = vmatpush1.bf16.msra.mxu0 0
    %286 = vmatprep.subr.bf16.mxu0 0
    %287 = vmatpush1.bf16.msra.mxu0 0
    %288 = vmatprep.subr.bf16.mxu0 0
    %289 = vmatpush1.bf16.msra.mxu0 0
    %290 = vmatprep.subr.bf16.mxu0 0
    %291 = vmatpush1.bf16.msra.mxu0 0
    %292 = vmatprep.subr.bf16.mxu0 0
    %293 = vmatpush1.bf16.msra.mxu0 0
    %294 = vmatprep.subr.bf16.mxu0 0
    %295 = vmatpush1.bf16.msra.mxu0 0
    %296 = vmatprep.subr.bf16.mxu0 0
    %297 = vmatpush1.bf16.msra.mxu0 0
    %298 = vmatprep.subr.bf16.mxu0 0
    %299 = vmatpush1.bf16.msra.mxu0 0
    %300 = vmatprep.mubr.bf16.mxu0 0
    %301 = vmatmul.mubr.bf16.gmra.mrb[0].mxu0 %v27
    %v302 = vpop.f32.mrb[0].mxu0
    %v303 = vadd.f32 0.0, %v302
    %v304 = vpop.f32.mrb[0].mxu0
    %v305 = vpop.f32.mrb[0].mxu0
    %v306 = vadd.f32 0.0, %v305
    %v307 = vpop.f32.mrb[0].mxu0
    %308 = vdwg.mxu0
    %v309 = vpack.c.bf16 %v306, %v303
    %v311 = vsel %vm25, %v74, 0
    %v314 = vsel %vm25, %v121, 0
    %v317 = vsel %vm25, %v168, 0
    %v320 = vsel %vm25, %v215, 0
    %v323 = vsel %vm25, %v262, 0
    %v326 = vsel %vm25, %v309, 0
    %v329 = vsel %vm29, %v18, 0
    %331 = vmatprep.subr.bf16.mxu0 0
    %332 = vmatpush1.bf16.msra.mxu0 %v329
    %333 = vmatprep.subr.bf16.mxu0 0
    %334 = vmatpush1.bf16.msra.mxu0 0
    %335 = vmatprep.subr.bf16.mxu0 0
    %336 = vmatpush1.bf16.msra.mxu0 0
    %337 = vmatprep.subr.bf16.mxu0 0
    %338 = vmatpush1.bf16.msra.mxu0 0
    %339 = vmatprep.subr.bf16.mxu0 0
    %340 = vmatpush1.bf16.msra.mxu0 0
    %341 = vmatprep.subr.bf16.mxu0 0
    %342 = vmatpush1.bf16.msra.mxu0 0
    %343 = vmatprep.subr.bf16.mxu0 0
    %344 = vmatpush1.bf16.msra.mxu0 0
    %345 = vmatprep.subr.bf16.mxu0 0
    %346 = vmatpush1.bf16.msra.mxu0 0
    %347 = vmatprep.subr.bf16.mxu0 0
    %348 = vmatpush1.bf16.msra.mxu0 0
    %349 = vmatprep.subr.bf16.mxu0 0
    %350 = vmatpush1.bf16.msra.mxu0 0
    %351 = vmatprep.subr.bf16.mxu0 0
    %352 = vmatpush1.bf16.msra.mxu0 0
    %353 = vmatprep.subr.bf16.mxu0 0
    %354 = vmatpush1.bf16.msra.mxu0 0
    %355 = vmatprep.subr.bf16.mxu0 0
    %356 = vmatpush1.bf16.msra.mxu0 0
    %357 = vmatprep.subr.bf16.mxu0 0
    %358 = vmatpush1.bf16.msra.mxu0 0
    %359 = vmatprep.subr.bf16.mxu0 0
    %360 = vmatpush1.bf16.msra.mxu0 0
    %361 = vmatprep.subr.bf16.mxu0 0
    %362 = vmatpush1.bf16.msra.mxu0 0
    %363 = vmatprep.mubr.bf16.mxu0 0
    %364 = vmatmul.mubr.bf16.gmra.mrb[0].mxu0 %v311
    %v365 = vpop.f32.mrb[0].mxu0
    %v366 = vadd.f32 0.0, %v365
    %v367 = vpop.f32.mrb[0].mxu0
    %v368 = vpop.f32.mrb[0].mxu0
    %v369 = vadd.f32 0.0, %v368
    %v370 = vpop.f32.mrb[0].mxu0
    %371 = vmatprep.mubr.bf16.mxu0 0
    %372 = vmatmul.mubr.bf16.gmra.mrb[0].mxu0 %v314
    %v373 = vpop.f32.mrb[0].mxu0
    %v374 = vadd.f32 0.0, %v373
    %v375 = vpop.f32.mrb[0].mxu0
    %v376 = vpop.f32.mrb[0].mxu0
    %v377 = vadd.f32 0.0, %v376
    %v378 = vpop.f32.mrb[0].mxu0
    %379 = vmatprep.mubr.bf16.mxu0 0
    %380 = vmatmul.mubr.bf16.gmra.mrb[0].mxu0 %v317
    %v381 = vpop.f32.mrb[0].mxu0
    %v382 = vadd.f32 0.0, %v381
    %v383 = vpop.f32.mrb[0].mxu0
    %v384 = vpop.f32.mrb[0].mxu0
    %v385 = vadd.f32 0.0, %v384
    %v386 = vpop.f32.mrb[0].mxu0
    %387 = vmatprep.mubr.bf16.mxu0 0
    %388 = vmatmul.mubr.bf16.gmra.mrb[0].mxu0 %v320
    %v389 = vpop.f32.mrb[0].mxu0
    %v390 = vadd.f32 0.0, %v389
    %v391 = vpop.f32.mrb[0].mxu0
    %v392 = vpop.f32.mrb[0].mxu0
    %v393 = vadd.f32 0.0, %v392
    %v394 = vpop.f32.mrb[0].mxu0
    %395 = vmatprep.mubr.bf16.mxu0 0
    %396 = vmatmul.mubr.bf16.gmra.mrb[0].mxu0 %v323
    %v397 = vpop.f32.mrb[0].mxu0
    %v398 = vadd.f32 0.0, %v397
    %v399 = vpop.f32.mrb[0].mxu0
    %v400 = vpop.f32.mrb[0].mxu0
    %v401 = vadd.f32 0.0, %v400
    %v402 = vpop.f32.mrb[0].mxu0
    %403 = vmatprep.mubr.bf16.mxu0 0
    %404 = vmatmul.mubr.bf16.gmra.mrb[0].mxu0 %v326
    %v405 = vpop.f32.mrb[0].mxu0
    %v406 = vadd.f32 0.0, %v405
    %v407 = vpop.f32.mrb[0].mxu0
    %v408 = vpop.f32.mrb[0].mxu0
    %v409 = vadd.f32 0.0, %v408
    %v410 = vpop.f32.mrb[0].mxu0
    %411 = vdwg.mxu0
    %vm412 = vcmask 130048
    %413 = vst.msk [vmem:[#allocation2] sm:$0xff] %vm412, %v366
    %414 = vst.msk [vmem:[#allocation2 + $0x8] sm:$0xff] %vm412, %v369
    %s415 = scalar_lea.vmem [#allocation2], 16
    %416 = vst.msk [vmem:[%s415] sm:$0xff] %vm412, %v374
    %417 = vst.msk [vmem:[%s415 + $0x8] sm:$0xff] %vm412, %v377
    %s418 = scalar_lea.vmem [#allocation2], 32
    %419 = vst.msk [vmem:[%s418] sm:$0xff] %vm412, %v382
    %420 = vst.msk [vmem:[%s418 + $0x8] sm:$0xff] %vm412, %v385
    %s421 = scalar_lea.vmem [#allocation2], 48
    %422 = vst.msk [vmem:[%s421] sm:$0xff] %vm412, %v390
    %423 = vst.msk [vmem:[%s421 + $0x8] sm:$0xff] %vm412, %v393
    %s424 = scalar_lea.vmem [#allocation2], 64
    %425 = vst.msk [vmem:[%s424] sm:$0xff] %vm412, %v398
    %426 = vst.msk [vmem:[%s424 + $0x8] sm:$0xff] %vm412, %v401
    %s427 = scalar_lea.vmem [#allocation2], 80
    %428 = vst.msk [vmem:[%s427] sm:$0xff] %vm412, %v406
    %429 = vst.msk [vmem:[%s427 + $0x8] sm:$0xff] %vm412, %v409
    // Predicated region
    $region14: #{simple_segmentation_forward.6} parent=1 // pred_check
      _
    $region15: #{simple_segmentation_forward.6} parent=1 // pred_check_branch
      %431 = sbr.rel (0) target = $region17
    $region16: #{simple_segmentation_forward.6} parent=1 // pred_region
      %s433 = ssub.s32 1536, 1536
      %434 = vsyncadd [#allocation3], %s433
      %s435 = sshll.u32 [#allocation2], 4
      %s436 = int_to_ptr.vmem [resolvable:$true] %s435
      %441 = dma.vmem_to_hbm [thread:$0]  %s436, 1536, %s3, [#allocation3], 128, 128, 8
    $region17: #{simple_segmentation_forward.6} parent=1 // pred_fallthru
      _
    // Predicated region
    $region18: #{simple_segmentation_forward.6} parent=1 // pred_check
      _
    $region19: #{simple_segmentation_forward.6} parent=1 // pred_check_branch
      %443 = sbr.rel (0) target = $region21
    $region20: #{simple_segmentation_forward.6} parent=1 // pred_region
      %444 = dma.done [#allocation3], 1536
    $region21: #{simple_segmentation_forward.6} parent=1 // pred_fallthru
      _
    %445 = vsyncpa [#allocation3], 1

// kernel: simple_segmentation_forward.7
$region0: #{simple_segmentation_forward.7}
  #allocation0 [shape = 'u32[]', space=smem, size = 0x4, offset = 0x4, fixed_abs, tag = 'smem constant byte address 0x4 - core index']
  #allocation1 [shape = 'u32[144,128]{1,0:T(1,128)}', space=vmem, size = 0x12000, scoped, tag = 'internal scratch']
  %s0 = inlined_call_operand.vmem [shape: bf16[16,8], index: 0, kind: input, shape index: {}]
  %s1 = inlined_call_operand.vmem [shape: bf16[6,8,8], index: 1, kind: input, shape index: {}]
  %s2 = inlined_call_operand.vmem [shape: bf16[8,16], index: 2, kind: input, shape index: {}]
  %s3 = inlined_call_operand.hbm [shape: f32[6,16,16], index: 3, kind: output, shape index: {}]
  %s4 = sld [smem:[#allocation0]]
  $region22: #{simple_segmentation_forward.7} parent=0
    _
  %s6 = ssub.s32 1, %s4
  %s7 = scalar_select 0, %s6, %s4
  $region1: #{simple_segmentation_forward.7} parent=0
    #allocation2 [shape = 'u8[49152]{0}', space=vmem, size = 0xc000, scoped, tag = 'output window, operand 0, single buffered']
    #allocation3 [shape = 's32[1]{0}', space=sflag, size = 0x4, scoped, tag = 'scoped memory for simple_segmentation_forward.7']
    %8 = vsyncpa [#allocation3], 0
    // Predicated region
    $region2: #{simple_segmentation_forward.7} parent=1 // pred_check
      _
    $region3: #{simple_segmentation_forward.7} parent=1 // pred_check_branch
      %10 = sbr.rel (0) target = $region5
    $region4: #{simple_segmentation_forward.7} parent=1 // pred_region
      _
    $region5: #{simple_segmentation_forward.7} parent=1 // pred_fallthru
      _
    // Predicated region
    $region6: #{simple_segmentation_forward.7} parent=1 // pred_check
      _
    $region7: #{simple_segmentation_forward.7} parent=1 // pred_check_branch
      %12 = sbr.rel (0) target = $region9
    $region8: #{simple_segmentation_forward.7} parent=1 // pred_region
      _
    $region9: #{simple_segmentation_forward.7} parent=1 // pred_fallthru
      _
    // Predicated region
    $region10: #{simple_segmentation_forward.7} parent=1 // pred_check
      _
    $region11: #{simple_segmentation_forward.7} parent=1 // pred_check_branch
      %14 = sbr.rel (0) target = $region13
    $region12: #{simple_segmentation_forward.7} parent=1 // pred_region
      _
    $region13: #{simple_segmentation_forward.7} parent=1 // pred_fallthru
      _
    %v16 = vld [vmem:[%s0] sm:$0xf]
    %v17 = vld [vmem:[%s0 + $0x4] sm:$0xf]
    %v18 = vld [vmem:[%s2] sm:$0xf]
    %v19 = vld [vmem:[%s1] sm:$0xf]
    %v22 = vunpack.c.l.b16 %v16
    %v23 = vunpack.c.l.b16 %v17
    %v24 = vpack.c.b16 %v23, %v22
    %vm25 = vcmask 64512
    %v27 = vsel %vm25, %v24, 0
    %vm29 = vcmask 1043456
    %v31 = vsel %vm29, %v19, 0
    %33 = vmatprep.subr.bf16.mxu0 0
    %34 = vmatpush1.bf16.msra.mxu0 %v31
    %35 = vmatprep.subr.bf16.mxu0 0
    %36 = vmatpush1.bf16.msra.mxu0 0
    %37 = vmatprep.subr.bf16.mxu0 0
    %38 = vmatpush1.bf16.msra.mxu0 0
    %39 = vmatprep.subr.bf16.mxu0 0
    %40 = vmatpush1.bf16.msra.mxu0 0
    %41 = vmatprep.subr.bf16.mxu0 0
    %42 = vmatpush1.bf16.msra.mxu0 0
    %43 = vmatprep.subr.bf16.mxu0 0
    %44 = vmatpush1.bf16.msra.mxu0 0
    %45 = vmatprep.subr.bf16.mxu0 0
    %46 = vmatpush1.bf16.msra.mxu0 0
    %47 = vmatprep.subr.bf16.mxu0 0
    %48 = vmatpush1.bf16.msra.mxu0 0
    %49 = vmatprep.subr.bf16.mxu0 0
    %50 = vmatpush1.bf16.msra.mxu0 0
    %51 = vmatprep.subr.bf16.mxu0 0
    %52 = vmatpush1.bf16.msra.mxu0 0
    %53 = vmatprep.subr.bf16.mxu0 0
    %54 = vmatpush1.bf16.msra.mxu0 0
    %55 = vmatprep.subr.bf16.mxu0 0
    %56 = vmatpush1.bf16.msra.mxu0 0
    %57 = vmatprep.subr.bf16.mxu0 0
    %58 = vmatpush1.bf16.msra.mxu0 0
    %59 = vmatprep.subr.bf16.mxu0 0
    %60 = vmatpush1.bf16.msra.mxu0 0
    %61 = vmatprep.subr.bf16.mxu0 0
    %62 = vmatpush1.bf16.msra.mxu0 0
    %63 = vmatprep.subr.bf16.mxu0 0
    %64 = vmatpush1.bf16.msra.mxu0 0
    %65 = vmatprep.mubr.bf16.mxu0 0
    %66 = vmatmul.mubr.bf16.gmra.mrb[0].mxu0 %v27
    %v67 = vpop.f32.mrb[0].mxu0
    %v68 = vadd.f32 0.0, %v67
    %v69 = vpop.f32.mrb[0].mxu0
    %v70 = vpop.f32.mrb[0].mxu0
    %v71 = vadd.f32 0.0, %v70
    %v72 = vpop.f32.mrb[0].mxu0
    %73 = vdwg.mxu0
    %v74 = vpack.c.bf16 %v71, %v68
    %s75 = scalar_lea.vmem %s1, 4
    %v76 = vld [vmem:[%s75] sm:$0xf]
    %v78 = vsel %vm29, %v76, 0
    %80 = vmatprep.subr.bf16.mxu0 0
    %81 = vmatpush1.bf16.msra.mxu0 %v78
    %82 = vmatprep.subr.bf16.mxu0 0
    %83 = vmatpush1.bf16.msra.mxu0 0
    %84 = vmatprep.subr.bf16.mxu0 0
    %85 = vmatpush1.bf16.msra.mxu0 0
    %86 = vmatprep.subr.bf16.mxu0 0
    %87 = vmatpush1.bf16.msra.mxu0 0
    %88 = vmatprep.subr.bf16.mxu0 0
    %89 = vmatpush1.bf16.msra.mxu0 0
    %90 = vmatprep.subr.bf16.mxu0 0
    %91 = vmatpush1.bf16.msra.mxu0 0
    %92 = vmatprep.subr.bf16.mxu0 0
    %93 = vmatpush1.bf16.msra.mxu0 0
    %94 = vmatprep.subr.bf16.mxu0 0
    %95 = vmatpush1.bf16.msra.mxu0 0
    %96 = vmatprep.subr.bf16.mxu0 0
    %97 = vmatpush1.bf16.msra.mxu0 0
    %98 = vmatprep.subr.bf16.mxu0 0
    %99 = vmatpush1.bf16.msra.mxu0 0
    %100 = vmatprep.subr.bf16.mxu0 0
    %101 = vmatpush1.bf16.msra.mxu0 0
    %102 = vmatprep.subr.bf16.mxu0 0
    %103 = vmatpush1.bf16.msra.mxu0 0
    %104 = vmatprep.subr.bf16.mxu0 0
    %105 = vmatpush1.bf16.msra.mxu0 0
    %106 = vmatprep.subr.bf16.mxu0 0
    %107 = vmatpush1.bf16.msra.mxu0 0
    %108 = vmatprep.subr.bf16.mxu0 0
    %109 = vmatpush1.bf16.msra.mxu0 0
    %110 = vmatprep.subr.bf16.mxu0 0
    %111 = vmatpush1.bf16.msra.mxu0 0
    %112 = vmatprep.mubr.bf16.mxu0 0
    %113 = vmatmul.mubr.bf16.gmra.mrb[0].mxu0 %v27
    %v114 = vpop.f32.mrb[0].mxu0
    %v115 = vadd.f32 0.0, %v114
    %v116 = vpop.f32.mrb[0].mxu0
    %v117 = vpop.f32.mrb[0].mxu0
    %v118 = vadd.f32 0.0, %v117
    %v119 = vpop.f32.mrb[0].mxu0
    %120 = vdwg.mxu0
    %v121 = vpack.c.bf16 %v118, %v115
    %s122 = scalar_lea.vmem %s1, 8
    %v123 = vld [vmem:[%s122] sm:$0xf]
    %v125 = vsel %vm29, %v123, 0
    %127 = vmatprep.subr.bf16.mxu0 0
    %128 = vmatpush1.bf16.msra.mxu0 %v125
    %129 = vmatprep.subr.bf16.mxu0 0
    %130 = vmatpush1.bf16.msra.mxu0 0
    %131 = vmatprep.subr.bf16.mxu0 0
    %132 = vmatpush1.bf16.msra.mxu0 0
    %133 = vmatprep.subr.bf16.mxu0 0
    %134 = vmatpush1.bf16.msra.mxu0 0
    %135 = vmatprep.subr.bf16.mxu0 0
    %136 = vmatpush1.bf16.msra.mxu0 0
    %137 = vmatprep.subr.bf16.mxu0 0
    %138 = vmatpush1.bf16.msra.mxu0 0
    %139 = vmatprep.subr.bf16.mxu0 0
    %140 = vmatpush1.bf16.msra.mxu0 0
    %141 = vmatprep.subr.bf16.mxu0 0
    %142 = vmatpush1.bf16.msra.mxu0 0
    %143 = vmatprep.subr.bf16.mxu0 0
    %144 = vmatpush1.bf16.msra.mxu0 0
    %145 = vmatprep.subr.bf16.mxu0 0
    %146 = vmatpush1.bf16.msra.mxu0 0
    %147 = vmatprep.subr.bf16.mxu0 0
    %148 = vmatpush1.bf16.msra.mxu0 0
    %149 = vmatprep.subr.bf16.mxu0 0
    %150 = vmatpush1.bf16.msra.mxu0 0
    %151 = vmatprep.subr.bf16.mxu0 0
    %152 = vmatpush1.bf16.msra.mxu0 0
    %153 = vmatprep.subr.bf16.mxu0 0
    %154 = vmatpush1.bf16.msra.mxu0 0
    %155 = vmatprep.subr.bf16.mxu0 0
    %156 = vmatpush1.bf16.msra.mxu0 0
    %157 = vmatprep.subr.bf16.mxu0 0
    %158 = vmatpush1.bf16.msra.mxu0 0
    %159 = vmatprep.mubr.bf16.mxu0 0
    %160 = vmatmul.mubr.bf16.gmra.mrb[0].mxu0 %v27
    %v161 = vpop.f32.mrb[0].mxu0
    %v162 = vadd.f32 0.0, %v161
    %v163 = vpop.f32.mrb[0].mxu0
    %v164 = vpop.f32.mrb[0].mxu0
    %v165 = vadd.f32 0.0, %v164
    %v166 = vpop.f32.mrb[0].mxu0
    %167 = vdwg.mxu0
    %v168 = vpack.c.bf16 %v165, %v162
    %s169 = scalar_lea.vmem %s1, 12
    %v170 = vld [vmem:[%s169] sm:$0xf]
    %v172 = vsel %vm29, %v170, 0
    %174 = vmatprep.subr.bf16.mxu0 0
    %175 = vmatpush1.bf16.msra.mxu0 %v172
    %176 = vmatprep.subr.bf16.mxu0 0
    %177 = vmatpush1.bf16.msra.mxu0 0
    %178 = vmatprep.subr.bf16.mxu0 0
    %179 = vmatpush1.bf16.msra.mxu0 0
    %180 = vmatprep.subr.bf16.mxu0 0
    %181 = vmatpush1.bf16.msra.mxu0 0
    %182 = vmatprep.subr.bf16.mxu0 0
    %183 = vmatpush1.bf16.msra.mxu0 0
    %184 = vmatprep.subr.bf16.mxu0 0
    %185 = vmatpush1.bf16.msra.mxu0 0
    %186 = vmatprep.subr.bf16.mxu0 0
    %187 = vmatpush1.bf16.msra.mxu0 0
    %188 = vmatprep.subr.bf16.mxu0 0
    %189 = vmatpush1.bf16.msra.mxu0 0
    %190 = vmatprep.subr.bf16.mxu0 0
    %191 = vmatpush1.bf16.msra.mxu0 0
    %192 = vmatprep.subr.bf16.mxu0 0
    %193 = vmatpush1.bf16.msra.mxu0 0
    %194 = vmatprep.subr.bf16.mxu0 0
    %195 = vmatpush1.bf16.msra.mxu0 0
    %196 = vmatprep.subr.bf16.mxu0 0
    %197 = vmatpush1.bf16.msra.mxu0 0
    %198 = vmatprep.subr.bf16.mxu0 0
    %199 = vmatpush1.bf16.msra.mxu0 0
    %200 = vmatprep.subr.bf16.mxu0 0
    %201 = vmatpush1.bf16.msra.mxu0 0
    %202 = vmatprep.subr.bf16.mxu0 0
    %203 = vmatpush1.bf16.msra.mxu0 0
    %204 = vmatprep.subr.bf16.mxu0 0
    %205 = vmatpush1.bf16.msra.mxu0 0
    %206 = vmatprep.mubr.bf16.mxu0 0
    %207 = vmatmul.mubr.bf16.gmra.mrb[0].mxu0 %v27
    %v208 = vpop.f32.mrb[0].mxu0
    %v209 = vadd.f32 0.0, %v208
    %v210 = vpop.f32.mrb[0].mxu0
    %v211 = vpop.f32.mrb[0].mxu0
    %v212 = vadd.f32 0.0, %v211
    %v213 = vpop.f32.mrb[0].mxu0
    %214 = vdwg.mxu0
    %v215 = vpack.c.bf16 %v212, %v209
    %s216 = scalar_lea.vmem %s1, 16
    %v217 = vld [vmem:[%s216] sm:$0xf]
    %v219 = vsel %vm29, %v217, 0
    %221 = vmatprep.subr.bf16.mxu0 0
    %222 = vmatpush1.bf16.msra.mxu0 %v219
    %223 = vmatprep.subr.bf16.mxu0 0
    %224 = vmatpush1.bf16.msra.mxu0 0
    %225 = vmatprep.subr.bf16.mxu0 0
    %226 = vmatpush1.bf16.msra.mxu0 0
    %227 = vmatprep.subr.bf16.mxu0 0
    %228 = vmatpush1.bf16.msra.mxu0 0
    %229 = vmatprep.subr.bf16.mxu0 0
    %230 = vmatpush1.bf16.msra.mxu0 0
    %231 = vmatprep.subr.bf16.mxu0 0
    %232 = vmatpush1.bf16.msra.mxu0 0
    %233 = vmatprep.subr.bf16.mxu0 0
    %234 = vmatpush1.bf16.msra.mxu0 0
    %235 = vmatprep.subr.bf16.mxu0 0
    %236 = vmatpush1.bf16.msra.mxu0 0
    %237 = vmatprep.subr.bf16.mxu0 0
    %238 = vmatpush1.bf16.msra.mxu0 0
    %239 = vmatprep.subr.bf16.mxu0 0
    %240 = vmatpush1.bf16.msra.mxu0 0
    %241 = vmatprep.subr.bf16.mxu0 0
    %242 = vmatpush1.bf16.msra.mxu0 0
    %243 = vmatprep.subr.bf16.mxu0 0
    %244 = vmatpush1.bf16.msra.mxu0 0
    %245 = vmatprep.subr.bf16.mxu0 0
    %246 = vmatpush1.bf16.msra.mxu0 0
    %247 = vmatprep.subr.bf16.mxu0 0
    %248 = vmatpush1.bf16.msra.mxu0 0
    %249 = vmatprep.subr.bf16.mxu0 0
    %250 = vmatpush1.bf16.msra.mxu0 0
    %251 = vmatprep.subr.bf16.mxu0 0
    %252 = vmatpush1.bf16.msra.mxu0 0
    %253 = vmatprep.mubr.bf16.mxu0 0
    %254 = vmatmul.mubr.bf16.gmra.mrb[0].mxu0 %v27
    %v255 = vpop.f32.mrb[0].mxu0
    %v256 = vadd.f32 0.0, %v255
    %v257 = vpop.f32.mrb[0].mxu0
    %v258 = vpop.f32.mrb[0].mxu0
    %v259 = vadd.f32 0.0, %v258
    %v260 = vpop.f32.mrb[0].mxu0
    %261 = vdwg.mxu0
    %v262 = vpack.c.bf16 %v259, %v256
    %s263 = scalar_lea.vmem %s1, 20
    %v264 = vld [vmem:[%s263] sm:$0xf]
    %v266 = vsel %vm29, %v264, 0
    %268 = vmatprep.subr.bf16.mxu0 0
    %269 = vmatpush1.bf16.msra.mxu0 %v266
    %270 = vmatprep.subr.bf16.mxu0 0
    %271 = vmatpush1.bf16.msra.mxu0 0
    %272 = vmatprep.subr.bf16.mxu0 0
    %273 = vmatpush1.bf16.msra.mxu0 0
    %274 = vmatprep.subr.bf16.mxu0 0
    %275 = vmatpush1.bf16.msra.mxu0 0
    %276 = vmatprep.subr.bf16.mxu0 0
    %277 = vmatpush1.bf16.msra.mxu0 0
    %278 = vmatprep.subr.bf16.mxu0 0
    %279 = vmatpush1.bf16.msra.mxu0 0
    %280 = vmatprep.subr.bf16.mxu0 0
    %281 = vmatpush1.bf16.msra.mxu0 0
    %282 = vmatprep.subr.bf16.mxu0 0
    %283 = vmatpush1.bf16.msra.mxu0 0
    %284 = vmatprep.subr.bf16.mxu0 0
    %285 = vmatpush1.bf16.msra.mxu0 0
    %286 = vmatprep.subr.bf16.mxu0 0
    %287 = vmatpush1.bf16.msra.mxu0 0
    %288 = vmatprep.subr.bf16.mxu0 0
    %289 = vmatpush1.bf16.msra.mxu0 0
    %290 = vmatprep.subr.bf16.mxu0 0
    %291 = vmatpush1.bf16.msra.mxu0 0
    %292 = vmatprep.subr.bf16.mxu0 0
    %293 = vmatpush1.bf16.msra.mxu0 0
    %294 = vmatprep.subr.bf16.mxu0 0
    %295 = vmatpush1.bf16.msra.mxu0 0
    %296 = vmatprep.subr.bf16.mxu0 0
    %297 = vmatpush1.bf16.msra.mxu0 0
    %298 = vmatprep.subr.bf16.mxu0 0
    %299 = vmatpush1.bf16.msra.mxu0 0
    %300 = vmatprep.mubr.bf16.mxu0 0
    %301 = vmatmul.mubr.bf16.gmra.mrb[0].mxu0 %v27
    %v302 = vpop.f32.mrb[0].mxu0
    %v303 = vadd.f32 0.0, %v302
    %v304 = vpop.f32.mrb[0].mxu0
    %v305 = vpop.f32.mrb[0].mxu0
    %v306 = vadd.f32 0.0, %v305
    %v307 = vpop.f32.mrb[0].mxu0
    %308 = vdwg.mxu0
    %v309 = vpack.c.bf16 %v306, %v303
    %v311 = vsel %vm25, %v74, 0
    %v314 = vsel %vm25, %v121, 0
    %v317 = vsel %vm25, %v168, 0
    %v320 = vsel %vm25, %v215, 0
    %v323 = vsel %vm25, %v262, 0
    %v326 = vsel %vm25, %v309, 0
    %v329 = vsel %vm29, %v18, 0
    %331 = vmatprep.subr.bf16.mxu0 0
    %332 = vmatpush1.bf16.msra.mxu0 %v329
    %333 = vmatprep.subr.bf16.mxu0 0
    %334 = vmatpush1.bf16.msra.mxu0 0
    %335 = vmatprep.subr.bf16.mxu0 0
    %336 = vmatpush1.bf16.msra.mxu0 0
    %337 = vmatprep.subr.bf16.mxu0 0
    %338 = vmatpush1.bf16.msra.mxu0 0
    %339 = vmatprep.subr.bf16.mxu0 0
    %340 = vmatpush1.bf16.msra.mxu0 0
    %341 = vmatprep.subr.bf16.mxu0 0
    %342 = vmatpush1.bf16.msra.mxu0 0
    %343 = vmatprep.subr.bf16.mxu0 0
    %344 = vmatpush1.bf16.msra.mxu0 0
    %345 = vmatprep.subr.bf16.mxu0 0
    %346 = vmatpush1.bf16.msra.mxu0 0
    %347 = vmatprep.subr.bf16.mxu0 0
    %348 = vmatpush1.bf16.msra.mxu0 0
    %349 = vmatprep.subr.bf16.mxu0 0
    %350 = vmatpush1.bf16.msra.mxu0 0
    %351 = vmatprep.subr.bf16.mxu0 0
    %352 = vmatpush1.bf16.msra.mxu0 0
    %353 = vmatprep.subr.bf16.mxu0 0
    %354 = vmatpush1.bf16.msra.mxu0 0
    %355 = vmatprep.subr.bf16.mxu0 0
    %356 = vmatpush1.bf16.msra.mxu0 0
    %357 = vmatprep.subr.bf16.mxu0 0
    %358 = vmatpush1.bf16.msra.mxu0 0
    %359 = vmatprep.subr.bf16.mxu0 0
    %360 = vmatpush1.bf16.msra.mxu0 0
    %361 = vmatprep.subr.bf16.mxu0 0
    %362 = vmatpush1.bf16.msra.mxu0 0
    %363 = vmatprep.mubr.bf16.mxu0 0
    %364 = vmatmul.mubr.bf16.gmra.mrb[0].mxu0 %v311
    %v365 = vpop.f32.mrb[0].mxu0
    %v366 = vadd.f32 0.0, %v365
    %v367 = vpop.f32.mrb[0].mxu0
    %v368 = vpop.f32.mrb[0].mxu0
    %v369 = vadd.f32 0.0, %v368
    %v370 = vpop.f32.mrb[0].mxu0
    %371 = vmatprep.mubr.bf16.mxu0 0
    %372 = vmatmul.mubr.bf16.gmra.mrb[0].mxu0 %v314
    %v373 = vpop.f32.mrb[0].mxu0
    %v374 = vadd.f32 0.0, %v373
    %v375 = vpop.f32.mrb[0].mxu0
    %v376 = vpop.f32.mrb[0].mxu0
    %v377 = vadd.f32 0.0, %v376
    %v378 = vpop.f32.mrb[0].mxu0
    %379 = vmatprep.mubr.bf16.mxu0 0
    %380 = vmatmul.mubr.bf16.gmra.mrb[0].mxu0 %v317
    %v381 = vpop.f32.mrb[0].mxu0
    %v382 = vadd.f32 0.0, %v381
    %v383 = vpop.f32.mrb[0].mxu0
    %v384 = vpop.f32.mrb[0].mxu0
    %v385 = vadd.f32 0.0, %v384
    %v386 = vpop.f32.mrb[0].mxu0
    %387 = vmatprep.mubr.bf16.mxu0 0
    %388 = vmatmul.mubr.bf16.gmra.mrb[0].mxu0 %v320
    %v389 = vpop.f32.mrb[0].mxu0
    %v390 = vadd.f32 0.0, %v389
    %v391 = vpop.f32.mrb[0].mxu0
    %v392 = vpop.f32.mrb[0].mxu0
    %v393 = vadd.f32 0.0, %v392
    %v394 = vpop.f32.mrb[0].mxu0
    %395 = vmatprep.mubr.bf16.mxu0 0
    %396 = vmatmul.mubr.bf16.gmra.mrb[0].mxu0 %v323
    %v397 = vpop.f32.mrb[0].mxu0
    %v398 = vadd.f32 0.0, %v397
    %v399 = vpop.f32.mrb[0].mxu0
    %v400 = vpop.f32.mrb[0].mxu0
    %v401 = vadd.f32 0.0, %v400
    %v402 = vpop.f32.mrb[0].mxu0
    %403 = vmatprep.mubr.bf16.mxu0 0
    %404 = vmatmul.mubr.bf16.gmra.mrb[0].mxu0 %v326
    %v405 = vpop.f32.mrb[0].mxu0
    %v406 = vadd.f32 0.0, %v405
    %v407 = vpop.f32.mrb[0].mxu0
    %v408 = vpop.f32.mrb[0].mxu0
    %v409 = vadd.f32 0.0, %v408
    %v410 = vpop.f32.mrb[0].mxu0
    %411 = vdwg.mxu0
    %vm412 = vcmask 130048
    %413 = vst.msk [vmem:[#allocation2] sm:$0xff] %vm412, %v366
    %414 = vst.msk [vmem:[#allocation2 + $0x8] sm:$0xff] %vm412, %v369
    %s415 = scalar_lea.vmem [#allocation2], 16
    %416 = vst.msk [vmem:[%s415] sm:$0xff] %vm412, %v374
    %417 = vst.msk [vmem:[%s415 + $0x8] sm:$0xff] %vm412, %v377
    %s418 = scalar_lea.vmem [#allocation2], 32
    %419 = vst.msk [vmem:[%s418] sm:$0xff] %vm412, %v382
    %420 = vst.msk [vmem:[%s418 + $0x8] sm:$0xff] %vm412, %v385
    %s421 = scalar_lea.vmem [#allocation2], 48
    %422 = vst.msk [vmem:[%s421] sm:$0xff] %vm412, %v390
    %423 = vst.msk [vmem:[%s421 + $0x8] sm:$0xff] %vm412, %v393
    %s424 = scalar_lea.vmem [#allocation2], 64
    %425 = vst.msk [vmem:[%s424] sm:$0xff] %vm412, %v398
    %426 = vst.msk [vmem:[%s424 + $0x8] sm:$0xff] %vm412, %v401
    %s427 = scalar_lea.vmem [#allocation2], 80
    %428 = vst.msk [vmem:[%s427] sm:$0xff] %vm412, %v406
    %429 = vst.msk [vmem:[%s427 + $0x8] sm:$0xff] %vm412, %v409
    // Predicated region
    $region14: #{simple_segmentation_forward.7} parent=1 // pred_check
      _
    $region15: #{simple_segmentation_forward.7} parent=1 // pred_check_branch
      %431 = sbr.rel (0) target = $region17
    $region16: #{simple_segmentation_forward.7} parent=1 // pred_region
      %s433 = ssub.s32 1536, 1536
      %434 = vsyncadd [#allocation3], %s433
      %s435 = sshll.u32 [#allocation2], 4
      %s436 = int_to_ptr.vmem [resolvable:$true] %s435
      %441 = dma.vmem_to_hbm [thread:$0]  %s436, 1536, %s3, [#allocation3], 128, 128, 8
    $region17: #{simple_segmentation_forward.7} parent=1 // pred_fallthru
      _
    // Predicated region
    $region18: #{simple_segmentation_forward.7} parent=1 // pred_check
      _
    $region19: #{simple_segmentation_forward.7} parent=1 // pred_check_branch
      %443 = sbr.rel (0) target = $region21
    $region20: #{simple_segmentation_forward.7} parent=1 // pred_region
      %444 = dma.done [#allocation3], 1536
    $region21: #{simple_segmentation_forward.7} parent=1 // pred_fallthru
      _
    %445 = vsyncpa [#allocation3], 1

// kernel: simple_segmentation_forward.5
$region0: #{simple_segmentation_forward.5}
  #allocation0 [shape = 'u32[]', space=smem, size = 0x4, offset = 0x4, fixed_abs, tag = 'smem constant byte address 0x4 - core index']
  #allocation1 [shape = 'u32[144,128]{1,0:T(1,128)}', space=vmem, size = 0x12000, scoped, tag = 'internal scratch']
  #allocation2 [shape = 'bf16[72,16]{1,0:T(8,128)(2,1)}', space=vmem, size = 0x4800, scoped, tag = 'scratch operand']
  %s0 = inlined_call_operand.vmem [shape: bf16[2,10,8,10], index: 0, kind: input, shape index: {}]
  %s1 = inlined_call_operand.vmem [shape: bf16[10,9], index: 1, kind: input, shape index: {}]
  %s2 = inlined_call_operand.vmem [shape: bf16[16,72], index: 2, kind: input, shape index: {}]
  %s3 = inlined_call_operand.vmem [shape: f32[16,1], index: 3, kind: input, shape index: {}]
  %s4 = inlined_call_operand.vmem [shape: bf16[3,16], index: 4, kind: input, shape index: {}]
  %s5 = inlined_call_operand.vmem [shape: f32[3,1], index: 5, kind: input, shape index: {}]
  %s6 = inlined_call_operand.vmem [shape: bf16[2,3,16], index: 6, kind: output, shape index: {}]
  %s7 = sld [smem:[#allocation0]]
  $region57: #{simple_segmentation_forward.5} parent=0
    _
  %s9 = ssub.s32 1, %s7
  %s10 = scalar_select 0, %s9, %s7
  loop: start=0, step=1, limit=4
  $region2: #{simple_segmentation_forward.5} parent=0 // loop_pre_header
    _
  $region3: #{simple_segmentation_forward.5} parent=0 // loop_header
    %s12 = sphi 0, %s16
    %p13 = scmp.ge.s32.totalorder %s12, 4
    %s22 = sphi 0, %s24
    %s25 = sphi 0, %s22
    %s26 = sphi 0, %s25
    %s42 = sphi 0, %s26
    %s46 = sphi 0, %s46
    %s48 = sphi 0, %s46
    %s49 = sphi 0, %s48
    %s63 = sphi 0, %s49
    %s67 = sphi 0, %s67
    %s69 = sphi 0, %s67
    %s70 = sphi 0, %s69
    %s84 = sphi 0, %s70
    %s88 = sphi 0, %s88
    %s90 = sphi 0, %s88
    %s91 = sphi 0, %s90
    %s105 = sphi 0, %s91
    %s109 = sphi 0, %s109
    %s111 = sphi 0, %s109
    %s112 = sphi 0, %s111
    %s126 = sphi 0, %s112
    %s130 = sphi 0, %s130
    %s132 = sphi 0, %s130
    %s133 = sphi 0, %s132
    %s147 = sphi 0, %s133
    %s153 = sphi 0, %s155
    %s156 = sphi 0, %s153
    %s157 = sphi 0, %s156
    %s173 = sphi 0, %s157
  $region4: #{simple_segmentation_forward.5} parent=0 // loop_header_branch
    %15 = sbr.rel (%p13) target = $region8
  $region5: #{simple_segmentation_forward.5} parent=0 // loop_body
    %s17 = ssub.s32 %s12, 1
    %s18 = ssub.s32 %s12, 2
    %s19 = sadd.s32 %s12, 1
    %s20 = ssub.s32 %s12, %s19
    %p21 = scmp.eq.s32.totalorder %s20, 0
    %s23 = sadd.s32 %s22, 1
    %s24 = scalar_select %p21, %s22, %s23
    %p27 = pneg %p21
    %p28 = scmp.eq.s32.totalorder %s12, 1
    %p29 = por %p27, %p28
    %p30 = scmp.ne.s32.totalorder %s22, %s25
    %p31 = scmp.eq.s32.totalorder %s12, 0
    %p32 = por %p30, %p31
    %p33 = scmp.ne.s32.totalorder %s22, %s25
    %p34 = scmp.eq.s32.totalorder %s17, 1
    %p35 = por %p33, %p34
    %p36 = scmp.ne.s32.totalorder %s25, %s26
    %p37 = scmp.eq.s32.totalorder %s17, 0
    %p38 = por %p36, %p37
    %p39 = scmp.ne.s32.totalorder %s25, %s26
    %p40 = scmp.eq.s32.totalorder %s18, 1
    %p41 = por %p39, %p40
    %p43 = scmp.ne.s32.totalorder %s26, %s42
    %p44 = scmp.eq.s32.totalorder %s18, 0
    %p45 = por %p43, %p44
    %s47 = sadd.s32 %s46, 1
    %p50 = scmp.eq.s32.totalorder %s12, 1
    %p51 = scmp.ne.s32.totalorder %s46, %s48
    %p52 = scmp.eq.s32.totalorder %s12, 0
    %p53 = por %p51, %p52
    %p54 = scmp.ne.s32.totalorder %s46, %s48
    %p55 = scmp.eq.s32.totalorder %s17, 1
    %p56 = por %p54, %p55
    %p57 = scmp.ne.s32.totalorder %s48, %s49
    %p58 = scmp.eq.s32.totalorder %s17, 0
    %p59 = por %p57, %p58
    %p60 = scmp.ne.s32.totalorder %s48, %s49
    %p61 = scmp.eq.s32.totalorder %s18, 1
    %p62 = por %p60, %p61
    %p64 = scmp.ne.s32.totalorder %s49, %s63
    %p65 = scmp.eq.s32.totalorder %s18, 0
    %p66 = por %p64, %p65
    %s68 = sadd.s32 %s67, 1
    %p71 = scmp.eq.s32.totalorder %s12, 1
    %p72 = scmp.ne.s32.totalorder %s67, %s69
    %p73 = scmp.eq.s32.totalorder %s12, 0
    %p74 = por %p72, %p73
    %p75 = scmp.ne.s32.totalorder %s67, %s69
    %p76 = scmp.eq.s32.totalorder %s17, 1
    %p77 = por %p75, %p76
    %p78 = scmp.ne.s32.totalorder %s69, %s70
    %p79 = scmp.eq.s32.totalorder %s17, 0
    %p80 = por %p78, %p79
    %p81 = scmp.ne.s32.totalorder %s69, %s70
    %p82 = scmp.eq.s32.totalorder %s18, 1
    %p83 = por %p81, %p82
    %p85 = scmp.ne.s32.totalorder %s70, %s84
    %p86 = scmp.eq.s32.totalorder %s18, 0
    %p87 = por %p85, %p86
    %s89 = sadd.s32 %s88, 1
    %p92 = scmp.eq.s32.totalorder %s12, 1
    %p93 = scmp.ne.s32.totalorder %s88, %s90
    %p94 = scmp.eq.s32.totalorder %s12, 0
    %p95 = por %p93, %p94
    %p96 = scmp.ne.s32.totalorder %s88, %s90
    %p97 = scmp.eq.s32.totalorder %s17, 1
    %p98 = por %p96, %p97
    %p99 = scmp.ne.s32.totalorder %s90, %s91
    %p100 = scmp.eq.s32.totalorder %s17, 0
    %p101 = por %p99, %p100
    %p102 = scmp.ne.s32.totalorder %s90, %s91
    %p103 = scmp.eq.s32.totalorder %s18, 1
    %p104 = por %p102, %p103
    %p106 = scmp.ne.s32.totalorder %s91, %s105
    %p107 = scmp.eq.s32.totalorder %s18, 0
    %p108 = por %p106, %p107
    %s110 = sadd.s32 %s109, 1
    %p113 = scmp.eq.s32.totalorder %s12, 1
    %p114 = scmp.ne.s32.totalorder %s109, %s111
    %p115 = scmp.eq.s32.totalorder %s12, 0
    %p116 = por %p114, %p115
    %p117 = scmp.ne.s32.totalorder %s109, %s111
    %p118 = scmp.eq.s32.totalorder %s17, 1
    %p119 = por %p117, %p118
    %p120 = scmp.ne.s32.totalorder %s111, %s112
    %p121 = scmp.eq.s32.totalorder %s17, 0
    %p122 = por %p120, %p121
    %p123 = scmp.ne.s32.totalorder %s111, %s112
    %p124 = scmp.eq.s32.totalorder %s18, 1
    %p125 = por %p123, %p124
    %p127 = scmp.ne.s32.totalorder %s112, %s126
    %p128 = scmp.eq.s32.totalorder %s18, 0
    %p129 = por %p127, %p128
    %s131 = sadd.s32 %s130, 1
    %p134 = scmp.eq.s32.totalorder %s12, 1
    %p135 = scmp.ne.s32.totalorder %s130, %s132
    %p136 = scmp.eq.s32.totalorder %s12, 0
    %p137 = por %p135, %p136
    %p138 = scmp.ne.s32.totalorder %s130, %s132
    %p139 = scmp.eq.s32.totalorder %s17, 1
    %p140 = por %p138, %p139
    %p141 = scmp.ne.s32.totalorder %s132, %s133
    %p142 = scmp.eq.s32.totalorder %s17, 0
    %p143 = por %p141, %p142
    %p144 = scmp.ne.s32.totalorder %s132, %s133
    %p145 = scmp.eq.s32.totalorder %s18, 1
    %p146 = por %p144, %p145
    %p148 = scmp.ne.s32.totalorder %s133, %s147
    %p149 = scmp.eq.s32.totalorder %s18, 0
    %p150 = por %p148, %p149
    %s151 = ssub.s32 %s12, %s19
    %p152 = scmp.eq.s32.totalorder %s151, 0
    %s154 = sadd.s32 %s153, 1
    %s155 = scalar_select %p152, %s153, %s154
    %p158 = pneg %p152
    %p159 = scmp.eq.s32.totalorder %s12, 1
    %p160 = por %p158, %p159
    %p161 = scmp.ne.s32.totalorder %s153, %s156
    %p162 = scmp.eq.s32.totalorder %s12, 0
    %p163 = por %p161, %p162
    %p164 = scmp.ne.s32.totalorder %s153, %s156
    %p165 = scmp.eq.s32.totalorder %s17, 1
    %p166 = por %p164, %p165
    %p167 = scmp.ne.s32.totalorder %s156, %s157
    %p168 = scmp.eq.s32.totalorder %s17, 0
    %p169 = por %p167, %p168
    %p170 = scmp.ne.s32.totalorder %s156, %s157
    %p171 = scmp.eq.s32.totalorder %s18, 1
    %p172 = por %p170, %p171
    %p174 = scmp.ne.s32.totalorder %s157, %s173
    %p175 = scmp.eq.s32.totalorder %s18, 0
    %p176 = por %p174, %p175
    %p177 = scmp.le.s32.totalorder 1, %s12
    %p178 = scmp.lt.s32.totalorder %s12, 3
    %p179 = pnand %p177, %p178
    %p180 = pneg %p179
    // Predicated region
    $region9: #{simple_segmentation_forward.5} parent=5 // pred_check
      _
    $region10: #{simple_segmentation_forward.5} parent=5 // pred_check_branch
      %182 = sbr.rel (%p179) target = $region12
    $region11: #{simple_segmentation_forward.5} parent=5 // pred_region
      %s183 = ssub.s32 %s12, 1
      // Predicated region
      $region13: #{simple_segmentation_forward.5} parent=11 // pred_check
        %p184 = pneg %p59
      $region14: #{simple_segmentation_forward.5} parent=11 // pred_check_branch
        %186 = sbr.rel (%p184) target = $region16
      $region15: #{simple_segmentation_forward.5} parent=11 // pred_region
        _
      $region16: #{simple_segmentation_forward.5} parent=11 // pred_fallthru
        _
      // Predicated region
      $region17: #{simple_segmentation_forward.5} parent=11 // pred_check
        %p187 = pneg %p80
      $region18: #{simple_segmentation_forward.5} parent=11 // pred_check_branch
        %189 = sbr.rel (%p187) target = $region20
      $region19: #{simple_segmentation_forward.5} parent=11 // pred_region
        _
      $region20: #{simple_segmentation_forward.5} parent=11 // pred_fallthru
        _
      // Predicated region
      $region21: #{simple_segmentation_forward.5} parent=11 // pred_check
        %p190 = pneg %p101
      $region22: #{simple_segmentation_forward.5} parent=11 // pred_check_branch
        %192 = sbr.rel (%p190) target = $region24
      $region23: #{simple_segmentation_forward.5} parent=11 // pred_region
        _
      $region24: #{simple_segmentation_forward.5} parent=11 // pred_fallthru
        _
      // Predicated region
      $region25: #{simple_segmentation_forward.5} parent=11 // pred_check
        %p193 = pneg %p122
      $region26: #{simple_segmentation_forward.5} parent=11 // pred_check_branch
        %195 = sbr.rel (%p193) target = $region28
      $region27: #{simple_segmentation_forward.5} parent=11 // pred_region
        _
      $region28: #{simple_segmentation_forward.5} parent=11 // pred_fallthru
        _
      // Predicated region
      $region29: #{simple_segmentation_forward.5} parent=11 // pred_check
        %p196 = pneg %p143
      $region30: #{simple_segmentation_forward.5} parent=11 // pred_check_branch
        %198 = sbr.rel (%p196) target = $region32
      $region31: #{simple_segmentation_forward.5} parent=11 // pred_region
        _
      $region32: #{simple_segmentation_forward.5} parent=11 // pred_fallthru
        _
    $region12: #{simple_segmentation_forward.5} parent=5 // pred_fallthru
      _
    %p199 = scmp.lt.s32.totalorder %s12, 2
    // Predicated region
    $region33: #{simple_segmentation_forward.5} parent=5 // pred_check
      %p200 = pneg %p199
    $region34: #{simple_segmentation_forward.5} parent=5 // pred_check_branch
      %202 = sbr.rel (%p200) target = $region36
    $region35: #{simple_segmentation_forward.5} parent=5 // pred_region
      // Predicated region
      $region37: #{simple_segmentation_forward.5} parent=35 // pred_check
        %p203 = pneg %p32
      $region38: #{simple_segmentation_forward.5} parent=35 // pred_check_branch
        %205 = sbr.rel (%p203) target = $region40
      $region39: #{simple_segmentation_forward.5} parent=35 // pred_region
        %p206 = scmp.lt.s32.totalorder %s12, 1
        %s207 = scalar_select %p206, %s12, 1
        %s208 = smul.addr %s207, 10
        %s209 = smul.addr %s208, 4
        %s210 = scalar_lea.vmem %s0, %s209
      $region40: #{simple_segmentation_forward.5} parent=35 // pred_fallthru
        _
    $region36: #{simple_segmentation_forward.5} parent=5 // pred_fallthru
      _
    %p211 = scmp.le.s32.totalorder 1, %s12
    %p212 = scmp.lt.s32.totalorder %s12, 3
    %p213 = pnand %p211, %p212
    %p214 = pneg %p213
    // Predicated region
    $region41: #{simple_segmentation_forward.5} parent=5 // pred_check
      _
    $region42: #{simple_segmentation_forward.5} parent=5 // pred_check_branch
      %216 = sbr.rel (%p213) target = $region44
    $region43: #{simple_segmentation_forward.5} parent=5 // pred_region
      %s217 = ssub.s32 %s12, 1
      %p218 = scmp.lt.s32.totalorder %s17, 1
      %s219 = scalar_select %p218, %s17, 1
      %s220 = smul.addr %s219, 10
      %s221 = smul.addr %s220, 4
      %s222 = scalar_lea.vmem %s0, %s221
      %p223 = pneg %p38
      %p224 = pneg %p35
      %p225 = pneg %p59
      %p226 = pneg %p56
      %p227 = pneg %p80
      %p228 = pneg %p77
      %p229 = pneg %p101
      %p230 = pneg %p98
      %p231 = pneg %p122
      %p232 = pneg %p119
      %p233 = pneg %p143
      %p234 = pneg %p140
      %p235 = pneg %p169
      %p236 = pneg %p166
      %p237 = scmp.lt.s32.totalorder %s17, 1
      %s238 = scalar_select %p237, %s17, 1
      %s239 = smul.addr %s238, 2
      %s240 = scalar_lea.vmem %s6, %s239
      %p241 = scmp.lt.s32.totalorder %s17, 1
      %s242 = scalar_select %p241, %s17, 1
      %s243 = smul.addr %s242, 10
      %s244 = smul.addr %s243, 4
      %s245 = scalar_lea.vmem %s0, %s244
      %p246 = scmp.lt.s32.totalorder %s17, 1
      %s247 = scalar_select %p246, %s17, 1
      %s248 = smul.addr %s247, 2
      %s249 = scalar_lea.vmem %s6, %s248
      %v251 = vld [vmem:[%s1] sm:$0xf]
      %v252 = vld [vmem:[%s1 + $0x4] sm:$0x1]
      %v253 = vld [vmem:[%s245] sm:$0xf]
      %v256 = vunpack.c.l.b16 %v251
      %v257 = vunpack.c.l.b16 %v252
      %v258 = vpack.c.b16 %v257, %v256
      %vm259 = vcmask 80896
      %v261 = vsel %vm259, %v253, 0
      %vm263 = vcmask 1044480
      %v265 = vsel %vm263, %v258, 0
      %267 = vmatprep.subr.bf16.mxu0 0
      %268 = vmatpush1.bf16.msra.mxu0 %v265
      %269 = vmatprep.subr.bf16.mxu0 0
      %270 = vmatpush1.bf16.msra.mxu0 0
      %271 = vmatprep.subr.bf16.mxu0 0
      %272 = vmatpush1.bf16.msra.mxu0 0
      %273 = vmatprep.subr.bf16.mxu0 0
      %274 = vmatpush1.bf16.msra.mxu0 0
      %275 = vmatprep.subr.bf16.mxu0 0
      %276 = vmatpush1.bf16.msra.mxu0 0
      %277 = vmatprep.subr.bf16.mxu0 0
      %278 = vmatpush1.bf16.msra.mxu0 0
      %279 = vmatprep.subr.bf16.mxu0 0
      %280 = vmatpush1.bf16.msra.mxu0 0
      %281 = vmatprep.subr.bf16.mxu0 0
      %282 = vmatpush1.bf16.msra.mxu0 0
      %283 = vmatprep.subr.bf16.mxu0 0
      %284 = vmatpush1.bf16.msra.mxu0 0
      %285 = vmatprep.subr.bf16.mxu0 0
      %286 = vmatpush1.bf16.msra.mxu0 0
      %287 = vmatprep.subr.bf16.mxu0 0
      %288 = vmatpush1.bf16.msra.mxu0 0
      %289 = vmatprep.subr.bf16.mxu0 0
      %290 = vmatpush1.bf16.msra.mxu0 0
      %291 = vmatprep.subr.bf16.mxu0 0
      %292 = vmatpush1.bf16.msra.mxu0 0
      %293 = vmatprep.subr.bf16.mxu0 0
      %294 = vmatpush1.bf16.msra.mxu0 0
      %295 = vmatprep.subr.bf16.mxu0 0
      %296 = vmatpush1.bf16.msra.mxu0 0
      %297 = vmatprep.subr.bf16.mxu0 0
      %298 = vmatpush1.bf16.msra.mxu0 0
      %299 = vmatprep.mubr.bf16.mxu0 0
      %300 = vmatmul.mubr.bf16.gmra.mrb[0].mxu0 %v261
      %v301 = vpop.f32.mrb[0].mxu0
      %v302 = vadd.f32 0.0, %v301
      %v303 = vpop.f32.mrb[0].mxu0
      %v304 = vpop.f32.mrb[0].mxu0
      %v305 = vpop.f32.mrb[0].mxu0
      %306 = vdwg.mxu0
      %v307 = vpack.c.bf16 %v302, %v302
      %s308 = scalar_lea.vmem %s245, 4
      %v309 = vld [vmem:[%s308] sm:$0xf]
      %v311 = vsel %vm259, %v309, 0
      %313 = vmatprep.subr.bf16.mxu0 0
      %314 = vmatpush1.bf16.msra.mxu0 %v265
      %315 = vmatprep.subr.bf16.mxu0 0
      %316 = vmatpush1.bf16.msra.mxu0 0
      %317 = vmatprep.subr.bf16.mxu0 0
      %318 = vmatpush1.bf16.msra.mxu0 0
      %319 = vmatprep.subr.bf16.mxu0 0
      %320 = vmatpush1.bf16.msra.mxu0 0
      %321 = vmatprep.subr.bf16.mxu0 0
      %322 = vmatpush1.bf16.msra.mxu0 0
      %323 = vmatprep.subr.bf16.mxu0 0
      %324 = vmatpush1.bf16.msra.mxu0 0
      %325 = vmatprep.subr.bf16.mxu0 0
      %326 = vmatpush1.bf16.msra.mxu0 0
      %327 = vmatprep.subr.bf16.mxu0 0
      %328 = vmatpush1.bf16.msra.mxu0 0
      %329 = vmatprep.subr.bf16.mxu0 0
      %330 = vmatpush1.bf16.msra.mxu0 0
      %331 = vmatprep.subr.bf16.mxu0 0
      %332 = vmatpush1.bf16.msra.mxu0 0
      %333 = vmatprep.subr.bf16.mxu0 0
      %334 = vmatpush1.bf16.msra.mxu0 0
      %335 = vmatprep.subr.bf16.mxu0 0
      %336 = vmatpush1.bf16.msra.mxu0 0
      %337 = vmatprep.subr.bf16.mxu0 0
      %338 = vmatpush1.bf16.msra.mxu0 0
      %339 = vmatprep.subr.bf16.mxu0 0
      %340 = vmatpush1.bf16.msra.mxu0 0
      %341 = vmatprep.subr.bf16.mxu0 0
      %342 = vmatpush1.bf16.msra.mxu0 0
      %343 = vmatprep.subr.bf16.mxu0 0
      %344 = vmatpush1.bf16.msra.mxu0 0
      %345 = vmatprep.mubr.bf16.mxu0 0
      %346 = vmatmul.mubr.bf16.gmra.mrb[0].mxu0 %v311
      %v347 = vpop.f32.mrb[0].mxu0
      %v348 = vadd.f32 0.0, %v347
      %v349 = vpop.f32.mrb[0].mxu0
      %v350 = vpop.f32.mrb[0].mxu0
      %v351 = vpop.f32.mrb[0].mxu0
      %352 = vdwg.mxu0
      %v353 = vpack.c.bf16 %v348, %v348
      %s354 = scalar_lea.vmem %s245, 8
      %v355 = vld [vmem:[%s354] sm:$0xf]
      %v357 = vsel %vm259, %v355, 0
      %359 = vmatprep.subr.bf16.mxu0 0
      %360 = vmatpush1.bf16.msra.mxu0 %v265
      %361 = vmatprep.subr.bf16.mxu0 0
      %362 = vmatpush1.bf16.msra.mxu0 0
      %363 = vmatprep.subr.bf16.mxu0 0
      %364 = vmatpush1.bf16.msra.mxu0 0
      %365 = vmatprep.subr.bf16.mxu0 0
      %366 = vmatpush1.bf16.msra.mxu0 0
      %367 = vmatprep.subr.bf16.mxu0 0
      %368 = vmatpush1.bf16.msra.mxu0 0
      %369 = vmatprep.subr.bf16.mxu0 0
      %370 = vmatpush1.bf16.msra.mxu0 0
      %371 = vmatprep.subr.bf16.mxu0 0
      %372 = vmatpush1.bf16.msra.mxu0 0
      %373 = vmatprep.subr.bf16.mxu0 0
      %374 = vmatpush1.bf16.msra.mxu0 0
      %375 = vmatprep.subr.bf16.mxu0 0
      %376 = vmatpush1.bf16.msra.mxu0 0
      %377 = vmatprep.subr.bf16.mxu0 0
      %378 = vmatpush1.bf16.msra.mxu0 0
      %379 = vmatprep.subr.bf16.mxu0 0
      %380 = vmatpush1.bf16.msra.mxu0 0
      %381 = vmatprep.subr.bf16.mxu0 0
      %382 = vmatpush1.bf16.msra.mxu0 0
      %383 = vmatprep.subr.bf16.mxu0 0
      %384 = vmatpush1.bf16.msra.mxu0 0
      %385 = vmatprep.subr.bf16.mxu0 0
      %386 = vmatpush1.bf16.msra.mxu0 0
      %387 = vmatprep.subr.bf16.mxu0 0
      %388 = vmatpush1.bf16.msra.mxu0 0
      %389 = vmatprep.subr.bf16.mxu0 0
      %390 = vmatpush1.bf16.msra.mxu0 0
      %391 = vmatprep.mubr.bf16.mxu0 0
      %392 = vmatmul.mubr.bf16.gmra.mrb[0].mxu0 %v357
      %v393 = vpop.f32.mrb[0].mxu0
      %v394 = vadd.f32 0.0, %v393
      %v395 = vpop.f32.mrb[0].mxu0
      %v396 = vpop.f32.mrb[0].mxu0
      %v397 = vpop.f32.mrb[0].mxu0
      %398 = vdwg.mxu0
      %v399 = vpack.c.bf16 %v394, %v394
      %s400 = scalar_lea.vmem %s245, 12
      %v401 = vld [vmem:[%s400] sm:$0xf]
      %v403 = vsel %vm259, %v401, 0
      %405 = vmatprep.subr.bf16.mxu0 0
      %406 = vmatpush1.bf16.msra.mxu0 %v265
      %407 = vmatprep.subr.bf16.mxu0 0
      %408 = vmatpush1.bf16.msra.mxu0 0
      %409 = vmatprep.subr.bf16.mxu0 0
      %410 = vmatpush1.bf16.msra.mxu0 0
      %411 = vmatprep.subr.bf16.mxu0 0
      %412 = vmatpush1.bf16.msra.mxu0 0
      %413 = vmatprep.subr.bf16.mxu0 0
      %414 = vmatpush1.bf16.msra.mxu0 0
      %415 = vmatprep.subr.bf16.mxu0 0
      %416 = vmatpush1.bf16.msra.mxu0 0
      %417 = vmatprep.subr.bf16.mxu0 0
      %418 = vmatpush1.bf16.msra.mxu0 0
      %419 = vmatprep.subr.bf16.mxu0 0
      %420 = vmatpush1.bf16.msra.mxu0 0
      %421 = vmatprep.subr.bf16.mxu0 0
      %422 = vmatpush1.bf16.msra.mxu0 0
      %423 = vmatprep.subr.bf16.mxu0 0
      %424 = vmatpush1.bf16.msra.mxu0 0
      %425 = vmatprep.subr.bf16.mxu0 0
      %426 = vmatpush1.bf16.msra.mxu0 0
      %427 = vmatprep.subr.bf16.mxu0 0
      %428 = vmatpush1.bf16.msra.mxu0 0
      %429 = vmatprep.subr.bf16.mxu0 0
      %430 = vmatpush1.bf16.msra.mxu0 0
      %431 = vmatprep.subr.bf16.mxu0 0
      %432 = vmatpush1.bf16.msra.mxu0 0
      %433 = vmatprep.subr.bf16.mxu0 0
      %434 = vmatpush1.bf16.msra.mxu0 0
      %435 = vmatprep.subr.bf16.mxu0 0
      %436 = vmatpush1.bf16.msra.mxu0 0
      %437 = vmatprep.mubr.bf16.mxu0 0
      %438 = vmatmul.mubr.bf16.gmra.mrb[0].mxu0 %v403
      %v439 = vpop.f32.mrb[0].mxu0
      %v440 = vadd.f32 0.0, %v439
      %v441 = vpop.f32.mrb[0].mxu0
      %v442 = vpop.f32.mrb[0].mxu0
      %v443 = vpop.f32.mrb[0].mxu0
      %444 = vdwg.mxu0
      %v445 = vpack.c.bf16 %v440, %v440
      %s446 = scalar_lea.vmem %s245, 16
      %v447 = vld [vmem:[%s446] sm:$0xf]
      %v449 = vsel %vm259, %v447, 0
      %451 = vmatprep.subr.bf16.mxu0 0
      %452 = vmatpush1.bf16.msra.mxu0 %v265
      %453 = vmatprep.subr.bf16.mxu0 0
      %454 = vmatpush1.bf16.msra.mxu0 0
      %455 = vmatprep.subr.bf16.mxu0 0
      %456 = vmatpush1.bf16.msra.mxu0 0
      %457 = vmatprep.subr.bf16.mxu0 0
      %458 = vmatpush1.bf16.msra.mxu0 0
      %459 = vmatprep.subr.bf16.mxu0 0
      %460 = vmatpush1.bf16.msra.mxu0 0
      %461 = vmatprep.subr.bf16.mxu0 0
      %462 = vmatpush1.bf16.msra.mxu0 0
      %463 = vmatprep.subr.bf16.mxu0 0
      %464 = vmatpush1.bf16.msra.mxu0 0
      %465 = vmatprep.subr.bf16.mxu0 0
      %466 = vmatpush1.bf16.msra.mxu0 0
      %467 = vmatprep.subr.bf16.mxu0 0
      %468 = vmatpush1.bf16.msra.mxu0 0
      %469 = vmatprep.subr.bf16.mxu0 0
      %470 = vmatpush1.bf16.msra.mxu0 0
      %471 = vmatprep.subr.bf16.mxu0 0
      %472 = vmatpush1.bf16.msra.mxu0 0
      %473 = vmatprep.subr.bf16.mxu0 0
      %474 = vmatpush1.bf16.msra.mxu0 0
      %475 = vmatprep.subr.bf16.mxu0 0
      %476 = vmatpush1.bf16.msra.mxu0 0
      %477 = vmatprep.subr.bf16.mxu0 0
      %478 = vmatpush1.bf16.msra.mxu0 0
      %479 = vmatprep.subr.bf16.mxu0 0
      %480 = vmatpush1.bf16.msra.mxu0 0
      %481 = vmatprep.subr.bf16.mxu0 0
      %482 = vmatpush1.bf16.msra.mxu0 0
      %483 = vmatprep.mubr.bf16.mxu0 0
      %484 = vmatmul.mubr.bf16.gmra.mrb[0].mxu0 %v449
      %v485 = vpop.f32.mrb[0].mxu0
      %v486 = vadd.f32 0.0, %v485
      %v487 = vpop.f32.mrb[0].mxu0
      %v488 = vpop.f32.mrb[0].mxu0
      %v489 = vpop.f32.mrb[0].mxu0
      %490 = vdwg.mxu0
      %v491 = vpack.c.bf16 %v486, %v486
      %s492 = scalar_lea.vmem %s245, 20
      %v493 = vld [vmem:[%s492] sm:$0xf]
      %v495 = vsel %vm259, %v493, 0
      %497 = vmatprep.subr.bf16.mxu0 0
      %498 = vmatpush1.bf16.msra.mxu0 %v265
      %499 = vmatprep.subr.bf16.mxu0 0
      %500 = vmatpush1.bf16.msra.mxu0 0
      %501 = vmatprep.subr.bf16.mxu0 0
      %502 = vmatpush1.bf16.msra.mxu0 0
      %503 = vmatprep.subr.bf16.mxu0 0
      %504 = vmatpush1.bf16.msra.mxu0 0
      %505 = vmatprep.subr.bf16.mxu0 0
      %506 = vmatpush1.bf16.msra.mxu0 0
      %507 = vmatprep.subr.bf16.mxu0 0
      %508 = vmatpush1.bf16.msra.mxu0 0
      %509 = vmatprep.subr.bf16.mxu0 0
      %510 = vmatpush1.bf16.msra.mxu0 0
      %511 = vmatprep.subr.bf16.mxu0 0
      %512 = vmatpush1.bf16.msra.mxu0 0
      %513 = vmatprep.subr.bf16.mxu0 0
      %514 = vmatpush1.bf16.msra.mxu0 0
      %515 = vmatprep.subr.bf16.mxu0 0
      %516 = vmatpush1.bf16.msra.mxu0 0
      %517 = vmatprep.subr.bf16.mxu0 0
      %518 = vmatpush1.bf16.msra.mxu0 0
      %519 = vmatprep.subr.bf16.mxu0 0
      %520 = vmatpush1.bf16.msra.mxu0 0
      %521 = vmatprep.subr.bf16.mxu0 0
      %522 = vmatpush1.bf16.msra.mxu0 0
      %523 = vmatprep.subr.bf16.mxu0 0
      %524 = vmatpush1.bf16.msra.mxu0 0
      %525 = vmatprep.subr.bf16.mxu0 0
      %526 = vmatpush1.bf16.msra.mxu0 0
      %527 = vmatprep.subr.bf16.mxu0 0
      %528 = vmatpush1.bf16.msra.mxu0 0
      %529 = vmatprep.mubr.bf16.mxu0 0
      %530 = vmatmul.mubr.bf16.gmra.mrb[0].mxu0 %v495
      %v531 = vpop.f32.mrb[0].mxu0
      %v532 = vadd.f32 0.0, %v531
      %v533 = vpop.f32.mrb[0].mxu0
      %v534 = vpop.f32.mrb[0].mxu0
      %v535 = vpop.f32.mrb[0].mxu0
      %536 = vdwg.mxu0
      %v537 = vpack.c.bf16 %v532, %v532
      %s538 = scalar_lea.vmem %s245, 24
      %v539 = vld [vmem:[%s538] sm:$0xf]
      %v541 = vsel %vm259, %v539, 0
      %543 = vmatprep.subr.bf16.mxu0 0
      %544 = vmatpush1.bf16.msra.mxu0 %v265
      %545 = vmatprep.subr.bf16.mxu0 0
      %546 = vmatpush1.bf16.msra.mxu0 0
      %547 = vmatprep.subr.bf16.mxu0 0
      %548 = vmatpush1.bf16.msra.mxu0 0
      %549 = vmatprep.subr.bf16.mxu0 0
      %550 = vmatpush1.bf16.msra.mxu0 0
      %551 = vmatprep.subr.bf16.mxu0 0
      %552 = vmatpush1.bf16.msra.mxu0 0
      %553 = vmatprep.subr.bf16.mxu0 0
      %554 = vmatpush1.bf16.msra.mxu0 0
      %555 = vmatprep.subr.bf16.mxu0 0
      %556 = vmatpush1.bf16.msra.mxu0 0
      %557 = vmatprep.subr.bf16.mxu0 0
      %558 = vmatpush1.bf16.msra.mxu0 0
      %559 = vmatprep.subr.bf16.mxu0 0
      %560 = vmatpush1.bf16.msra.mxu0 0
      %561 = vmatprep.subr.bf16.mxu0 0
      %562 = vmatpush1.bf16.msra.mxu0 0
      %563 = vmatprep.subr.bf16.mxu0 0
      %564 = vmatpush1.bf16.msra.mxu0 0
      %565 = vmatprep.subr.bf16.mxu0 0
      %566 = vmatpush1.bf16.msra.mxu0 0
      %567 = vmatprep.subr.bf16.mxu0 0
      %568 = vmatpush1.bf16.msra.mxu0 0
      %569 = vmatprep.subr.bf16.mxu0 0
      %570 = vmatpush1.bf16.msra.mxu0 0
      %571 = vmatprep.subr.bf16.mxu0 0
      %572 = vmatpush1.bf16.msra.mxu0 0
      %573 = vmatprep.subr.bf16.mxu0 0
      %574 = vmatpush1.bf16.msra.mxu0 0
      %575 = vmatprep.mubr.bf16.mxu0 0
      %576 = vmatmul.mubr.bf16.gmra.mrb[0].mxu0 %v541
      %v577 = vpop.f32.mrb[0].mxu0
      %v578 = vadd.f32 0.0, %v577
      %v579 = vpop.f32.mrb[0].mxu0
      %v580 = vpop.f32.mrb[0].mxu0
      %v581 = vpop.f32.mrb[0].mxu0
      %582 = vdwg.mxu0
      %v583 = vpack.c.bf16 %v578, %v578
      %s584 = scalar_lea.vmem %s245, 28
      %v585 = vld [vmem:[%s584] sm:$0xf]
      %v587 = vsel %vm259, %v585, 0
      %589 = vmatprep.subr.bf16.mxu0 0
      %590 = vmatpush1.bf16.msra.mxu0 %v265
      %591 = vmatprep.subr.bf16.mxu0 0
      %592 = vmatpush1.bf16.msra.mxu0 0
      %593 = vmatprep.subr.bf16.mxu0 0
      %594 = vmatpush1.bf16.msra.mxu0 0
      %595 = vmatprep.subr.bf16.mxu0 0
      %596 = vmatpush1.bf16.msra.mxu0 0
      %597 = vmatprep.subr.bf16.mxu0 0
      %598 = vmatpush1.bf16.msra.mxu0 0
      %599 = vmatprep.subr.bf16.mxu0 0
      %600 = vmatpush1.bf16.msra.mxu0 0
      %601 = vmatprep.subr.bf16.mxu0 0
      %602 = vmatpush1.bf16.msra.mxu0 0
      %603 = vmatprep.subr.bf16.mxu0 0
      %604 = vmatpush1.bf16.msra.mxu0 0
      %605 = vmatprep.subr.bf16.mxu0 0
      %606 = vmatpush1.bf16.msra.mxu0 0
      %607 = vmatprep.subr.bf16.mxu0 0
      %608 = vmatpush1.bf16.msra.mxu0 0
      %609 = vmatprep.subr.bf16.mxu0 0
      %610 = vmatpush1.bf16.msra.mxu0 0
      %611 = vmatprep.subr.bf16.mxu0 0
      %612 = vmatpush1.bf16.msra.mxu0 0
      %613 = vmatprep.subr.bf16.mxu0 0
      %614 = vmatpush1.bf16.msra.mxu0 0
      %615 = vmatprep.subr.bf16.mxu0 0
      %616 = vmatpush1.bf16.msra.mxu0 0
      %617 = vmatprep.subr.bf16.mxu0 0
      %618 = vmatpush1.bf16.msra.mxu0 0
      %619 = vmatprep.subr.bf16.mxu0 0
      %620 = vmatpush1.bf16.msra.mxu0 0
      %621 = vmatprep.mubr.bf16.mxu0 0
      %622 = vmatmul.mubr.bf16.gmra.mrb[0].mxu0 %v587
      %v623 = vpop.f32.mrb[0].mxu0
      %v624 = vadd.f32 0.0, %v623
      %v625 = vpop.f32.mrb[0].mxu0
      %v626 = vpop.f32.mrb[0].mxu0
      %v627 = vpop.f32.mrb[0].mxu0
      %628 = vdwg.mxu0
      %v629 = vpack.c.bf16 %v624, %v624
      %s630 = scalar_lea.vmem %s245, 32
      %v631 = vld [vmem:[%s630] sm:$0xf]
      %v633 = vsel %vm259, %v631, 0
      %635 = vmatprep.subr.bf16.mxu0 0
      %636 = vmatpush1.bf16.msra.mxu0 %v265
      %637 = vmatprep.subr.bf16.mxu0 0
      %638 = vmatpush1.bf16.msra.mxu0 0
      %639 = vmatprep.subr.bf16.mxu0 0
      %640 = vmatpush1.bf16.msra.mxu0 0
      %641 = vmatprep.subr.bf16.mxu0 0
      %642 = vmatpush1.bf16.msra.mxu0 0
      %643 = vmatprep.subr.bf16.mxu0 0
      %644 = vmatpush1.bf16.msra.mxu0 0
      %645 = vmatprep.subr.bf16.mxu0 0
      %646 = vmatpush1.bf16.msra.mxu0 0
      %647 = vmatprep.subr.bf16.mxu0 0
      %648 = vmatpush1.bf16.msra.mxu0 0
      %649 = vmatprep.subr.bf16.mxu0 0
      %650 = vmatpush1.bf16.msra.mxu0 0
      %651 = vmatprep.subr.bf16.mxu0 0
      %652 = vmatpush1.bf16.msra.mxu0 0
      %653 = vmatprep.subr.bf16.mxu0 0
      %654 = vmatpush1.bf16.msra.mxu0 0
      %655 = vmatprep.subr.bf16.mxu0 0
      %656 = vmatpush1.bf16.msra.mxu0 0
      %657 = vmatprep.subr.bf16.mxu0 0
      %658 = vmatpush1.bf16.msra.mxu0 0
      %659 = vmatprep.subr.bf16.mxu0 0
      %660 = vmatpush1.bf16.msra.mxu0 0
      %661 = vmatprep.subr.bf16.mxu0 0
      %662 = vmatpush1.bf16.msra.mxu0 0
      %663 = vmatprep.subr.bf16.mxu0 0
      %664 = vmatpush1.bf16.msra.mxu0 0
      %665 = vmatprep.subr.bf16.mxu0 0
      %666 = vmatpush1.bf16.msra.mxu0 0
      %667 = vmatprep.mubr.bf16.mxu0 0
      %668 = vmatmul.mubr.bf16.gmra.mrb[0].mxu0 %v633
      %v669 = vpop.f32.mrb[0].mxu0
      %v670 = vadd.f32 0.0, %v669
      %v671 = vpop.f32.mrb[0].mxu0
      %v672 = vpop.f32.mrb[0].mxu0
      %v673 = vpop.f32.mrb[0].mxu0
      %674 = vdwg.mxu0
      %v675 = vpack.c.bf16 %v670, %v670
      %vm676 = vcmask 27648
      %677 = vst.msk [vmem:[#allocation2] sm:$0xf] %vm676, %v307
      %v679 = vunpack.c.l.b16 %v307
      %v680 = vpack.c.b16 %v679, %v679
      %681 = vrot.lane.b32.xlu0 %v680, 123
      %v682 = vpop.permute.xlu0 %681
      %684 = vst.msk [vmem:[#allocation2 + $0x4] sm:$0xf] %vm676, %v682
      %685 = vrot.lane.b32.xlu0 %v680, 127
      %v686 = vpop.permute.xlu0 %685
      %688 = vst.msk [vmem:[#allocation2 + $0x8] sm:$0xf] %vm676, %v686
      %689 = vst.msk [vmem:[#allocation2 + $0xc] sm:$0xf] %vm676, %v353
      %v691 = vunpack.c.l.b16 %v353
      %v692 = vpack.c.b16 %v691, %v691
      %693 = vrot.lane.b32.xlu0 %v692, 123
      %v694 = vpop.permute.xlu0 %693
      %696 = vst.msk [vmem:[#allocation2 + $0x10] sm:$0xf] %vm676, %v694
      %697 = vrot.lane.b32.xlu0 %v692, 127
      %v698 = vpop.permute.xlu0 %697
      %700 = vst.msk [vmem:[#allocation2 + $0x14] sm:$0xf] %vm676, %v698
      %701 = vst.msk [vmem:[#allocation2 + $0x18] sm:$0xf] %vm676, %v399
      %v703 = vunpack.c.l.b16 %v399
      %v704 = vpack.c.b16 %v703, %v703
      %705 = vrot.lane.b32.xlu0 %v704, 123
      %v706 = vpop.permute.xlu0 %705
      %708 = vst.msk [vmem:[#allocation2 + $0x1c] sm:$0xf] %vm676, %v706
      %709 = vrot.lane.b32.xlu0 %v704, 127
      %v710 = vpop.permute.xlu0 %709
      %712 = vst.msk [vmem:[#allocation2 + $0x20] sm:$0xf] %vm676, %v710
      %713 = vrot.lane.b32.xlu0 %v704, 4
      %v714 = vpop.permute.xlu0 %713
      %vm716 = vcmask 60448
      %717 = vst.msk [vmem:[#allocation2] sm:$0xf] %vm716, %v714
      %718 = vst.msk [vmem:[#allocation2 + $0x4] sm:$0xf] %vm716, %v710
      %719 = vrot.lane.b32.xlu0 %v704, 3
      %v720 = vpop.permute.xlu0 %719
      %722 = vst.msk [vmem:[#allocation2 + $0x8] sm:$0xf] %vm716, %v720
      %v724 = vunpack.c.l.b16 %v445
      %v725 = vpack.c.b16 %v724, %v724
      %726 = vrot.lane.b32.xlu0 %v725, 4
      %v727 = vpop.permute.xlu0 %726
      %729 = vst.msk [vmem:[#allocation2 + $0xc] sm:$0xf] %vm716, %v727
      %730 = vrot.lane.b32.xlu0 %v725, 127
      %v731 = vpop.permute.xlu0 %730
      %733 = vst.msk [vmem:[#allocation2 + $0x10] sm:$0xf] %vm716, %v731
      %734 = vrot.lane.b32.xlu0 %v725, 3
      %v735 = vpop.permute.xlu0 %734
      %737 = vst.msk [vmem:[#allocation2 + $0x14] sm:$0xf] %vm716, %v735
      %v739 = vunpack.c.l.b16 %v491
      %v740 = vpack.c.b16 %v739, %v739
      %741 = vrot.lane.b32.xlu0 %v740, 4
      %v742 = vpop.permute.xlu0 %741
      %744 = vst.msk [vmem:[#allocation2 + $0x18] sm:$0xf] %vm716, %v742
      %745 = vrot.lane.b32.xlu0 %v740, 127
      %v746 = vpop.permute.xlu0 %745
      %748 = vst.msk [vmem:[#allocation2 + $0x1c] sm:$0xf] %vm716, %v746
      %749 = vrot.lane.b32.xlu0 %v740, 3
      %v750 = vpop.permute.xlu0 %749
      %752 = vst.msk [vmem:[#allocation2 + $0x20] sm:$0xf] %vm716, %v750
      %753 = vrot.lane.b32.xlu0 %v740, 8
      %v754 = vpop.permute.xlu0 %753
      %vm756 = vcmask 93248
      %757 = vst.msk [vmem:[#allocation2] sm:$0xf] %vm756, %v754
      %758 = vst.msk [vmem:[#allocation2 + $0x4] sm:$0xf] %vm756, %v750
      %759 = vrot.lane.b32.xlu0 %v740, 7
      %v760 = vpop.permute.xlu0 %759
      %762 = vst.msk [vmem:[#allocation2 + $0x8] sm:$0xf] %vm756, %v760
      %v764 = vunpack.c.l.b16 %v537
      %v765 = vpack.c.b16 %v764, %v764
      %766 = vrot.lane.b32.xlu0 %v765, 8
      %v767 = vpop.permute.xlu0 %766
      %769 = vst.msk [vmem:[#allocation2 + $0xc] sm:$0xf] %vm756, %v767
      %770 = vrot.lane.b32.xlu0 %v765, 3
      %v771 = vpop.permute.xlu0 %770
      %773 = vst.msk [vmem:[#allocation2 + $0x10] sm:$0xf] %vm756, %v771
      %774 = vrot.lane.b32.xlu0 %v765, 7
      %v775 = vpop.permute.xlu0 %774
      %777 = vst.msk [vmem:[#allocation2 + $0x14] sm:$0xf] %vm756, %v775
      %v779 = vunpack.c.l.b16 %v583
      %v780 = vpack.c.b16 %v779, %v779
      %781 = vrot.lane.b32.xlu0 %v780, 8
      %v782 = vpop.permute.xlu0 %781
      %784 = vst.msk [vmem:[#allocation2 + $0x18] sm:$0xf] %vm756, %v782
      %785 = vrot.lane.b32.xlu0 %v780, 3
      %v786 = vpop.permute.xlu0 %785
      %788 = vst.msk [vmem:[#allocation2 + $0x1c] sm:$0xf] %vm756, %v786
      %789 = vrot.lane.b32.xlu0 %v780, 7
      %v790 = vpop.permute.xlu0 %789
      %792 = vst.msk [vmem:[#allocation2 + $0x20] sm:$0xf] %vm756, %v790
      %793 = vrot.lane.b32.xlu0 %v780, 12
      %v794 = vpop.permute.xlu0 %793
      %vm796 = vcmask 126048
      %797 = vst.msk [vmem:[#allocation2] sm:$0xf] %vm796, %v794
      %798 = vst.msk [vmem:[#allocation2 + $0x4] sm:$0xf] %vm796, %v790
      %799 = vrot.lane.b32.xlu0 %v780, 11
      %v800 = vpop.permute.xlu0 %799
      %802 = vst.msk [vmem:[#allocation2 + $0x8] sm:$0xf] %vm796, %v800
      %v804 = vunpack.c.l.b16 %v629
      %v805 = vpack.c.b16 %v804, %v804
      %806 = vrot.lane.b32.xlu0 %v805, 12
      %v807 = vpop.permute.xlu0 %806
      %809 = vst.msk [vmem:[#allocation2 + $0xc] sm:$0xf] %vm796, %v807
      %810 = vrot.lane.b32.xlu0 %v805, 7
      %v811 = vpop.permute.xlu0 %810
      %813 = vst.msk [vmem:[#allocation2 + $0x10] sm:$0xf] %vm796, %v811
      %814 = vrot.lane.b32.xlu0 %v805, 11
      %v815 = vpop.permute.xlu0 %814
      %817 = vst.msk [vmem:[#allocation2 + $0x14] sm:$0xf] %vm796, %v815
      %v819 = vunpack.c.l.b16 %v675
      %v820 = vpack.c.b16 %v819, %v819
      %821 = vrot.lane.b32.xlu0 %v820, 12
      %v822 = vpop.permute.xlu0 %821
      %824 = vst.msk [vmem:[#allocation2 + $0x18] sm:$0xf] %vm796, %v822
      %825 = vrot.lane.b32.xlu0 %v820, 7
      %v826 = vpop.permute.xlu0 %825
      %828 = vst.msk [vmem:[#allocation2 + $0x1c] sm:$0xf] %vm796, %v826
      %829 = vrot.lane.b32.xlu0 %v820, 11
      %v830 = vpop.permute.xlu0 %829
      %832 = vst.msk [vmem:[#allocation2 + $0x20] sm:$0xf] %vm796, %v830
      %v833 = vld [vmem:[#allocation2] sm:$0xf]
      %v834 = vld [vmem:[#allocation2 + $0x4] sm:$0xf]
      %v835 = vld [vmem:[#allocation2 + $0x8] sm:$0xf]
      %v836 = vld [vmem:[#allocation2 + $0xc] sm:$0xf]
      %v837 = vld [vmem:[#allocation2 + $0x10] sm:$0xf]
      %v838 = vld [vmem:[#allocation2 + $0x14] sm:$0xf]
      %v839 = vld [vmem:[#allocation2 + $0x18] sm:$0xf]
      %v840 = vld [vmem:[#allocation2 + $0x1c] sm:$0xf]
      %v841 = vld [vmem:[#allocation2 + $0x20] sm:$0xf]
      %v842 = vld [vmem:[%s2] sm:$0xf]
      %v843 = vld [vmem:[%s2 + $0x4] sm:$0xf]
      %v844 = vld [vmem:[%s3] sm:$0xff]
      %v845 = vld [vmem:[%s3 + $0x8] sm:$0xff]
      %847 = vset.pattern.permute.xlu0 0
      %848 = vperm.xlu0 %847, %v844
      %v849 = vpop.permute.xlu0 %848
      %852 = vset.pattern.permute.xlu0 0
      %853 = vperm.xlu0 %852, %v845
      %v854 = vpop.permute.xlu0 %853
      %v858 = vunpack.c.l.b16 %v842
      %v859 = vunpack.c.l.b16 %v843
      %v860 = vpack.c.b16 %v859, %v858
      %v870 = vunpack.c.l.b16 %v833
      %v871 = vunpack.c.l.b16 %v834
      %v872 = vunpack.c.l.b16 %v835
      %v873 = vunpack.c.l.b16 %v836
      %v874 = vunpack.c.l.b16 %v837
      %v875 = vunpack.c.l.b16 %v838
      %v876 = vunpack.c.l.b16 %v839
      %v877 = vunpack.c.l.b16 %v840
      %v878 = vunpack.c.l.b16 %v841
      %v879 = vpack.c.b16 %v871, %v870
      %v880 = vpack.c.b16 %v873, %v872
      %v881 = vpack.c.b16 %v875, %v874
      %v882 = vpack.c.b16 %v877, %v876
      %v883 = vpack.c.b16 %v878, %v878
      %vm888 = vcmask 588800
      %v890 = vsel %vm888, %v860, 0
      %vm892 = vcmask 1043456
      %v894 = vsel %vm892, %v883, 0
      %896 = vmatprep.subr.bf16.mxu0 0
      %897 = vmatpush1.bf16.msra.mxu0 %v879
      %898 = vmatprep.subr.bf16.mxu0 0
      %899 = vmatpush1.bf16.msra.mxu0 %v880
      %900 = vmatprep.subr.bf16.mxu0 0
      %901 = vmatpush1.bf16.msra.mxu0 %v881
      %902 = vmatprep.subr.bf16.mxu0 0
      %903 = vmatpush1.bf16.msra.mxu0 %v882
      %904 = vmatprep.subr.bf16.mxu0 0
      %905 = vmatpush1.bf16.msra.mxu0 %v894
      %906 = vmatprep.subr.bf16.mxu0 0
      %907 = vmatpush1.bf16.msra.mxu0 0
      %908 = vmatprep.subr.bf16.mxu0 0
      %909 = vmatpush1.bf16.msra.mxu0 0
      %910 = vmatprep.subr.bf16.mxu0 0
      %911 = vmatpush1.bf16.msra.mxu0 0
      %912 = vmatprep.subr.bf16.mxu0 0
      %913 = vmatpush1.bf16.msra.mxu0 0
      %914 = vmatprep.subr.bf16.mxu0 0
      %915 = vmatpush1.bf16.msra.mxu0 0
      %916 = vmatprep.subr.bf16.mxu0 0
      %917 = vmatpush1.bf16.msra.mxu0 0
      %918 = vmatprep.subr.bf16.mxu0 0
      %919 = vmatpush1.bf16.msra.mxu0 0
      %920 = vmatprep.subr.bf16.mxu0 0
      %921 = vmatpush1.bf16.msra.mxu0 0
      %922 = vmatprep.subr.bf16.mxu0 0
      %923 = vmatpush1.bf16.msra.mxu0 0
      %924 = vmatprep.subr.bf16.mxu0 0
      %925 = vmatpush1.bf16.msra.mxu0 0
      %926 = vmatprep.subr.bf16.mxu0 0
      %927 = vmatpush1.bf16.msra.mxu0 0
      %928 = vmatprep.mubr.bf16.mxu0 0
      %929 = vmatmul.mubr.bf16.gmra.mrb[0].mxu0 %v890
      %v930 = vpop.f32.mrb[0].mxu0
      %v931 = vadd.f32 %v849, %v930
      %v932 = vpop.f32.mrb[0].mxu0
      %v933 = vpop.f32.mrb[0].mxu0
      %v934 = vadd.f32 %v854, %v933
      %v935 = vpop.f32.mrb[0].mxu0
      %936 = vdwg.mxu0
      %v937 = vmax.f32 %v931, 0.0
      %v938 = vmax.f32 %v934, 0.0
      %v939 = vpack.c.bf16 %v938, %v937
      %v940 = vld [vmem:[%s4] sm:$0x3]
      %v941 = vld [vmem:[%s5] sm:$0x7]
      %943 = vset.pattern.permute.xlu0 0
      %944 = vperm.xlu0 %943, %v941
      %v945 = vpop.permute.xlu0 %944
      %vm947 = vcmask 130048
      %v949 = vsel %vm947, %v940, 0
      %951 = vmatprep.subr.bf16.mxu0 0
      %952 = vmatpush1.bf16.msra.mxu0 %v939
      %953 = vmatprep.subr.bf16.mxu0 0
      %954 = vmatpush1.bf16.msra.mxu0 0
      %955 = vmatprep.subr.bf16.mxu0 0
      %956 = vmatpush1.bf16.msra.mxu0 0
      %957 = vmatprep.subr.bf16.mxu0 0
      %958 = vmatpush1.bf16.msra.mxu0 0
      %959 = vmatprep.subr.bf16.mxu0 0
      %960 = vmatpush1.bf16.msra.mxu0 0
      %961 = vmatprep.subr.bf16.mxu0 0
      %962 = vmatpush1.bf16.msra.mxu0 0
      %963 = vmatprep.subr.bf16.mxu0 0
      %964 = vmatpush1.bf16.msra.mxu0 0
      %965 = vmatprep.subr.bf16.mxu0 0
      %966 = vmatpush1.bf16.msra.mxu0 0
      %967 = vmatprep.subr.bf16.mxu0 0
      %968 = vmatpush1.bf16.msra.mxu0 0
      %969 = vmatprep.subr.bf16.mxu0 0
      %970 = vmatpush1.bf16.msra.mxu0 0
      %971 = vmatprep.subr.bf16.mxu0 0
      %972 = vmatpush1.bf16.msra.mxu0 0
      %973 = vmatprep.subr.bf16.mxu0 0
      %974 = vmatpush1.bf16.msra.mxu0 0
      %975 = vmatprep.subr.bf16.mxu0 0
      %976 = vmatpush1.bf16.msra.mxu0 0
      %977 = vmatprep.subr.bf16.mxu0 0
      %978 = vmatpush1.bf16.msra.mxu0 0
      %979 = vmatprep.subr.bf16.mxu0 0
      %980 = vmatpush1.bf16.msra.mxu0 0
      %981 = vmatprep.subr.bf16.mxu0 0
      %982 = vmatpush1.bf16.msra.mxu0 0
      %983 = vmatprep.mubr.bf16.mxu0 0
      %984 = vmatmul.mubr.bf16.gmra.mrb[0].mxu0 %v949
      %v985 = vpop.f32.mrb[0].mxu0
      %v986 = vadd.f32 %v945, %v985
      %v987 = vpop.f32.mrb[0].mxu0
      %v988 = vpop.f32.mrb[0].mxu0
      %v989 = vpop.f32.mrb[0].mxu0
      %990 = vdwg.mxu0
      %v991 = vpack.c.bf16 %v986, %v986
      %vm992 = vcmask 123904
      %vm993 = vsmask.f32 1280
      %vm994 = vmand %vm992, %vm993
      %v995 = vld [vmem:[%s249] sm:$0x3]
      %v996 = vsel %vm994, %v991, %v995
      %997 = vst [vmem:[%s249] sm:$0x3] %v996
      %p998 = scmp.lt.s32.totalorder %s17, 1
      %s999 = scalar_select %p998, %s17, 1
      %s1000 = smul.addr %s999, 2
      %s1001 = scalar_lea.vmem %s6, %s1000
      // Predicated region
      $region45: #{simple_segmentation_forward.5} parent=43 // pred_check
        %p1002 = pneg %p166
      $region46: #{simple_segmentation_forward.5} parent=43 // pred_check_branch
        %1004 = sbr.rel (%p1002) target = $region48
      $region47: #{simple_segmentation_forward.5} parent=43 // pred_region
        _
      $region48: #{simple_segmentation_forward.5} parent=43 // pred_fallthru
        _
    $region44: #{simple_segmentation_forward.5} parent=5 // pred_fallthru
      _
    %p1005 = scmp.le.s32.totalorder 2, %s12
    // Predicated region
    $region49: #{simple_segmentation_forward.5} parent=5 // pred_check
      %p1006 = pneg %p1005
    $region50: #{simple_segmentation_forward.5} parent=5 // pred_check_branch
      %1008 = sbr.rel (%p1006) target = $region52
    $region51: #{simple_segmentation_forward.5} parent=5 // pred_region
      %s1009 = ssub.s32 %s12, 2
      // Predicated region
      $region53: #{simple_segmentation_forward.5} parent=51 // pred_check
        %p1010 = pneg %p172
      $region54: #{simple_segmentation_forward.5} parent=51 // pred_check_branch
        %1012 = sbr.rel (%p1010) target = $region56
      $region55: #{simple_segmentation_forward.5} parent=51 // pred_region
        %p1013 = scmp.lt.s32.totalorder %s18, 1
        %s1014 = scalar_select %p1013, %s18, 1
        %s1015 = smul.addr %s1014, 2
        %s1016 = scalar_lea.vmem %s6, %s1015
      $region56: #{simple_segmentation_forward.5} parent=51 // pred_fallthru
        _
    $region52: #{simple_segmentation_forward.5} parent=5 // pred_fallthru
      _
  $region6: #{simple_segmentation_forward.5} parent=0 // loop_footer
    %s16 = sadd.s32 1, %s12
  $region7: #{simple_segmentation_forward.5} parent=0 // loop_footer_branch
    %11 = sbr.rel target = $region3
  $region8: #{simple_segmentation_forward.5} parent=0 // loop_exit
    _

// kernel: simple_segmentation_forward.4
$region0: #{simple_segmentation_forward.4}
  #allocation0 [shape = 'u32[]', space=smem, size = 0x4, offset = 0x4, fixed_abs, tag = 'smem constant byte address 0x4 - core index']
  #allocation1 [shape = 'u32[144,128]{1,0:T(1,128)}', space=vmem, size = 0x12000, scoped, tag = 'internal scratch']
  #allocation2 [shape = 'bf16[36,64]{1,0:T(8,128)(2,1)}', space=vmem, size = 0x2800, scoped, tag = 'scratch operand']
  %s0 = inlined_call_operand.vmem [shape: bf16[2,18,4,18], index: 0, kind: input, shape index: {}]
  %s1 = inlined_call_operand.vmem [shape: bf16[18,17], index: 1, kind: input, shape index: {}]
  %s2 = inlined_call_operand.vmem [shape: bf16[8,36], index: 2, kind: input, shape index: {}]
  %s3 = inlined_call_operand.vmem [shape: f32[8,1], index: 3, kind: input, shape index: {}]
  %s4 = inlined_call_operand.vmem [shape: bf16[3,8], index: 4, kind: input, shape index: {}]
  %s5 = inlined_call_operand.vmem [shape: f32[3,1], index: 5, kind: input, shape index: {}]
  %s6 = inlined_call_operand.vmem [shape: bf16[2,10,8,10], index: 6, kind: output, shape index: {0}]
  %s7 = inlined_call_operand.vmem [shape: bf16[2,3,64], index: 7, kind: output, shape index: {1}]
  %8 = xla_tuple %s6, %s7
  %s9 = sld [smem:[#allocation0]]
  $region65: #{simple_segmentation_forward.4} parent=0
    _
  %s11 = ssub.s32 1, %s9
  %s12 = scalar_select 0, %s11, %s9
  loop: start=0, step=1, limit=4
  $region2: #{simple_segmentation_forward.4} parent=0 // loop_pre_header
    _
  $region3: #{simple_segmentation_forward.4} parent=0 // loop_header
    %s14 = sphi 0, %s18
    %p15 = scmp.ge.s32.totalorder %s14, 4
    %s24 = sphi 0, %s26
    %s27 = sphi 0, %s24
    %s28 = sphi 0, %s27
    %s44 = sphi 0, %s28
    %s48 = sphi 0, %s48
    %s50 = sphi 0, %s48
    %s51 = sphi 0, %s50
    %s65 = sphi 0, %s51
    %s69 = sphi 0, %s69
    %s71 = sphi 0, %s69
    %s72 = sphi 0, %s71
    %s86 = sphi 0, %s72
    %s90 = sphi 0, %s90
    %s92 = sphi 0, %s90
    %s93 = sphi 0, %s92
    %s107 = sphi 0, %s93
    %s111 = sphi 0, %s111
    %s113 = sphi 0, %s111
    %s114 = sphi 0, %s113
    %s128 = sphi 0, %s114
    %s132 = sphi 0, %s132
    %s134 = sphi 0, %s132
    %s135 = sphi 0, %s134
    %s149 = sphi 0, %s135
    %s155 = sphi 0, %s157
    %s158 = sphi 0, %s155
    %s159 = sphi 0, %s158
    %s175 = sphi 0, %s159
    %s181 = sphi 0, %s183
    %s184 = sphi 0, %s181
    %s185 = sphi 0, %s184
    %s201 = sphi 0, %s185
  $region4: #{simple_segmentation_forward.4} parent=0 // loop_header_branch
    %17 = sbr.rel (%p15) target = $region8
  $region5: #{simple_segmentation_forward.4} parent=0 // loop_body
    %s19 = ssub.s32 %s14, 1
    %s20 = ssub.s32 %s14, 2
    %s21 = sadd.s32 %s14, 1
    %s22 = ssub.s32 %s14, %s21
    %p23 = scmp.eq.s32.totalorder %s22, 0
    %s25 = sadd.s32 %s24, 1
    %s26 = scalar_select %p23, %s24, %s25
    %p29 = pneg %p23
    %p30 = scmp.eq.s32.totalorder %s14, 1
    %p31 = por %p29, %p30
    %p32 = scmp.ne.s32.totalorder %s24, %s27
    %p33 = scmp.eq.s32.totalorder %s14, 0
    %p34 = por %p32, %p33
    %p35 = scmp.ne.s32.totalorder %s24, %s27
    %p36 = scmp.eq.s32.totalorder %s19, 1
    %p37 = por %p35, %p36
    %p38 = scmp.ne.s32.totalorder %s27, %s28
    %p39 = scmp.eq.s32.totalorder %s19, 0
    %p40 = por %p38, %p39
    %p41 = scmp.ne.s32.totalorder %s27, %s28
    %p42 = scmp.eq.s32.totalorder %s20, 1
    %p43 = por %p41, %p42
    %p45 = scmp.ne.s32.totalorder %s28, %s44
    %p46 = scmp.eq.s32.totalorder %s20, 0
    %p47 = por %p45, %p46
    %s49 = sadd.s32 %s48, 1
    %p52 = scmp.eq.s32.totalorder %s14, 1
    %p53 = scmp.ne.s32.totalorder %s48, %s50
    %p54 = scmp.eq.s32.totalorder %s14, 0
    %p55 = por %p53, %p54
    %p56 = scmp.ne.s32.totalorder %s48, %s50
    %p57 = scmp.eq.s32.totalorder %s19, 1
    %p58 = por %p56, %p57
    %p59 = scmp.ne.s32.totalorder %s50, %s51
    %p60 = scmp.eq.s32.totalorder %s19, 0
    %p61 = por %p59, %p60
    %p62 = scmp.ne.s32.totalorder %s50, %s51
    %p63 = scmp.eq.s32.totalorder %s20, 1
    %p64 = por %p62, %p63
    %p66 = scmp.ne.s32.totalorder %s51, %s65
    %p67 = scmp.eq.s32.totalorder %s20, 0
    %p68 = por %p66, %p67
    %s70 = sadd.s32 %s69, 1
    %p73 = scmp.eq.s32.totalorder %s14, 1
    %p74 = scmp.ne.s32.totalorder %s69, %s71
    %p75 = scmp.eq.s32.totalorder %s14, 0
    %p76 = por %p74, %p75
    %p77 = scmp.ne.s32.totalorder %s69, %s71
    %p78 = scmp.eq.s32.totalorder %s19, 1
    %p79 = por %p77, %p78
    %p80 = scmp.ne.s32.totalorder %s71, %s72
    %p81 = scmp.eq.s32.totalorder %s19, 0
    %p82 = por %p80, %p81
    %p83 = scmp.ne.s32.totalorder %s71, %s72
    %p84 = scmp.eq.s32.totalorder %s20, 1
    %p85 = por %p83, %p84
    %p87 = scmp.ne.s32.totalorder %s72, %s86
    %p88 = scmp.eq.s32.totalorder %s20, 0
    %p89 = por %p87, %p88
    %s91 = sadd.s32 %s90, 1
    %p94 = scmp.eq.s32.totalorder %s14, 1
    %p95 = scmp.ne.s32.totalorder %s90, %s92
    %p96 = scmp.eq.s32.totalorder %s14, 0
    %p97 = por %p95, %p96
    %p98 = scmp.ne.s32.totalorder %s90, %s92
    %p99 = scmp.eq.s32.totalorder %s19, 1
    %p100 = por %p98, %p99
    %p101 = scmp.ne.s32.totalorder %s92, %s93
    %p102 = scmp.eq.s32.totalorder %s19, 0
    %p103 = por %p101, %p102
    %p104 = scmp.ne.s32.totalorder %s92, %s93
    %p105 = scmp.eq.s32.totalorder %s20, 1
    %p106 = por %p104, %p105
    %p108 = scmp.ne.s32.totalorder %s93, %s107
    %p109 = scmp.eq.s32.totalorder %s20, 0
    %p110 = por %p108, %p109
    %s112 = sadd.s32 %s111, 1
    %p115 = scmp.eq.s32.totalorder %s14, 1
    %p116 = scmp.ne.s32.totalorder %s111, %s113
    %p117 = scmp.eq.s32.totalorder %s14, 0
    %p118 = por %p116, %p117
    %p119 = scmp.ne.s32.totalorder %s111, %s113
    %p120 = scmp.eq.s32.totalorder %s19, 1
    %p121 = por %p119, %p120
    %p122 = scmp.ne.s32.totalorder %s113, %s114
    %p123 = scmp.eq.s32.totalorder %s19, 0
    %p124 = por %p122, %p123
    %p125 = scmp.ne.s32.totalorder %s113, %s114
    %p126 = scmp.eq.s32.totalorder %s20, 1
    %p127 = por %p125, %p126
    %p129 = scmp.ne.s32.totalorder %s114, %s128
    %p130 = scmp.eq.s32.totalorder %s20, 0
    %p131 = por %p129, %p130
    %s133 = sadd.s32 %s132, 1
    %p136 = scmp.eq.s32.totalorder %s14, 1
    %p137 = scmp.ne.s32.totalorder %s132, %s134
    %p138 = scmp.eq.s32.totalorder %s14, 0
    %p139 = por %p137, %p138
    %p140 = scmp.ne.s32.totalorder %s132, %s134
    %p141 = scmp.eq.s32.totalorder %s19, 1
    %p142 = por %p140, %p141
    %p143 = scmp.ne.s32.totalorder %s134, %s135
    %p144 = scmp.eq.s32.totalorder %s19, 0
    %p145 = por %p143, %p144
    %p146 = scmp.ne.s32.totalorder %s134, %s135
    %p147 = scmp.eq.s32.totalorder %s20, 1
    %p148 = por %p146, %p147
    %p150 = scmp.ne.s32.totalorder %s135, %s149
    %p151 = scmp.eq.s32.totalorder %s20, 0
    %p152 = por %p150, %p151
    %s153 = ssub.s32 %s14, %s21
    %p154 = scmp.eq.s32.totalorder %s153, 0
    %s156 = sadd.s32 %s155, 1
    %s157 = scalar_select %p154, %s155, %s156
    %p160 = pneg %p154
    %p161 = scmp.eq.s32.totalorder %s14, 1
    %p162 = por %p160, %p161
    %p163 = scmp.ne.s32.totalorder %s155, %s158
    %p164 = scmp.eq.s32.totalorder %s14, 0
    %p165 = por %p163, %p164
    %p166 = scmp.ne.s32.totalorder %s155, %s158
    %p167 = scmp.eq.s32.totalorder %s19, 1
    %p168 = por %p166, %p167
    %p169 = scmp.ne.s32.totalorder %s158, %s159
    %p170 = scmp.eq.s32.totalorder %s19, 0
    %p171 = por %p169, %p170
    %p172 = scmp.ne.s32.totalorder %s158, %s159
    %p173 = scmp.eq.s32.totalorder %s20, 1
    %p174 = por %p172, %p173
    %p176 = scmp.ne.s32.totalorder %s159, %s175
    %p177 = scmp.eq.s32.totalorder %s20, 0
    %p178 = por %p176, %p177
    %s179 = ssub.s32 %s14, %s21
    %p180 = scmp.eq.s32.totalorder %s179, 0
    %s182 = sadd.s32 %s181, 1
    %s183 = scalar_select %p180, %s181, %s182
    %p186 = pneg %p180
    %p187 = scmp.eq.s32.totalorder %s14, 1
    %p188 = por %p186, %p187
    %p189 = scmp.ne.s32.totalorder %s181, %s184
    %p190 = scmp.eq.s32.totalorder %s14, 0
    %p191 = por %p189, %p190
    %p192 = scmp.ne.s32.totalorder %s181, %s184
    %p193 = scmp.eq.s32.totalorder %s19, 1
    %p194 = por %p192, %p193
    %p195 = scmp.ne.s32.totalorder %s184, %s185
    %p196 = scmp.eq.s32.totalorder %s19, 0
    %p197 = por %p195, %p196
    %p198 = scmp.ne.s32.totalorder %s184, %s185
    %p199 = scmp.eq.s32.totalorder %s20, 1
    %p200 = por %p198, %p199
    %p202 = scmp.ne.s32.totalorder %s185, %s201
    %p203 = scmp.eq.s32.totalorder %s20, 0
    %p204 = por %p202, %p203
    %p205 = scmp.le.s32.totalorder 1, %s14
    %p206 = scmp.lt.s32.totalorder %s14, 3
    %p207 = pnand %p205, %p206
    %p208 = pneg %p207
    // Predicated region
    $region9: #{simple_segmentation_forward.4} parent=5 // pred_check
      _
    $region10: #{simple_segmentation_forward.4} parent=5 // pred_check_branch
      %210 = sbr.rel (%p207) target = $region12
    $region11: #{simple_segmentation_forward.4} parent=5 // pred_region
      %s211 = ssub.s32 %s14, 1
      // Predicated region
      $region13: #{simple_segmentation_forward.4} parent=11 // pred_check
        %p212 = pneg %p61
      $region14: #{simple_segmentation_forward.4} parent=11 // pred_check_branch
        %214 = sbr.rel (%p212) target = $region16
      $region15: #{simple_segmentation_forward.4} parent=11 // pred_region
        _
      $region16: #{simple_segmentation_forward.4} parent=11 // pred_fallthru
        _
      // Predicated region
      $region17: #{simple_segmentation_forward.4} parent=11 // pred_check
        %p215 = pneg %p82
      $region18: #{simple_segmentation_forward.4} parent=11 // pred_check_branch
        %217 = sbr.rel (%p215) target = $region20
      $region19: #{simple_segmentation_forward.4} parent=11 // pred_region
        _
      $region20: #{simple_segmentation_forward.4} parent=11 // pred_fallthru
        _
      // Predicated region
      $region21: #{simple_segmentation_forward.4} parent=11 // pred_check
        %p218 = pneg %p103
      $region22: #{simple_segmentation_forward.4} parent=11 // pred_check_branch
        %220 = sbr.rel (%p218) target = $region24
      $region23: #{simple_segmentation_forward.4} parent=11 // pred_region
        _
      $region24: #{simple_segmentation_forward.4} parent=11 // pred_fallthru
        _
      // Predicated region
      $region25: #{simple_segmentation_forward.4} parent=11 // pred_check
        %p221 = pneg %p124
      $region26: #{simple_segmentation_forward.4} parent=11 // pred_check_branch
        %223 = sbr.rel (%p221) target = $region28
      $region27: #{simple_segmentation_forward.4} parent=11 // pred_region
        _
      $region28: #{simple_segmentation_forward.4} parent=11 // pred_fallthru
        _
      // Predicated region
      $region29: #{simple_segmentation_forward.4} parent=11 // pred_check
        %p224 = pneg %p145
      $region30: #{simple_segmentation_forward.4} parent=11 // pred_check_branch
        %226 = sbr.rel (%p224) target = $region32
      $region31: #{simple_segmentation_forward.4} parent=11 // pred_region
        _
      $region32: #{simple_segmentation_forward.4} parent=11 // pred_fallthru
        _
    $region12: #{simple_segmentation_forward.4} parent=5 // pred_fallthru
      _
    %p227 = scmp.lt.s32.totalorder %s14, 2
    // Predicated region
    $region33: #{simple_segmentation_forward.4} parent=5 // pred_check
      %p228 = pneg %p227
    $region34: #{simple_segmentation_forward.4} parent=5 // pred_check_branch
      %230 = sbr.rel (%p228) target = $region36
    $region35: #{simple_segmentation_forward.4} parent=5 // pred_region
      // Predicated region
      $region37: #{simple_segmentation_forward.4} parent=35 // pred_check
        %p231 = pneg %p34
      $region38: #{simple_segmentation_forward.4} parent=35 // pred_check_branch
        %233 = sbr.rel (%p231) target = $region40
      $region39: #{simple_segmentation_forward.4} parent=35 // pred_region
        %p234 = scmp.lt.s32.totalorder %s14, 1
        %s235 = scalar_select %p234, %s14, 1
        %s236 = smul.addr %s235, 18
        %s237 = smul.addr %s236, 2
        %s238 = scalar_lea.vmem %s0, %s237
      $region40: #{simple_segmentation_forward.4} parent=35 // pred_fallthru
        _
    $region36: #{simple_segmentation_forward.4} parent=5 // pred_fallthru
      _
    %p239 = scmp.le.s32.totalorder 1, %s14
    %p240 = scmp.lt.s32.totalorder %s14, 3
    %p241 = pnand %p239, %p240
    %p242 = pneg %p241
    // Predicated region
    $region41: #{simple_segmentation_forward.4} parent=5 // pred_check
      _
    $region42: #{simple_segmentation_forward.4} parent=5 // pred_check_branch
      %244 = sbr.rel (%p241) target = $region44
    $region43: #{simple_segmentation_forward.4} parent=5 // pred_region
      %s245 = ssub.s32 %s14, 1
      %p246 = scmp.lt.s32.totalorder %s19, 1
      %s247 = scalar_select %p246, %s19, 1
      %s248 = smul.addr %s247, 18
      %s249 = smul.addr %s248, 2
      %s250 = scalar_lea.vmem %s0, %s249
      %p251 = pneg %p40
      %p252 = pneg %p37
      %p253 = pneg %p61
      %p254 = pneg %p58
      %p255 = pneg %p82
      %p256 = pneg %p79
      %p257 = pneg %p103
      %p258 = pneg %p100
      %p259 = pneg %p124
      %p260 = pneg %p121
      %p261 = pneg %p145
      %p262 = pneg %p142
      %p263 = pneg %p171
      %p264 = pneg %p168
      %p265 = scmp.lt.s32.totalorder %s19, 1
      %s266 = scalar_select %p265, %s19, 1
      %s267 = smul.addr %s266, 10
      %s268 = smul.addr %s267, 4
      %s269 = scalar_lea.vmem %s6, %s268
      %p270 = pneg %p197
      %p271 = pneg %p194
      %p272 = scmp.lt.s32.totalorder %s19, 1
      %s273 = scalar_select %p272, %s19, 1
      %s274 = smul.addr %s273, 2
      %s275 = scalar_lea.vmem %s7, %s274
      %p276 = scmp.lt.s32.totalorder %s19, 1
      %s277 = scalar_select %p276, %s19, 1
      %s278 = smul.addr %s277, 18
      %s279 = smul.addr %s278, 2
      %s280 = scalar_lea.vmem %s0, %s279
      %p281 = scmp.lt.s32.totalorder %s19, 1
      %s282 = scalar_select %p281, %s19, 1
      %s283 = smul.addr %s282, 10
      %s284 = smul.addr %s283, 4
      %s285 = scalar_lea.vmem %s6, %s284
      %p286 = scmp.lt.s32.totalorder %s19, 1
      %s287 = scalar_select %p286, %s19, 1
      %s288 = smul.addr %s287, 2
      %s289 = scalar_lea.vmem %s7, %s288
      %v291 = vld [vmem:[%s1] sm:$0xf]
      %v292 = vld [vmem:[%s1 + $0x4] sm:$0xf]
      %v293 = vld [vmem:[%s1 + $0x8] sm:$0x1]
      %v294 = vld [vmem:[%s280] sm:$0x3]
      %v298 = vunpack.c.l.b16 %v291
      %v299 = vunpack.c.l.b16 %v292
      %v300 = vunpack.c.l.b16 %v293
      %v301 = vpack.c.b16 %v299, %v298
      %v302 = vpack.c.b16 %v300, %v300
      %vm304 = vcmask 146432
      %v306 = vsel %vm304, %v294, 0
      %vm308 = vcmask 1040384
      %v310 = vsel %vm308, %v302, 0
      %312 = vmatprep.subr.bf16.mxu0 0
      %313 = vmatpush1.bf16.msra.mxu0 %v301
      %314 = vmatprep.subr.bf16.mxu0 0
      %315 = vmatpush1.bf16.msra.mxu0 %v310
      %316 = vmatprep.subr.bf16.mxu0 0
      %317 = vmatpush1.bf16.msra.mxu0 0
      %318 = vmatprep.subr.bf16.mxu0 0
      %319 = vmatpush1.bf16.msra.mxu0 0
      %320 = vmatprep.subr.bf16.mxu0 0
      %321 = vmatpush1.bf16.msra.mxu0 0
      %322 = vmatprep.subr.bf16.mxu0 0
      %323 = vmatpush1.bf16.msra.mxu0 0
      %324 = vmatprep.subr.bf16.mxu0 0
      %325 = vmatpush1.bf16.msra.mxu0 0
      %326 = vmatprep.subr.bf16.mxu0 0
      %327 = vmatpush1.bf16.msra.mxu0 0
      %328 = vmatprep.subr.bf16.mxu0 0
      %329 = vmatpush1.bf16.msra.mxu0 0
      %330 = vmatprep.subr.bf16.mxu0 0
      %331 = vmatpush1.bf16.msra.mxu0 0
      %332 = vmatprep.subr.bf16.mxu0 0
      %333 = vmatpush1.bf16.msra.mxu0 0
      %334 = vmatprep.subr.bf16.mxu0 0
      %335 = vmatpush1.bf16.msra.mxu0 0
      %336 = vmatprep.subr.bf16.mxu0 0
      %337 = vmatpush1.bf16.msra.mxu0 0
      %338 = vmatprep.subr.bf16.mxu0 0
      %339 = vmatpush1.bf16.msra.mxu0 0
      %340 = vmatprep.subr.bf16.mxu0 0
      %341 = vmatpush1.bf16.msra.mxu0 0
      %342 = vmatprep.subr.bf16.mxu0 0
      %343 = vmatpush1.bf16.msra.mxu0 0
      %344 = vmatprep.mubr.bf16.mxu0 0
      %345 = vmatmul.mubr.bf16.gmra.mrb[0].mxu0 %v306
      %v346 = vpop.f32.mrb[0].mxu0
      %v347 = vadd.f32 0.0, %v346
      %v348 = vpop.f32.mrb[0].mxu0
      %v349 = vpop.f32.mrb[0].mxu0
      %v350 = vpop.f32.mrb[0].mxu0
      %351 = vdwg.mxu0
      %v352 = vpack.c.bf16 %v347, %v347
      %s353 = scalar_lea.vmem %s280, 2
      %v354 = vld [vmem:[%s353] sm:$0x3]
      %v356 = vsel %vm304, %v354, 0
      %358 = vmatprep.subr.bf16.mxu0 0
      %359 = vmatpush1.bf16.msra.mxu0 %v301
      %360 = vmatprep.subr.bf16.mxu0 0
      %361 = vmatpush1.bf16.msra.mxu0 %v310
      %362 = vmatprep.subr.bf16.mxu0 0
      %363 = vmatpush1.bf16.msra.mxu0 0
      %364 = vmatprep.subr.bf16.mxu0 0
      %365 = vmatpush1.bf16.msra.mxu0 0
      %366 = vmatprep.subr.bf16.mxu0 0
      %367 = vmatpush1.bf16.msra.mxu0 0
      %368 = vmatprep.subr.bf16.mxu0 0
      %369 = vmatpush1.bf16.msra.mxu0 0
      %370 = vmatprep.subr.bf16.mxu0 0
      %371 = vmatpush1.bf16.msra.mxu0 0
      %372 = vmatprep.subr.bf16.mxu0 0
      %373 = vmatpush1.bf16.msra.mxu0 0
      %374 = vmatprep.subr.bf16.mxu0 0
      %375 = vmatpush1.bf16.msra.mxu0 0
      %376 = vmatprep.subr.bf16.mxu0 0
      %377 = vmatpush1.bf16.msra.mxu0 0
      %378 = vmatprep.subr.bf16.mxu0 0
      %379 = vmatpush1.bf16.msra.mxu0 0
      %380 = vmatprep.subr.bf16.mxu0 0
      %381 = vmatpush1.bf16.msra.mxu0 0
      %382 = vmatprep.subr.bf16.mxu0 0
      %383 = vmatpush1.bf16.msra.mxu0 0
      %384 = vmatprep.subr.bf16.mxu0 0
      %385 = vmatpush1.bf16.msra.mxu0 0
      %386 = vmatprep.subr.bf16.mxu0 0
      %387 = vmatpush1.bf16.msra.mxu0 0
      %388 = vmatprep.subr.bf16.mxu0 0
      %389 = vmatpush1.bf16.msra.mxu0 0
      %390 = vmatprep.mubr.bf16.mxu0 0
      %391 = vmatmul.mubr.bf16.gmra.mrb[0].mxu0 %v356
      %v392 = vpop.f32.mrb[0].mxu0
      %v393 = vadd.f32 0.0, %v392
      %v394 = vpop.f32.mrb[0].mxu0
      %v395 = vpop.f32.mrb[0].mxu0
      %v396 = vpop.f32.mrb[0].mxu0
      %397 = vdwg.mxu0
      %v398 = vpack.c.bf16 %v393, %v393
      %s399 = scalar_lea.vmem %s280, 4
      %v400 = vld [vmem:[%s399] sm:$0x3]
      %v402 = vsel %vm304, %v400, 0
      %404 = vmatprep.subr.bf16.mxu0 0
      %405 = vmatpush1.bf16.msra.mxu0 %v301
      %406 = vmatprep.subr.bf16.mxu0 0
      %407 = vmatpush1.bf16.msra.mxu0 %v310
      %408 = vmatprep.subr.bf16.mxu0 0
      %409 = vmatpush1.bf16.msra.mxu0 0
      %410 = vmatprep.subr.bf16.mxu0 0
      %411 = vmatpush1.bf16.msra.mxu0 0
      %412 = vmatprep.subr.bf16.mxu0 0
      %413 = vmatpush1.bf16.msra.mxu0 0
      %414 = vmatprep.subr.bf16.mxu0 0
      %415 = vmatpush1.bf16.msra.mxu0 0
      %416 = vmatprep.subr.bf16.mxu0 0
      %417 = vmatpush1.bf16.msra.mxu0 0
      %418 = vmatprep.subr.bf16.mxu0 0
      %419 = vmatpush1.bf16.msra.mxu0 0
      %420 = vmatprep.subr.bf16.mxu0 0
      %421 = vmatpush1.bf16.msra.mxu0 0
      %422 = vmatprep.subr.bf16.mxu0 0
      %423 = vmatpush1.bf16.msra.mxu0 0
      %424 = vmatprep.subr.bf16.mxu0 0
      %425 = vmatpush1.bf16.msra.mxu0 0
      %426 = vmatprep.subr.bf16.mxu0 0
      %427 = vmatpush1.bf16.msra.mxu0 0
      %428 = vmatprep.subr.bf16.mxu0 0
      %429 = vmatpush1.bf16.msra.mxu0 0
      %430 = vmatprep.subr.bf16.mxu0 0
      %431 = vmatpush1.bf16.msra.mxu0 0
      %432 = vmatprep.subr.bf16.mxu0 0
      %433 = vmatpush1.bf16.msra.mxu0 0
      %434 = vmatprep.subr.bf16.mxu0 0
      %435 = vmatpush1.bf16.msra.mxu0 0
      %436 = vmatprep.mubr.bf16.mxu0 0
      %437 = vmatmul.mubr.bf16.gmra.mrb[0].mxu0 %v402
      %v438 = vpop.f32.mrb[0].mxu0
      %v439 = vadd.f32 0.0, %v438
      %v440 = vpop.f32.mrb[0].mxu0
      %v441 = vpop.f32.mrb[0].mxu0
      %v442 = vpop.f32.mrb[0].mxu0
      %443 = vdwg.mxu0
      %v444 = vpack.c.bf16 %v439, %v439
      %s445 = scalar_lea.vmem %s280, 6
      %v446 = vld [vmem:[%s445] sm:$0x3]
      %v448 = vsel %vm304, %v446, 0
      %450 = vmatprep.subr.bf16.mxu0 0
      %451 = vmatpush1.bf16.msra.mxu0 %v301
      %452 = vmatprep.subr.bf16.mxu0 0
      %453 = vmatpush1.bf16.msra.mxu0 %v310
      %454 = vmatprep.subr.bf16.mxu0 0
      %455 = vmatpush1.bf16.msra.mxu0 0
      %456 = vmatprep.subr.bf16.mxu0 0
      %457 = vmatpush1.bf16.msra.mxu0 0
      %458 = vmatprep.subr.bf16.mxu0 0
      %459 = vmatpush1.bf16.msra.mxu0 0
      %460 = vmatprep.subr.bf16.mxu0 0
      %461 = vmatpush1.bf16.msra.mxu0 0
      %462 = vmatprep.subr.bf16.mxu0 0
      %463 = vmatpush1.bf16.msra.mxu0 0
      %464 = vmatprep.subr.bf16.mxu0 0
      %465 = vmatpush1.bf16.msra.mxu0 0
      %466 = vmatprep.subr.bf16.mxu0 0
      %467 = vmatpush1.bf16.msra.mxu0 0
      %468 = vmatprep.subr.bf16.mxu0 0
      %469 = vmatpush1.bf16.msra.mxu0 0
      %470 = vmatprep.subr.bf16.mxu0 0
      %471 = vmatpush1.bf16.msra.mxu0 0
      %472 = vmatprep.subr.bf16.mxu0 0
      %473 = vmatpush1.bf16.msra.mxu0 0
      %474 = vmatprep.subr.bf16.mxu0 0
      %475 = vmatpush1.bf16.msra.mxu0 0
      %476 = vmatprep.subr.bf16.mxu0 0
      %477 = vmatpush1.bf16.msra.mxu0 0
      %478 = vmatprep.subr.bf16.mxu0 0
      %479 = vmatpush1.bf16.msra.mxu0 0
      %480 = vmatprep.subr.bf16.mxu0 0
      %481 = vmatpush1.bf16.msra.mxu0 0
      %482 = vmatprep.mubr.bf16.mxu0 0
      %483 = vmatmul.mubr.bf16.gmra.mrb[0].mxu0 %v448
      %v484 = vpop.f32.mrb[0].mxu0
      %v485 = vadd.f32 0.0, %v484
      %v486 = vpop.f32.mrb[0].mxu0
      %v487 = vpop.f32.mrb[0].mxu0
      %v488 = vpop.f32.mrb[0].mxu0
      %489 = vdwg.mxu0
      %v490 = vpack.c.bf16 %v485, %v485
      %s491 = scalar_lea.vmem %s280, 8
      %v492 = vld [vmem:[%s491] sm:$0x3]
      %v494 = vsel %vm304, %v492, 0
      %496 = vmatprep.subr.bf16.mxu0 0
      %497 = vmatpush1.bf16.msra.mxu0 %v301
      %498 = vmatprep.subr.bf16.mxu0 0
      %499 = vmatpush1.bf16.msra.mxu0 %v310
      %500 = vmatprep.subr.bf16.mxu0 0
      %501 = vmatpush1.bf16.msra.mxu0 0
      %502 = vmatprep.subr.bf16.mxu0 0
      %503 = vmatpush1.bf16.msra.mxu0 0
      %504 = vmatprep.subr.bf16.mxu0 0
      %505 = vmatpush1.bf16.msra.mxu0 0
      %506 = vmatprep.subr.bf16.mxu0 0
      %507 = vmatpush1.bf16.msra.mxu0 0
      %508 = vmatprep.subr.bf16.mxu0 0
      %509 = vmatpush1.bf16.msra.mxu0 0
      %510 = vmatprep.subr.bf16.mxu0 0
      %511 = vmatpush1.bf16.msra.mxu0 0
      %512 = vmatprep.subr.bf16.mxu0 0
      %513 = vmatpush1.bf16.msra.mxu0 0
      %514 = vmatprep.subr.bf16.mxu0 0
      %515 = vmatpush1.bf16.msra.mxu0 0
      %516 = vmatprep.subr.bf16.mxu0 0
      %517 = vmatpush1.bf16.msra.mxu0 0
      %518 = vmatprep.subr.bf16.mxu0 0
      %519 = vmatpush1.bf16.msra.mxu0 0
      %520 = vmatprep.subr.bf16.mxu0 0
      %521 = vmatpush1.bf16.msra.mxu0 0
      %522 = vmatprep.subr.bf16.mxu0 0
      %523 = vmatpush1.bf16.msra.mxu0 0
      %524 = vmatprep.subr.bf16.mxu0 0
      %525 = vmatpush1.bf16.msra.mxu0 0
      %526 = vmatprep.subr.bf16.mxu0 0
      %527 = vmatpush1.bf16.msra.mxu0 0
      %528 = vmatprep.mubr.bf16.mxu0 0
      %529 = vmatmul.mubr.bf16.gmra.mrb[0].mxu0 %v494
      %v530 = vpop.f32.mrb[0].mxu0
      %v531 = vadd.f32 0.0, %v530
      %v532 = vpop.f32.mrb[0].mxu0
      %v533 = vpop.f32.mrb[0].mxu0
      %v534 = vpop.f32.mrb[0].mxu0
      %535 = vdwg.mxu0
      %v536 = vpack.c.bf16 %v531, %v531
      %s537 = scalar_lea.vmem %s280, 10
      %v538 = vld [vmem:[%s537] sm:$0x3]
      %v540 = vsel %vm304, %v538, 0
      %542 = vmatprep.subr.bf16.mxu0 0
      %543 = vmatpush1.bf16.msra.mxu0 %v301
      %544 = vmatprep.subr.bf16.mxu0 0
      %545 = vmatpush1.bf16.msra.mxu0 %v310
      %546 = vmatprep.subr.bf16.mxu0 0
      %547 = vmatpush1.bf16.msra.mxu0 0
      %548 = vmatprep.subr.bf16.mxu0 0
      %549 = vmatpush1.bf16.msra.mxu0 0
      %550 = vmatprep.subr.bf16.mxu0 0
      %551 = vmatpush1.bf16.msra.mxu0 0
      %552 = vmatprep.subr.bf16.mxu0 0
      %553 = vmatpush1.bf16.msra.mxu0 0
      %554 = vmatprep.subr.bf16.mxu0 0
      %555 = vmatpush1.bf16.msra.mxu0 0
      %556 = vmatprep.subr.bf16.mxu0 0
      %557 = vmatpush1.bf16.msra.mxu0 0
      %558 = vmatprep.subr.bf16.mxu0 0
      %559 = vmatpush1.bf16.msra.mxu0 0
      %560 = vmatprep.subr.bf16.mxu0 0
      %561 = vmatpush1.bf16.msra.mxu0 0
      %562 = vmatprep.subr.bf16.mxu0 0
      %563 = vmatpush1.bf16.msra.mxu0 0
      %564 = vmatprep.subr.bf16.mxu0 0
      %565 = vmatpush1.bf16.msra.mxu0 0
      %566 = vmatprep.subr.bf16.mxu0 0
      %567 = vmatpush1.bf16.msra.mxu0 0
      %568 = vmatprep.subr.bf16.mxu0 0
      %569 = vmatpush1.bf16.msra.mxu0 0
      %570 = vmatprep.subr.bf16.mxu0 0
      %571 = vmatpush1.bf16.msra.mxu0 0
      %572 = vmatprep.subr.bf16.mxu0 0
      %573 = vmatpush1.bf16.msra.mxu0 0
      %574 = vmatprep.mubr.bf16.mxu0 0
      %575 = vmatmul.mubr.bf16.gmra.mrb[0].mxu0 %v540
      %v576 = vpop.f32.mrb[0].mxu0
      %v577 = vadd.f32 0.0, %v576
      %v578 = vpop.f32.mrb[0].mxu0
      %v579 = vpop.f32.mrb[0].mxu0
      %v580 = vpop.f32.mrb[0].mxu0
      %581 = vdwg.mxu0
      %v582 = vpack.c.bf16 %v577, %v577
      %s583 = scalar_lea.vmem %s280, 12
      %v584 = vld [vmem:[%s583] sm:$0x3]
      %v586 = vsel %vm304, %v584, 0
      %588 = vmatprep.subr.bf16.mxu0 0
      %589 = vmatpush1.bf16.msra.mxu0 %v301
      %590 = vmatprep.subr.bf16.mxu0 0
      %591 = vmatpush1.bf16.msra.mxu0 %v310
      %592 = vmatprep.subr.bf16.mxu0 0
      %593 = vmatpush1.bf16.msra.mxu0 0
      %594 = vmatprep.subr.bf16.mxu0 0
      %595 = vmatpush1.bf16.msra.mxu0 0
      %596 = vmatprep.subr.bf16.mxu0 0
      %597 = vmatpush1.bf16.msra.mxu0 0
      %598 = vmatprep.subr.bf16.mxu0 0
      %599 = vmatpush1.bf16.msra.mxu0 0
      %600 = vmatprep.subr.bf16.mxu0 0
      %601 = vmatpush1.bf16.msra.mxu0 0
      %602 = vmatprep.subr.bf16.mxu0 0
      %603 = vmatpush1.bf16.msra.mxu0 0
      %604 = vmatprep.subr.bf16.mxu0 0
      %605 = vmatpush1.bf16.msra.mxu0 0
      %606 = vmatprep.subr.bf16.mxu0 0
      %607 = vmatpush1.bf16.msra.mxu0 0
      %608 = vmatprep.subr.bf16.mxu0 0
      %609 = vmatpush1.bf16.msra.mxu0 0
      %610 = vmatprep.subr.bf16.mxu0 0
      %611 = vmatpush1.bf16.msra.mxu0 0
      %612 = vmatprep.subr.bf16.mxu0 0
      %613 = vmatpush1.bf16.msra.mxu0 0
      %614 = vmatprep.subr.bf16.mxu0 0
      %615 = vmatpush1.bf16.msra.mxu0 0
      %616 = vmatprep.subr.bf16.mxu0 0
      %617 = vmatpush1.bf16.msra.mxu0 0
      %618 = vmatprep.subr.bf16.mxu0 0
      %619 = vmatpush1.bf16.msra.mxu0 0
      %620 = vmatprep.mubr.bf16.mxu0 0
      %621 = vmatmul.mubr.bf16.gmra.mrb[0].mxu0 %v586
      %v622 = vpop.f32.mrb[0].mxu0
      %v623 = vadd.f32 0.0, %v622
      %v624 = vpop.f32.mrb[0].mxu0
      %v625 = vpop.f32.mrb[0].mxu0
      %v626 = vpop.f32.mrb[0].mxu0
      %627 = vdwg.mxu0
      %v628 = vpack.c.bf16 %v623, %v623
      %s629 = scalar_lea.vmem %s280, 14
      %v630 = vld [vmem:[%s629] sm:$0x3]
      %v632 = vsel %vm304, %v630, 0
      %634 = vmatprep.subr.bf16.mxu0 0
      %635 = vmatpush1.bf16.msra.mxu0 %v301
      %636 = vmatprep.subr.bf16.mxu0 0
      %637 = vmatpush1.bf16.msra.mxu0 %v310
      %638 = vmatprep.subr.bf16.mxu0 0
      %639 = vmatpush1.bf16.msra.mxu0 0
      %640 = vmatprep.subr.bf16.mxu0 0
      %641 = vmatpush1.bf16.msra.mxu0 0
      %642 = vmatprep.subr.bf16.mxu0 0
      %643 = vmatpush1.bf16.msra.mxu0 0
      %644 = vmatprep.subr.bf16.mxu0 0
      %645 = vmatpush1.bf16.msra.mxu0 0
      %646 = vmatprep.subr.bf16.mxu0 0
      %647 = vmatpush1.bf16.msra.mxu0 0
      %648 = vmatprep.subr.bf16.mxu0 0
      %649 = vmatpush1.bf16.msra.mxu0 0
      %650 = vmatprep.subr.bf16.mxu0 0
      %651 = vmatpush1.bf16.msra.mxu0 0
      %652 = vmatprep.subr.bf16.mxu0 0
      %653 = vmatpush1.bf16.msra.mxu0 0
      %654 = vmatprep.subr.bf16.mxu0 0
      %655 = vmatpush1.bf16.msra.mxu0 0
      %656 = vmatprep.subr.bf16.mxu0 0
      %657 = vmatpush1.bf16.msra.mxu0 0
      %658 = vmatprep.subr.bf16.mxu0 0
      %659 = vmatpush1.bf16.msra.mxu0 0
      %660 = vmatprep.subr.bf16.mxu0 0
      %661 = vmatpush1.bf16.msra.mxu0 0
      %662 = vmatprep.subr.bf16.mxu0 0
      %663 = vmatpush1.bf16.msra.mxu0 0
      %664 = vmatprep.subr.bf16.mxu0 0
      %665 = vmatpush1.bf16.msra.mxu0 0
      %666 = vmatprep.mubr.bf16.mxu0 0
      %667 = vmatmul.mubr.bf16.gmra.mrb[0].mxu0 %v632
      %v668 = vpop.f32.mrb[0].mxu0
      %v669 = vadd.f32 0.0, %v668
      %v670 = vpop.f32.mrb[0].mxu0
      %v671 = vpop.f32.mrb[0].mxu0
      %v672 = vpop.f32.mrb[0].mxu0
      %673 = vdwg.mxu0
      %v674 = vpack.c.bf16 %v669, %v669
      %s675 = scalar_lea.vmem %s280, 16
      %v676 = vld [vmem:[%s675] sm:$0x3]
      %v678 = vsel %vm304, %v676, 0
      %680 = vmatprep.subr.bf16.mxu0 0
      %681 = vmatpush1.bf16.msra.mxu0 %v301
      %682 = vmatprep.subr.bf16.mxu0 0
      %683 = vmatpush1.bf16.msra.mxu0 %v310
      %684 = vmatprep.subr.bf16.mxu0 0
      %685 = vmatpush1.bf16.msra.mxu0 0
      %686 = vmatprep.subr.bf16.mxu0 0
      %687 = vmatpush1.bf16.msra.mxu0 0
      %688 = vmatprep.subr.bf16.mxu0 0
      %689 = vmatpush1.bf16.msra.mxu0 0
      %690 = vmatprep.subr.bf16.mxu0 0
      %691 = vmatpush1.bf16.msra.mxu0 0
      %692 = vmatprep.subr.bf16.mxu0 0
      %693 = vmatpush1.bf16.msra.mxu0 0
      %694 = vmatprep.subr.bf16.mxu0 0
      %695 = vmatpush1.bf16.msra.mxu0 0
      %696 = vmatprep.subr.bf16.mxu0 0
      %697 = vmatpush1.bf16.msra.mxu0 0
      %698 = vmatprep.subr.bf16.mxu0 0
      %699 = vmatpush1.bf16.msra.mxu0 0
      %700 = vmatprep.subr.bf16.mxu0 0
      %701 = vmatpush1.bf16.msra.mxu0 0
      %702 = vmatprep.subr.bf16.mxu0 0
      %703 = vmatpush1.bf16.msra.mxu0 0
      %704 = vmatprep.subr.bf16.mxu0 0
      %705 = vmatpush1.bf16.msra.mxu0 0
      %706 = vmatprep.subr.bf16.mxu0 0
      %707 = vmatpush1.bf16.msra.mxu0 0
      %708 = vmatprep.subr.bf16.mxu0 0
      %709 = vmatpush1.bf16.msra.mxu0 0
      %710 = vmatprep.subr.bf16.mxu0 0
      %711 = vmatpush1.bf16.msra.mxu0 0
      %712 = vmatprep.mubr.bf16.mxu0 0
      %713 = vmatmul.mubr.bf16.gmra.mrb[0].mxu0 %v678
      %v714 = vpop.f32.mrb[0].mxu0
      %v715 = vadd.f32 0.0, %v714
      %v716 = vpop.f32.mrb[0].mxu0
      %v717 = vpop.f32.mrb[0].mxu0
      %v718 = vpop.f32.mrb[0].mxu0
      %719 = vdwg.mxu0
      %v720 = vpack.c.bf16 %v715, %v715
      %s721 = scalar_lea.vmem %s280, 18
      %v722 = vld [vmem:[%s721] sm:$0x3]
      %v724 = vsel %vm304, %v722, 0
      %726 = vmatprep.subr.bf16.mxu0 0
      %727 = vmatpush1.bf16.msra.mxu0 %v301
      %728 = vmatprep.subr.bf16.mxu0 0
      %729 = vmatpush1.bf16.msra.mxu0 %v310
      %730 = vmatprep.subr.bf16.mxu0 0
      %731 = vmatpush1.bf16.msra.mxu0 0
      %732 = vmatprep.subr.bf16.mxu0 0
      %733 = vmatpush1.bf16.msra.mxu0 0
      %734 = vmatprep.subr.bf16.mxu0 0
      %735 = vmatpush1.bf16.msra.mxu0 0
      %736 = vmatprep.subr.bf16.mxu0 0
      %737 = vmatpush1.bf16.msra.mxu0 0
      %738 = vmatprep.subr.bf16.mxu0 0
      %739 = vmatpush1.bf16.msra.mxu0 0
      %740 = vmatprep.subr.bf16.mxu0 0
      %741 = vmatpush1.bf16.msra.mxu0 0
      %742 = vmatprep.subr.bf16.mxu0 0
      %743 = vmatpush1.bf16.msra.mxu0 0
      %744 = vmatprep.subr.bf16.mxu0 0
      %745 = vmatpush1.bf16.msra.mxu0 0
      %746 = vmatprep.subr.bf16.mxu0 0
      %747 = vmatpush1.bf16.msra.mxu0 0
      %748 = vmatprep.subr.bf16.mxu0 0
      %749 = vmatpush1.bf16.msra.mxu0 0
      %750 = vmatprep.subr.bf16.mxu0 0
      %751 = vmatpush1.bf16.msra.mxu0 0
      %752 = vmatprep.subr.bf16.mxu0 0
      %753 = vmatpush1.bf16.msra.mxu0 0
      %754 = vmatprep.subr.bf16.mxu0 0
      %755 = vmatpush1.bf16.msra.mxu0 0
      %756 = vmatprep.subr.bf16.mxu0 0
      %757 = vmatpush1.bf16.msra.mxu0 0
      %758 = vmatprep.mubr.bf16.mxu0 0
      %759 = vmatmul.mubr.bf16.gmra.mrb[0].mxu0 %v724
      %v760 = vpop.f32.mrb[0].mxu0
      %v761 = vadd.f32 0.0, %v760
      %v762 = vpop.f32.mrb[0].mxu0
      %v763 = vpop.f32.mrb[0].mxu0
      %v764 = vpop.f32.mrb[0].mxu0
      %765 = vdwg.mxu0
      %v766 = vpack.c.bf16 %v761, %v761
      %s767 = scalar_lea.vmem %s280, 20
      %v768 = vld [vmem:[%s767] sm:$0x3]
      %v770 = vsel %vm304, %v768, 0
      %772 = vmatprep.subr.bf16.mxu0 0
      %773 = vmatpush1.bf16.msra.mxu0 %v301
      %774 = vmatprep.subr.bf16.mxu0 0
      %775 = vmatpush1.bf16.msra.mxu0 %v310
      %776 = vmatprep.subr.bf16.mxu0 0
      %777 = vmatpush1.bf16.msra.mxu0 0
      %778 = vmatprep.subr.bf16.mxu0 0
      %779 = vmatpush1.bf16.msra.mxu0 0
      %780 = vmatprep.subr.bf16.mxu0 0
      %781 = vmatpush1.bf16.msra.mxu0 0
      %782 = vmatprep.subr.bf16.mxu0 0
      %783 = vmatpush1.bf16.msra.mxu0 0
      %784 = vmatprep.subr.bf16.mxu0 0
      %785 = vmatpush1.bf16.msra.mxu0 0
      %786 = vmatprep.subr.bf16.mxu0 0
      %787 = vmatpush1.bf16.msra.mxu0 0
      %788 = vmatprep.subr.bf16.mxu0 0
      %789 = vmatpush1.bf16.msra.mxu0 0
      %790 = vmatprep.subr.bf16.mxu0 0
      %791 = vmatpush1.bf16.msra.mxu0 0
      %792 = vmatprep.subr.bf16.mxu0 0
      %793 = vmatpush1.bf16.msra.mxu0 0
      %794 = vmatprep.subr.bf16.mxu0 0
      %795 = vmatpush1.bf16.msra.mxu0 0
      %796 = vmatprep.subr.bf16.mxu0 0
      %797 = vmatpush1.bf16.msra.mxu0 0
      %798 = vmatprep.subr.bf16.mxu0 0
      %799 = vmatpush1.bf16.msra.mxu0 0
      %800 = vmatprep.subr.bf16.mxu0 0
      %801 = vmatpush1.bf16.msra.mxu0 0
      %802 = vmatprep.subr.bf16.mxu0 0
      %803 = vmatpush1.bf16.msra.mxu0 0
      %804 = vmatprep.mubr.bf16.mxu0 0
      %805 = vmatmul.mubr.bf16.gmra.mrb[0].mxu0 %v770
      %v806 = vpop.f32.mrb[0].mxu0
      %v807 = vadd.f32 0.0, %v806
      %v808 = vpop.f32.mrb[0].mxu0
      %v809 = vpop.f32.mrb[0].mxu0
      %v810 = vpop.f32.mrb[0].mxu0
      %811 = vdwg.mxu0
      %v812 = vpack.c.bf16 %v807, %v807
      %s813 = scalar_lea.vmem %s280, 22
      %v814 = vld [vmem:[%s813] sm:$0x3]
      %v816 = vsel %vm304, %v814, 0
      %818 = vmatprep.subr.bf16.mxu0 0
      %819 = vmatpush1.bf16.msra.mxu0 %v301
      %820 = vmatprep.subr.bf16.mxu0 0
      %821 = vmatpush1.bf16.msra.mxu0 %v310
      %822 = vmatprep.subr.bf16.mxu0 0
      %823 = vmatpush1.bf16.msra.mxu0 0
      %824 = vmatprep.subr.bf16.mxu0 0
      %825 = vmatpush1.bf16.msra.mxu0 0
      %826 = vmatprep.subr.bf16.mxu0 0
      %827 = vmatpush1.bf16.msra.mxu0 0
      %828 = vmatprep.subr.bf16.mxu0 0
      %829 = vmatpush1.bf16.msra.mxu0 0
      %830 = vmatprep.subr.bf16.mxu0 0
      %831 = vmatpush1.bf16.msra.mxu0 0
      %832 = vmatprep.subr.bf16.mxu0 0
      %833 = vmatpush1.bf16.msra.mxu0 0
      %834 = vmatprep.subr.bf16.mxu0 0
      %835 = vmatpush1.bf16.msra.mxu0 0
      %836 = vmatprep.subr.bf16.mxu0 0
      %837 = vmatpush1.bf16.msra.mxu0 0
      %838 = vmatprep.subr.bf16.mxu0 0
      %839 = vmatpush1.bf16.msra.mxu0 0
      %840 = vmatprep.subr.bf16.mxu0 0
      %841 = vmatpush1.bf16.msra.mxu0 0
      %842 = vmatprep.subr.bf16.mxu0 0
      %843 = vmatpush1.bf16.msra.mxu0 0
      %844 = vmatprep.subr.bf16.mxu0 0
      %845 = vmatpush1.bf16.msra.mxu0 0
      %846 = vmatprep.subr.bf16.mxu0 0
      %847 = vmatpush1.bf16.msra.mxu0 0
      %848 = vmatprep.subr.bf16.mxu0 0
      %849 = vmatpush1.bf16.msra.mxu0 0
      %850 = vmatprep.mubr.bf16.mxu0 0
      %851 = vmatmul.mubr.bf16.gmra.mrb[0].mxu0 %v816
      %v852 = vpop.f32.mrb[0].mxu0
      %v853 = vadd.f32 0.0, %v852
      %v854 = vpop.f32.mrb[0].mxu0
      %v855 = vpop.f32.mrb[0].mxu0
      %v856 = vpop.f32.mrb[0].mxu0
      %857 = vdwg.mxu0
      %v858 = vpack.c.bf16 %v853, %v853
      %s859 = scalar_lea.vmem %s280, 24
      %v860 = vld [vmem:[%s859] sm:$0x3]
      %v862 = vsel %vm304, %v860, 0
      %864 = vmatprep.subr.bf16.mxu0 0
      %865 = vmatpush1.bf16.msra.mxu0 %v301
      %866 = vmatprep.subr.bf16.mxu0 0
      %867 = vmatpush1.bf16.msra.mxu0 %v310
      %868 = vmatprep.subr.bf16.mxu0 0
      %869 = vmatpush1.bf16.msra.mxu0 0
      %870 = vmatprep.subr.bf16.mxu0 0
      %871 = vmatpush1.bf16.msra.mxu0 0
      %872 = vmatprep.subr.bf16.mxu0 0
      %873 = vmatpush1.bf16.msra.mxu0 0
      %874 = vmatprep.subr.bf16.mxu0 0
      %875 = vmatpush1.bf16.msra.mxu0 0
      %876 = vmatprep.subr.bf16.mxu0 0
      %877 = vmatpush1.bf16.msra.mxu0 0
      %878 = vmatprep.subr.bf16.mxu0 0
      %879 = vmatpush1.bf16.msra.mxu0 0
      %880 = vmatprep.subr.bf16.mxu0 0
      %881 = vmatpush1.bf16.msra.mxu0 0
      %882 = vmatprep.subr.bf16.mxu0 0
      %883 = vmatpush1.bf16.msra.mxu0 0
      %884 = vmatprep.subr.bf16.mxu0 0
      %885 = vmatpush1.bf16.msra.mxu0 0
      %886 = vmatprep.subr.bf16.mxu0 0
      %887 = vmatpush1.bf16.msra.mxu0 0
      %888 = vmatprep.subr.bf16.mxu0 0
      %889 = vmatpush1.bf16.msra.mxu0 0
      %890 = vmatprep.subr.bf16.mxu0 0
      %891 = vmatpush1.bf16.msra.mxu0 0
      %892 = vmatprep.subr.bf16.mxu0 0
      %893 = vmatpush1.bf16.msra.mxu0 0
      %894 = vmatprep.subr.bf16.mxu0 0
      %895 = vmatpush1.bf16.msra.mxu0 0
      %896 = vmatprep.mubr.bf16.mxu0 0
      %897 = vmatmul.mubr.bf16.gmra.mrb[0].mxu0 %v862
      %v898 = vpop.f32.mrb[0].mxu0
      %v899 = vadd.f32 0.0, %v898
      %v900 = vpop.f32.mrb[0].mxu0
      %v901 = vpop.f32.mrb[0].mxu0
      %v902 = vpop.f32.mrb[0].mxu0
      %903 = vdwg.mxu0
      %v904 = vpack.c.bf16 %v899, %v899
      %s905 = scalar_lea.vmem %s280, 26
      %v906 = vld [vmem:[%s905] sm:$0x3]
      %v908 = vsel %vm304, %v906, 0
      %910 = vmatprep.subr.bf16.mxu0 0
      %911 = vmatpush1.bf16.msra.mxu0 %v301
      %912 = vmatprep.subr.bf16.mxu0 0
      %913 = vmatpush1.bf16.msra.mxu0 %v310
      %914 = vmatprep.subr.bf16.mxu0 0
      %915 = vmatpush1.bf16.msra.mxu0 0
      %916 = vmatprep.subr.bf16.mxu0 0
      %917 = vmatpush1.bf16.msra.mxu0 0
      %918 = vmatprep.subr.bf16.mxu0 0
      %919 = vmatpush1.bf16.msra.mxu0 0
      %920 = vmatprep.subr.bf16.mxu0 0
      %921 = vmatpush1.bf16.msra.mxu0 0
      %922 = vmatprep.subr.bf16.mxu0 0
      %923 = vmatpush1.bf16.msra.mxu0 0
      %924 = vmatprep.subr.bf16.mxu0 0
      %925 = vmatpush1.bf16.msra.mxu0 0
      %926 = vmatprep.subr.bf16.mxu0 0
      %927 = vmatpush1.bf16.msra.mxu0 0
      %928 = vmatprep.subr.bf16.mxu0 0
      %929 = vmatpush1.bf16.msra.mxu0 0
      %930 = vmatprep.subr.bf16.mxu0 0
      %931 = vmatpush1.bf16.msra.mxu0 0
      %932 = vmatprep.subr.bf16.mxu0 0
      %933 = vmatpush1.bf16.msra.mxu0 0
      %934 = vmatprep.subr.bf16.mxu0 0
      %935 = vmatpush1.bf16.msra.mxu0 0
      %936 = vmatprep.subr.bf16.mxu0 0
      %937 = vmatpush1.bf16.msra.mxu0 0
      %938 = vmatprep.subr.bf16.mxu0 0
      %939 = vmatpush1.bf16.msra.mxu0 0
      %940 = vmatprep.subr.bf16.mxu0 0
      %941 = vmatpush1.bf16.msra.mxu0 0
      %942 = vmatprep.mubr.bf16.mxu0 0
      %943 = vmatmul.mubr.bf16.gmra.mrb[0].mxu0 %v908
      %v944 = vpop.f32.mrb[0].mxu0
      %v945 = vadd.f32 0.0, %v944
      %v946 = vpop.f32.mrb[0].mxu0
      %v947 = vpop.f32.mrb[0].mxu0
      %v948 = vpop.f32.mrb[0].mxu0
      %949 = vdwg.mxu0
      %v950 = vpack.c.bf16 %v945, %v945
      %s951 = scalar_lea.vmem %s280, 28
      %v952 = vld [vmem:[%s951] sm:$0x3]
      %v954 = vsel %vm304, %v952, 0
      %956 = vmatprep.subr.bf16.mxu0 0
      %957 = vmatpush1.bf16.msra.mxu0 %v301
      %958 = vmatprep.subr.bf16.mxu0 0
      %959 = vmatpush1.bf16.msra.mxu0 %v310
      %960 = vmatprep.subr.bf16.mxu0 0
      %961 = vmatpush1.bf16.msra.mxu0 0
      %962 = vmatprep.subr.bf16.mxu0 0
      %963 = vmatpush1.bf16.msra.mxu0 0
      %964 = vmatprep.subr.bf16.mxu0 0
      %965 = vmatpush1.bf16.msra.mxu0 0
      %966 = vmatprep.subr.bf16.mxu0 0
      %967 = vmatpush1.bf16.msra.mxu0 0
      %968 = vmatprep.subr.bf16.mxu0 0
      %969 = vmatpush1.bf16.msra.mxu0 0
      %970 = vmatprep.subr.bf16.mxu0 0
      %971 = vmatpush1.bf16.msra.mxu0 0
      %972 = vmatprep.subr.bf16.mxu0 0
      %973 = vmatpush1.bf16.msra.mxu0 0
      %974 = vmatprep.subr.bf16.mxu0 0
      %975 = vmatpush1.bf16.msra.mxu0 0
      %976 = vmatprep.subr.bf16.mxu0 0
      %977 = vmatpush1.bf16.msra.mxu0 0
      %978 = vmatprep.subr.bf16.mxu0 0
      %979 = vmatpush1.bf16.msra.mxu0 0
      %980 = vmatprep.subr.bf16.mxu0 0
      %981 = vmatpush1.bf16.msra.mxu0 0
      %982 = vmatprep.subr.bf16.mxu0 0
      %983 = vmatpush1.bf16.msra.mxu0 0
      %984 = vmatprep.subr.bf16.mxu0 0
      %985 = vmatpush1.bf16.msra.mxu0 0
      %986 = vmatprep.subr.bf16.mxu0 0
      %987 = vmatpush1.bf16.msra.mxu0 0
      %988 = vmatprep.mubr.bf16.mxu0 0
      %989 = vmatmul.mubr.bf16.gmra.mrb[0].mxu0 %v954
      %v990 = vpop.f32.mrb[0].mxu0
      %v991 = vadd.f32 0.0, %v990
      %v992 = vpop.f32.mrb[0].mxu0
      %v993 = vpop.f32.mrb[0].mxu0
      %v994 = vpop.f32.mrb[0].mxu0
      %995 = vdwg.mxu0
      %v996 = vpack.c.bf16 %v991, %v991
      %s997 = scalar_lea.vmem %s280, 30
      %v998 = vld [vmem:[%s997] sm:$0x3]
      %v1000 = vsel %vm304, %v998, 0
      %1002 = vmatprep.subr.bf16.mxu0 0
      %1003 = vmatpush1.bf16.msra.mxu0 %v301
      %1004 = vmatprep.subr.bf16.mxu0 0
      %1005 = vmatpush1.bf16.msra.mxu0 %v310
      %1006 = vmatprep.subr.bf16.mxu0 0
      %1007 = vmatpush1.bf16.msra.mxu0 0
      %1008 = vmatprep.subr.bf16.mxu0 0
      %1009 = vmatpush1.bf16.msra.mxu0 0
      %1010 = vmatprep.subr.bf16.mxu0 0
      %1011 = vmatpush1.bf16.msra.mxu0 0
      %1012 = vmatprep.subr.bf16.mxu0 0
      %1013 = vmatpush1.bf16.msra.mxu0 0
      %1014 = vmatprep.subr.bf16.mxu0 0
      %1015 = vmatpush1.bf16.msra.mxu0 0
      %1016 = vmatprep.subr.bf16.mxu0 0
      %1017 = vmatpush1.bf16.msra.mxu0 0
      %1018 = vmatprep.subr.bf16.mxu0 0
      %1019 = vmatpush1.bf16.msra.mxu0 0
      %1020 = vmatprep.subr.bf16.mxu0 0
      %1021 = vmatpush1.bf16.msra.mxu0 0
      %1022 = vmatprep.subr.bf16.mxu0 0
      %1023 = vmatpush1.bf16.msra.mxu0 0
      %1024 = vmatprep.subr.bf16.mxu0 0
      %1025 = vmatpush1.bf16.msra.mxu0 0
      %1026 = vmatprep.subr.bf16.mxu0 0
      %1027 = vmatpush1.bf16.msra.mxu0 0
      %1028 = vmatprep.subr.bf16.mxu0 0
      %1029 = vmatpush1.bf16.msra.mxu0 0
      %1030 = vmatprep.subr.bf16.mxu0 0
      %1031 = vmatpush1.bf16.msra.mxu0 0
      %1032 = vmatprep.subr.bf16.mxu0 0
      %1033 = vmatpush1.bf16.msra.mxu0 0
      %1034 = vmatprep.mubr.bf16.mxu0 0
      %1035 = vmatmul.mubr.bf16.gmra.mrb[0].mxu0 %v1000
      %v1036 = vpop.f32.mrb[0].mxu0
      %v1037 = vadd.f32 0.0, %v1036
      %v1038 = vpop.f32.mrb[0].mxu0
      %v1039 = vpop.f32.mrb[0].mxu0
      %v1040 = vpop.f32.mrb[0].mxu0
      %1041 = vdwg.mxu0
      %v1042 = vpack.c.bf16 %v1037, %v1037
      %s1043 = scalar_lea.vmem %s280, 32
      %v1044 = vld [vmem:[%s1043] sm:$0x3]
      %v1046 = vsel %vm304, %v1044, 0
      %1048 = vmatprep.subr.bf16.mxu0 0
      %1049 = vmatpush1.bf16.msra.mxu0 %v301
      %1050 = vmatprep.subr.bf16.mxu0 0
      %1051 = vmatpush1.bf16.msra.mxu0 %v310
      %1052 = vmatprep.subr.bf16.mxu0 0
      %1053 = vmatpush1.bf16.msra.mxu0 0
      %1054 = vmatprep.subr.bf16.mxu0 0
      %1055 = vmatpush1.bf16.msra.mxu0 0
      %1056 = vmatprep.subr.bf16.mxu0 0
      %1057 = vmatpush1.bf16.msra.mxu0 0
      %1058 = vmatprep.subr.bf16.mxu0 0
      %1059 = vmatpush1.bf16.msra.mxu0 0
      %1060 = vmatprep.subr.bf16.mxu0 0
      %1061 = vmatpush1.bf16.msra.mxu0 0
      %1062 = vmatprep.subr.bf16.mxu0 0
      %1063 = vmatpush1.bf16.msra.mxu0 0
      %1064 = vmatprep.subr.bf16.mxu0 0
      %1065 = vmatpush1.bf16.msra.mxu0 0
      %1066 = vmatprep.subr.bf16.mxu0 0
      %1067 = vmatpush1.bf16.msra.mxu0 0
      %1068 = vmatprep.subr.bf16.mxu0 0
      %1069 = vmatpush1.bf16.msra.mxu0 0
      %1070 = vmatprep.subr.bf16.mxu0 0
      %1071 = vmatpush1.bf16.msra.mxu0 0
      %1072 = vmatprep.subr.bf16.mxu0 0
      %1073 = vmatpush1.bf16.msra.mxu0 0
      %1074 = vmatprep.subr.bf16.mxu0 0
      %1075 = vmatpush1.bf16.msra.mxu0 0
      %1076 = vmatprep.subr.bf16.mxu0 0
      %1077 = vmatpush1.bf16.msra.mxu0 0
      %1078 = vmatprep.subr.bf16.mxu0 0
      %1079 = vmatpush1.bf16.msra.mxu0 0
      %1080 = vmatprep.mubr.bf16.mxu0 0
      %1081 = vmatmul.mubr.bf16.gmra.mrb[0].mxu0 %v1046
      %v1082 = vpop.f32.mrb[0].mxu0
      %v1083 = vadd.f32 0.0, %v1082
      %v1084 = vpop.f32.mrb[0].mxu0
      %v1085 = vpop.f32.mrb[0].mxu0
      %v1086 = vpop.f32.mrb[0].mxu0
      %1087 = vdwg.mxu0
      %v1088 = vpack.c.bf16 %v1083, %v1083
      %vm1089 = vcmask 58368
      %1090 = vst.msk [vmem:[#allocation2] sm:$0x3] %vm1089, %v352
      %v1092 = vunpack.c.l.b16 %v352
      %v1093 = vpack.c.b16 %v1092, %v1092
      %v1094 = vrot.slane %v1093, 6
      %1095 = vrot.lane.b32.xlu0 %v1094, 119
      %v1096 = vpop.permute.xlu0 %1095
      %vm1098 = vcmask 60418
      %1099 = vst.msk [vmem:[#allocation2] sm:$0xc] %vm1098, %v1096
      %1100 = vrot.lane.b32.xlu0 %v1093, 127
      %v1101 = vpop.permute.xlu0 %1100
      %1103 = vst.msk [vmem:[#allocation2 + $0x4] sm:$0x3] %vm1089, %v1101
      %v1105 = vunpack.c.l.b16 %v398
      %v1106 = vpack.c.b16 %v1105, %v1105
      %v1107 = vrot.slane %v1106, 6
      %1109 = vst.msk [vmem:[#allocation2 + $0x4] sm:$0xc] %vm1098, %v1107
      %1110 = vrot.lane.b32.xlu0 %v1106, 119
      %v1111 = vpop.permute.xlu0 %1110
      %1113 = vst.msk [vmem:[#allocation2 + $0x8] sm:$0x3] %vm1089, %v1111
      %1114 = vrot.lane.b32.xlu0 %v1107, 127
      %v1115 = vpop.permute.xlu0 %1114
      %1117 = vst.msk [vmem:[#allocation2 + $0x8] sm:$0xc] %vm1098, %v1115
      %1118 = vst.msk [vmem:[#allocation2 + $0xc] sm:$0x3] %vm1089, %v444
      %v1120 = vunpack.c.l.b16 %v444
      %v1121 = vpack.c.b16 %v1120, %v1120
      %v1122 = vrot.slane %v1121, 6
      %1123 = vrot.lane.b32.xlu0 %v1122, 119
      %v1124 = vpop.permute.xlu0 %1123
      %1126 = vst.msk [vmem:[#allocation2 + $0xc] sm:$0xc] %vm1098, %v1124
      %1127 = vrot.lane.b32.xlu0 %v1121, 127
      %v1128 = vpop.permute.xlu0 %1127
      %1130 = vst.msk [vmem:[#allocation2 + $0x10] sm:$0x3] %vm1089, %v1128
      %1131 = vrot.lane.b32.xlu0 %v1121, 8
      %v1132 = vpop.permute.xlu0 %1131
      %vm1134 = vcmask 123968
      %1135 = vst.msk [vmem:[#allocation2] sm:$0x3] %vm1134, %v1132
      %1136 = vrot.lane.b32.xlu0 %v1122, 127
      %v1137 = vpop.permute.xlu0 %1136
      %vm1139 = vcmask 126018
      %1140 = vst.msk [vmem:[#allocation2] sm:$0xc] %vm1139, %v1137
      %1141 = vrot.lane.b32.xlu0 %v1121, 7
      %v1142 = vpop.permute.xlu0 %1141
      %1144 = vst.msk [vmem:[#allocation2 + $0x4] sm:$0x3] %vm1134, %v1142
      %v1146 = vunpack.c.l.b16 %v490
      %v1147 = vpack.c.b16 %v1146, %v1146
      %v1148 = vrot.slane %v1147, 6
      %1149 = vrot.lane.b32.xlu0 %v1148, 8
      %v1150 = vpop.permute.xlu0 %1149
      %1152 = vst.msk [vmem:[#allocation2 + $0x4] sm:$0xc] %vm1139, %v1150
      %1153 = vrot.lane.b32.xlu0 %v1147, 127
      %v1154 = vpop.permute.xlu0 %1153
      %1156 = vst.msk [vmem:[#allocation2 + $0x8] sm:$0x3] %vm1134, %v1154
      %1157 = vrot.lane.b32.xlu0 %v1148, 7
      %v1158 = vpop.permute.xlu0 %1157
      %1160 = vst.msk [vmem:[#allocation2 + $0x8] sm:$0xc] %vm1139, %v1158
      %v1162 = vunpack.c.l.b16 %v536
      %v1163 = vpack.c.b16 %v1162, %v1162
      %1164 = vrot.lane.b32.xlu0 %v1163, 8
      %v1165 = vpop.permute.xlu0 %1164
      %1167 = vst.msk [vmem:[#allocation2 + $0xc] sm:$0x3] %vm1134, %v1165
      %v1168 = vrot.slane %v1163, 6
      %1169 = vrot.lane.b32.xlu0 %v1168, 127
      %v1170 = vpop.permute.xlu0 %1169
      %1172 = vst.msk [vmem:[#allocation2 + $0xc] sm:$0xc] %vm1139, %v1170
      %1173 = vrot.lane.b32.xlu0 %v1163, 7
      %v1174 = vpop.permute.xlu0 %1173
      %1176 = vst.msk [vmem:[#allocation2 + $0x10] sm:$0x3] %vm1134, %v1174
      %1177 = vrot.lane.b32.xlu0 %v1163, 16
      %v1178 = vpop.permute.xlu0 %1177
      %vm1180 = vcmask 189568
      %1181 = vst.msk [vmem:[#allocation2] sm:$0x3] %vm1180, %v1178
      %1182 = vrot.lane.b32.xlu0 %v1168, 7
      %v1183 = vpop.permute.xlu0 %1182
      %vm1185 = vcmask 191618
      %1186 = vst.msk [vmem:[#allocation2] sm:$0xc] %vm1185, %v1183
      %1187 = vrot.lane.b32.xlu0 %v1163, 15
      %v1188 = vpop.permute.xlu0 %1187
      %1190 = vst.msk [vmem:[#allocation2 + $0x4] sm:$0x3] %vm1180, %v1188
      %v1192 = vunpack.c.l.b16 %v582
      %v1193 = vpack.c.b16 %v1192, %v1192
      %v1194 = vrot.slane %v1193, 6
      %1195 = vrot.lane.b32.xlu0 %v1194, 16
      %v1196 = vpop.permute.xlu0 %1195
      %1198 = vst.msk [vmem:[#allocation2 + $0x4] sm:$0xc] %vm1185, %v1196
      %1199 = vrot.lane.b32.xlu0 %v1193, 7
      %v1200 = vpop.permute.xlu0 %1199
      %1202 = vst.msk [vmem:[#allocation2 + $0x8] sm:$0x3] %vm1180, %v1200
      %1203 = vrot.lane.b32.xlu0 %v1194, 15
      %v1204 = vpop.permute.xlu0 %1203
      %1206 = vst.msk [vmem:[#allocation2 + $0x8] sm:$0xc] %vm1185, %v1204
      %v1208 = vunpack.c.l.b16 %v628
      %v1209 = vpack.c.b16 %v1208, %v1208
      %1210 = vrot.lane.b32.xlu0 %v1209, 16
      %v1211 = vpop.permute.xlu0 %1210
      %1213 = vst.msk [vmem:[#allocation2 + $0xc] sm:$0x3] %vm1180, %v1211
      %v1214 = vrot.slane %v1209, 6
      %1215 = vrot.lane.b32.xlu0 %v1214, 7
      %v1216 = vpop.permute.xlu0 %1215
      %1218 = vst.msk [vmem:[#allocation2 + $0xc] sm:$0xc] %vm1185, %v1216
      %1219 = vrot.lane.b32.xlu0 %v1209, 15
      %v1220 = vpop.permute.xlu0 %1219
      %1222 = vst.msk [vmem:[#allocation2 + $0x10] sm:$0x3] %vm1180, %v1220
      %1223 = vrot.lane.b32.xlu0 %v1209, 24
      %v1224 = vpop.permute.xlu0 %1223
      %vm1226 = vcmask 255168
      %1227 = vst.msk [vmem:[#allocation2] sm:$0x3] %vm1226, %v1224
      %1228 = vrot.lane.b32.xlu0 %v1214, 15
      %v1229 = vpop.permute.xlu0 %1228
      %vm1231 = vcmask 257218
      %1232 = vst.msk [vmem:[#allocation2] sm:$0xc] %vm1231, %v1229
      %1233 = vrot.lane.b32.xlu0 %v1209, 23
      %v1234 = vpop.permute.xlu0 %1233
      %1236 = vst.msk [vmem:[#allocation2 + $0x4] sm:$0x3] %vm1226, %v1234
      %v1238 = vunpack.c.l.b16 %v674
      %v1239 = vpack.c.b16 %v1238, %v1238
      %v1240 = vrot.slane %v1239, 6
      %1241 = vrot.lane.b32.xlu0 %v1240, 24
      %v1242 = vpop.permute.xlu0 %1241
      %1244 = vst.msk [vmem:[#allocation2 + $0x4] sm:$0xc] %vm1231, %v1242
      %1245 = vrot.lane.b32.xlu0 %v1239, 15
      %v1246 = vpop.permute.xlu0 %1245
      %1248 = vst.msk [vmem:[#allocation2 + $0x8] sm:$0x3] %vm1226, %v1246
      %1249 = vrot.lane.b32.xlu0 %v1240, 23
      %v1250 = vpop.permute.xlu0 %1249
      %1252 = vst.msk [vmem:[#allocation2 + $0x8] sm:$0xc] %vm1231, %v1250
      %v1254 = vunpack.c.l.b16 %v720
      %v1255 = vpack.c.b16 %v1254, %v1254
      %1256 = vrot.lane.b32.xlu0 %v1255, 24
      %v1257 = vpop.permute.xlu0 %1256
      %1259 = vst.msk [vmem:[#allocation2 + $0xc] sm:$0x3] %vm1226, %v1257
      %v1260 = vrot.slane %v1255, 6
      %1261 = vrot.lane.b32.xlu0 %v1260, 15
      %v1262 = vpop.permute.xlu0 %1261
      %1264 = vst.msk [vmem:[#allocation2 + $0xc] sm:$0xc] %vm1231, %v1262
      %1265 = vrot.lane.b32.xlu0 %v1255, 23
      %v1266 = vpop.permute.xlu0 %1265
      %1268 = vst.msk [vmem:[#allocation2 + $0x10] sm:$0x3] %vm1226, %v1266
      %1269 = vrot.lane.b32.xlu0 %v1255, 32
      %v1270 = vpop.permute.xlu0 %1269
      %vm1272 = vcmask 320768
      %1273 = vst.msk [vmem:[#allocation2] sm:$0x3] %vm1272, %v1270
      %1274 = vrot.lane.b32.xlu0 %v1260, 23
      %v1275 = vpop.permute.xlu0 %1274
      %vm1277 = vcmask 322818
      %1278 = vst.msk [vmem:[#allocation2] sm:$0xc] %vm1277, %v1275
      %1279 = vrot.lane.b32.xlu0 %v1255, 31
      %v1280 = vpop.permute.xlu0 %1279
      %1282 = vst.msk [vmem:[#allocation2 + $0x4] sm:$0x3] %vm1272, %v1280
      %v1284 = vunpack.c.l.b16 %v766
      %v1285 = vpack.c.b16 %v1284, %v1284
      %v1286 = vrot.slane %v1285, 6
      %1287 = vrot.lane.b32.xlu0 %v1286, 32
      %v1288 = vpop.permute.xlu0 %1287
      %1290 = vst.msk [vmem:[#allocation2 + $0x4] sm:$0xc] %vm1277, %v1288
      %1291 = vrot.lane.b32.xlu0 %v1285, 23
      %v1292 = vpop.permute.xlu0 %1291
      %1294 = vst.msk [vmem:[#allocation2 + $0x8] sm:$0x3] %vm1272, %v1292
      %1295 = vrot.lane.b32.xlu0 %v1286, 31
      %v1296 = vpop.permute.xlu0 %1295
      %1298 = vst.msk [vmem:[#allocation2 + $0x8] sm:$0xc] %vm1277, %v1296
      %v1300 = vunpack.c.l.b16 %v812
      %v1301 = vpack.c.b16 %v1300, %v1300
      %1302 = vrot.lane.b32.xlu0 %v1301, 32
      %v1303 = vpop.permute.xlu0 %1302
      %1305 = vst.msk [vmem:[#allocation2 + $0xc] sm:$0x3] %vm1272, %v1303
      %v1306 = vrot.slane %v1301, 6
      %1307 = vrot.lane.b32.xlu0 %v1306, 23
      %v1308 = vpop.permute.xlu0 %1307
      %1310 = vst.msk [vmem:[#allocation2 + $0xc] sm:$0xc] %vm1277, %v1308
      %1311 = vrot.lane.b32.xlu0 %v1301, 31
      %v1312 = vpop.permute.xlu0 %1311
      %1314 = vst.msk [vmem:[#allocation2 + $0x10] sm:$0x3] %vm1272, %v1312
      %1315 = vrot.lane.b32.xlu0 %v1301, 40
      %v1316 = vpop.permute.xlu0 %1315
      %vm1318 = vcmask 386368
      %1319 = vst.msk [vmem:[#allocation2] sm:$0x3] %vm1318, %v1316
      %1320 = vrot.lane.b32.xlu0 %v1306, 31
      %v1321 = vpop.permute.xlu0 %1320
      %vm1323 = vcmask 388418
      %1324 = vst.msk [vmem:[#allocation2] sm:$0xc] %vm1323, %v1321
      %1325 = vrot.lane.b32.xlu0 %v1301, 39
      %v1326 = vpop.permute.xlu0 %1325
      %1328 = vst.msk [vmem:[#allocation2 + $0x4] sm:$0x3] %vm1318, %v1326
      %v1330 = vunpack.c.l.b16 %v858
      %v1331 = vpack.c.b16 %v1330, %v1330
      %v1332 = vrot.slane %v1331, 6
      %1333 = vrot.lane.b32.xlu0 %v1332, 40
      %v1334 = vpop.permute.xlu0 %1333
      %1336 = vst.msk [vmem:[#allocation2 + $0x4] sm:$0xc] %vm1323, %v1334
      %1337 = vrot.lane.b32.xlu0 %v1331, 31
      %v1338 = vpop.permute.xlu0 %1337
      %1340 = vst.msk [vmem:[#allocation2 + $0x8] sm:$0x3] %vm1318, %v1338
      %1341 = vrot.lane.b32.xlu0 %v1332, 39
      %v1342 = vpop.permute.xlu0 %1341
      %1344 = vst.msk [vmem:[#allocation2 + $0x8] sm:$0xc] %vm1323, %v1342
      %v1346 = vunpack.c.l.b16 %v904
      %v1347 = vpack.c.b16 %v1346, %v1346
      %1348 = vrot.lane.b32.xlu0 %v1347, 40
      %v1349 = vpop.permute.xlu0 %1348
      %1351 = vst.msk [vmem:[#allocation2 + $0xc] sm:$0x3] %vm1318, %v1349
      %v1352 = vrot.slane %v1347, 6
      %1353 = vrot.lane.b32.xlu0 %v1352, 31
      %v1354 = vpop.permute.xlu0 %1353
      %1356 = vst.msk [vmem:[#allocation2 + $0xc] sm:$0xc] %vm1323, %v1354
      %1357 = vrot.lane.b32.xlu0 %v1347, 39
      %v1358 = vpop.permute.xlu0 %1357
      %1360 = vst.msk [vmem:[#allocation2 + $0x10] sm:$0x3] %vm1318, %v1358
      %1361 = vrot.lane.b32.xlu0 %v1347, 48
      %v1362 = vpop.permute.xlu0 %1361
      %vm1364 = vcmask 451968
      %1365 = vst.msk [vmem:[#allocation2] sm:$0x3] %vm1364, %v1362
      %1366 = vrot.lane.b32.xlu0 %v1352, 39
      %v1367 = vpop.permute.xlu0 %1366
      %vm1369 = vcmask 454018
      %1370 = vst.msk [vmem:[#allocation2] sm:$0xc] %vm1369, %v1367
      %1371 = vrot.lane.b32.xlu0 %v1347, 47
      %v1372 = vpop.permute.xlu0 %1371
      %1374 = vst.msk [vmem:[#allocation2 + $0x4] sm:$0x3] %vm1364, %v1372
      %v1376 = vunpack.c.l.b16 %v950
      %v1377 = vpack.c.b16 %v1376, %v1376
      %v1378 = vrot.slane %v1377, 6
      %1379 = vrot.lane.b32.xlu0 %v1378, 48
      %v1380 = vpop.permute.xlu0 %1379
      %1382 = vst.msk [vmem:[#allocation2 + $0x4] sm:$0xc] %vm1369, %v1380
      %1383 = vrot.lane.b32.xlu0 %v1377, 39
      %v1384 = vpop.permute.xlu0 %1383
      %1386 = vst.msk [vmem:[#allocation2 + $0x8] sm:$0x3] %vm1364, %v1384
      %1387 = vrot.lane.b32.xlu0 %v1378, 47
      %v1388 = vpop.permute.xlu0 %1387
      %1390 = vst.msk [vmem:[#allocation2 + $0x8] sm:$0xc] %vm1369, %v1388
      %v1392 = vunpack.c.l.b16 %v996
      %v1393 = vpack.c.b16 %v1392, %v1392
      %1394 = vrot.lane.b32.xlu0 %v1393, 48
      %v1395 = vpop.permute.xlu0 %1394
      %1397 = vst.msk [vmem:[#allocation2 + $0xc] sm:$0x3] %vm1364, %v1395
      %v1398 = vrot.slane %v1393, 6
      %1399 = vrot.lane.b32.xlu0 %v1398, 39
      %v1400 = vpop.permute.xlu0 %1399
      %1402 = vst.msk [vmem:[#allocation2 + $0xc] sm:$0xc] %vm1369, %v1400
      %1403 = vrot.lane.b32.xlu0 %v1393, 47
      %v1404 = vpop.permute.xlu0 %1403
      %1406 = vst.msk [vmem:[#allocation2 + $0x10] sm:$0x3] %vm1364, %v1404
      %1407 = vrot.lane.b32.xlu0 %v1393, 56
      %v1408 = vpop.permute.xlu0 %1407
      %vm1410 = vcmask 517568
      %1411 = vst.msk [vmem:[#allocation2] sm:$0x3] %vm1410, %v1408
      %1412 = vrot.lane.b32.xlu0 %v1398, 47
      %v1413 = vpop.permute.xlu0 %1412
      %vm1415 = vcmask 519618
      %1416 = vst.msk [vmem:[#allocation2] sm:$0xc] %vm1415, %v1413
      %1417 = vrot.lane.b32.xlu0 %v1393, 55
      %v1418 = vpop.permute.xlu0 %1417
      %1420 = vst.msk [vmem:[#allocation2 + $0x4] sm:$0x3] %vm1410, %v1418
      %v1422 = vunpack.c.l.b16 %v1042
      %v1423 = vpack.c.b16 %v1422, %v1422
      %v1424 = vrot.slane %v1423, 6
      %1425 = vrot.lane.b32.xlu0 %v1424, 56
      %v1426 = vpop.permute.xlu0 %1425
      %1428 = vst.msk [vmem:[#allocation2 + $0x4] sm:$0xc] %vm1415, %v1426
      %1429 = vrot.lane.b32.xlu0 %v1423, 47
      %v1430 = vpop.permute.xlu0 %1429
      %1432 = vst.msk [vmem:[#allocation2 + $0x8] sm:$0x3] %vm1410, %v1430
      %1433 = vrot.lane.b32.xlu0 %v1424, 55
      %v1434 = vpop.permute.xlu0 %1433
      %1436 = vst.msk [vmem:[#allocation2 + $0x8] sm:$0xc] %vm1415, %v1434
      %v1438 = vunpack.c.l.b16 %v1088
      %v1439 = vpack.c.b16 %v1438, %v1438
      %1440 = vrot.lane.b32.xlu0 %v1439, 56
      %v1441 = vpop.permute.xlu0 %1440
      %1443 = vst.msk [vmem:[#allocation2 + $0xc] sm:$0x3] %vm1410, %v1441
      %v1444 = vrot.slane %v1439, 6
      %1445 = vrot.lane.b32.xlu0 %v1444, 47
      %v1446 = vpop.permute.xlu0 %1445
      %1448 = vst.msk [vmem:[#allocation2 + $0xc] sm:$0xc] %vm1415, %v1446
      %1449 = vrot.lane.b32.xlu0 %v1439, 55
      %v1450 = vpop.permute.xlu0 %1449
      %1452 = vst.msk [vmem:[#allocation2 + $0x10] sm:$0x3] %vm1410, %v1450
      %v1453 = vld [vmem:[#allocation2] sm:$0xf]
      %v1454 = vld [vmem:[#allocation2 + $0x4] sm:$0xf]
      %v1455 = vld [vmem:[#allocation2 + $0x8] sm:$0xf]
      %v1456 = vld [vmem:[#allocation2 + $0xc] sm:$0xf]
      %v1457 = vld [vmem:[#allocation2 + $0x10] sm:$0x3]
      %v1458 = vld [vmem:[%s2] sm:$0xf]
      %v1459 = vld [vmem:[%s3] sm:$0xff]
      %1461 = vset.pattern.permute.xlu0 0
      %1462 = vperm.xlu0 %1461, %v1459
      %v1463 = vpop.permute.xlu0 %1462
      %v1470 = vunpack.c.l.b16 %v1453
      %v1471 = vunpack.c.l.b16 %v1454
      %v1472 = vunpack.c.l.b16 %v1455
      %v1473 = vunpack.c.l.b16 %v1456
      %v1474 = vunpack.c.l.b16 %v1457
      %v1475 = vpack.c.b16 %v1471, %v1470
      %v1476 = vpack.c.b16 %v1473, %v1472
      %v1477 = vpack.c.b16 %v1474, %v1474
      %vm1480 = vcmask 293888
      %v1482 = vsel %vm1480, %v1458, 0
      %vm1484 = vcmask 1041408
      %v1486 = vsel %vm1484, %v1477, 0
      %1488 = vmatprep.subr.bf16.mxu0 0
      %1489 = vmatpush1.bf16.msra.mxu0 %v1475
      %1490 = vmatprep.subr.bf16.mxu0 0
      %1491 = vmatpush1.bf16.msra.mxu0 %v1476
      %1492 = vmatprep.subr.bf16.mxu0 0
      %1493 = vmatpush1.bf16.msra.mxu0 %v1486
      %1494 = vmatprep.subr.bf16.mxu0 0
      %1495 = vmatpush1.bf16.msra.mxu0 0
      %1496 = vmatprep.subr.bf16.mxu0 0
      %1497 = vmatpush1.bf16.msra.mxu0 0
      %1498 = vmatprep.subr.bf16.mxu0 0
      %1499 = vmatpush1.bf16.msra.mxu0 0
      %1500 = vmatprep.subr.bf16.mxu0 0
      %1501 = vmatpush1.bf16.msra.mxu0 0
      %1502 = vmatprep.subr.bf16.mxu0 0
      %1503 = vmatpush1.bf16.msra.mxu0 0
      %1504 = vmatprep.subr.bf16.mxu0 0
      %1505 = vmatpush1.bf16.msra.mxu0 0
      %1506 = vmatprep.subr.bf16.mxu0 0
      %1507 = vmatpush1.bf16.msra.mxu0 0
      %1508 = vmatprep.subr.bf16.mxu0 0
      %1509 = vmatpush1.bf16.msra.mxu0 0
      %1510 = vmatprep.subr.bf16.mxu0 0
      %1511 = vmatpush1.bf16.msra.mxu0 0
      %1512 = vmatprep.subr.bf16.mxu0 0
      %1513 = vmatpush1.bf16.msra.mxu0 0
      %1514 = vmatprep.subr.bf16.mxu0 0
      %1515 = vmatpush1.bf16.msra.mxu0 0
      %1516 = vmatprep.subr.bf16.mxu0 0
      %1517 = vmatpush1.bf16.msra.mxu0 0
      %1518 = vmatprep.subr.bf16.mxu0 0
      %1519 = vmatpush1.bf16.msra.mxu0 0
      %1520 = vmatprep.mubr.bf16.mxu0 0
      %1521 = vmatmul.mubr.bf16.gmra.mrb[0].mxu0 %v1482
      %v1522 = vpop.f32.mrb[0].mxu0
      %v1523 = vadd.f32 %v1463, %v1522
      %v1524 = vpop.f32.mrb[0].mxu0
      %v1525 = vpop.f32.mrb[0].mxu0
      %v1526 = vpop.f32.mrb[0].mxu0
      %1527 = vdwg.mxu0
      %v1528 = vmax.f32 %v1523, 0.0
      %v1529 = vpack.c.bf16 %v1528, %v1528
      %v1530 = vld [vmem:[%s4] sm:$0x3]
      %v1531 = vld [vmem:[%s5] sm:$0x7]
      %1533 = vset.pattern.permute.xlu0 0
      %1534 = vperm.xlu0 %1533, %v1531
      %v1535 = vpop.permute.xlu0 %1534
      %vm1537 = vcmask 64512
      %v1539 = vsel %vm1537, %v1530, 0
      %vm1541 = vcmask 1043456
      %v1543 = vsel %vm1541, %v1529, 0
      %1545 = vmatprep.subr.bf16.mxu0 0
      %1546 = vmatpush1.bf16.msra.mxu0 %v1543
      %1547 = vmatprep.subr.bf16.mxu0 0
      %1548 = vmatpush1.bf16.msra.mxu0 0
      %1549 = vmatprep.subr.bf16.mxu0 0
      %1550 = vmatpush1.bf16.msra.mxu0 0
      %1551 = vmatprep.subr.bf16.mxu0 0
      %1552 = vmatpush1.bf16.msra.mxu0 0
      %1553 = vmatprep.subr.bf16.mxu0 0
      %1554 = vmatpush1.bf16.msra.mxu0 0
      %1555 = vmatprep.subr.bf16.mxu0 0
      %1556 = vmatpush1.bf16.msra.mxu0 0
      %1557 = vmatprep.subr.bf16.mxu0 0
      %1558 = vmatpush1.bf16.msra.mxu0 0
      %1559 = vmatprep.subr.bf16.mxu0 0
      %1560 = vmatpush1.bf16.msra.mxu0 0
      %1561 = vmatprep.subr.bf16.mxu0 0
      %1562 = vmatpush1.bf16.msra.mxu0 0
      %1563 = vmatprep.subr.bf16.mxu0 0
      %1564 = vmatpush1.bf16.msra.mxu0 0
      %1565 = vmatprep.subr.bf16.mxu0 0
      %1566 = vmatpush1.bf16.msra.mxu0 0
      %1567 = vmatprep.subr.bf16.mxu0 0
      %1568 = vmatpush1.bf16.msra.mxu0 0
      %1569 = vmatprep.subr.bf16.mxu0 0
      %1570 = vmatpush1.bf16.msra.mxu0 0
      %1571 = vmatprep.subr.bf16.mxu0 0
      %1572 = vmatpush1.bf16.msra.mxu0 0
      %1573 = vmatprep.subr.bf16.mxu0 0
      %1574 = vmatpush1.bf16.msra.mxu0 0
      %1575 = vmatprep.subr.bf16.mxu0 0
      %1576 = vmatpush1.bf16.msra.mxu0 0
      %1577 = vmatprep.mubr.bf16.mxu0 0
      %1578 = vmatmul.mubr.bf16.gmra.mrb[0].mxu0 %v1539
      %v1579 = vpop.f32.mrb[0].mxu0
      %v1580 = vadd.f32 %v1535, %v1579
      %v1581 = vpop.f32.mrb[0].mxu0
      %v1582 = vpop.f32.mrb[0].mxu0
      %v1583 = vpop.f32.mrb[0].mxu0
      %1584 = vdwg.mxu0
      %v1585 = vpack.c.bf16 %v1580, %v1580
      %vm1586 = vcmask 517120
      %vm1587 = vsmask.f32 1280
      %vm1588 = vmand %vm1586, %vm1587
      %v1589 = vld [vmem:[%s289] sm:$0x3]
      %v1590 = vsel %vm1588, %v1585, %v1589
      %1591 = vst [vmem:[%s289] sm:$0x3] %v1590
      %vm1592 = vcmask 76800
      %1593 = vst.msk [vmem:[%s285] sm:$0xf] %vm1592, 0
      %1594 = vst.msk [vmem:[%s285 + $0x4] sm:$0xf] %vm1592, 0
      %1595 = vst.msk [vmem:[%s285 + $0x8] sm:$0xf] %vm1592, 0
      %1596 = vst.msk [vmem:[%s285 + $0xc] sm:$0xf] %vm1592, 0
      %1597 = vst.msk [vmem:[%s285 + $0x10] sm:$0xf] %vm1592, 0
      %1598 = vst.msk [vmem:[%s285 + $0x14] sm:$0xf] %vm1592, 0
      %1599 = vst.msk [vmem:[%s285 + $0x18] sm:$0xf] %vm1592, 0
      %1600 = vst.msk [vmem:[%s285 + $0x1c] sm:$0xf] %vm1592, 0
      %1601 = vst.msk [vmem:[%s285 + $0x20] sm:$0xf] %vm1592, 0
      %1602 = vst.msk [vmem:[%s285 + $0x24] sm:$0xf] %vm1592, 0
      %v1604 = vunpack.c.l.b16 %v1529
      %v1605 = vpack.c.b16 %v1604, %v1604
      %1606 = vrot.lane.b32.xlu0 %v1605, 1
      %v1607 = vpop.permute.xlu0 %1606
      %s1609 = scalar_lea.vmem %s285, 4
      %vm1610 = vcmask 68616
      %1611 = vst.msk [vmem:[%s1609] sm:$0xf] %vm1610, %v1607
      %1612 = vrot.lane.b32.xlu0 %v1605, 121
      %v1613 = vpop.permute.xlu0 %1612
      %s1615 = scalar_lea.vmem %s285, 8
      %1616 = vst.msk [vmem:[%s1615] sm:$0xf] %vm1610, %v1613
      %1617 = vrot.lane.b32.xlu0 %v1605, 113
      %v1618 = vpop.permute.xlu0 %1617
      %s1620 = scalar_lea.vmem %s285, 12
      %1621 = vst.msk [vmem:[%s1620] sm:$0xf] %vm1610, %v1618
      %1622 = vrot.lane.b32.xlu0 %v1605, 105
      %v1623 = vpop.permute.xlu0 %1622
      %s1625 = scalar_lea.vmem %s285, 16
      %1626 = vst.msk [vmem:[%s1625] sm:$0xf] %vm1610, %v1623
      %1627 = vrot.lane.b32.xlu0 %v1605, 97
      %v1628 = vpop.permute.xlu0 %1627
      %s1630 = scalar_lea.vmem %s285, 20
      %1631 = vst.msk [vmem:[%s1630] sm:$0xf] %vm1610, %v1628
      %1632 = vrot.lane.b32.xlu0 %v1605, 89
      %v1633 = vpop.permute.xlu0 %1632
      %s1635 = scalar_lea.vmem %s285, 24
      %1636 = vst.msk [vmem:[%s1635] sm:$0xf] %vm1610, %v1633
      %1637 = vrot.lane.b32.xlu0 %v1605, 81
      %v1638 = vpop.permute.xlu0 %1637
      %s1640 = scalar_lea.vmem %s285, 28
      %1641 = vst.msk [vmem:[%s1640] sm:$0xf] %vm1610, %v1638
      %1642 = vrot.lane.b32.xlu0 %v1605, 73
      %v1643 = vpop.permute.xlu0 %1642
      %s1645 = scalar_lea.vmem %s285, 32
      %1646 = vst.msk [vmem:[%s1645] sm:$0xf] %vm1610, %v1643
      %p1647 = scmp.lt.s32.totalorder %s19, 1
      %s1648 = scalar_select %p1647, %s19, 1
      %s1649 = smul.addr %s1648, 10
      %s1650 = smul.addr %s1649, 4
      %s1651 = scalar_lea.vmem %s6, %s1650
      %p1652 = scmp.lt.s32.totalorder %s19, 1
      %s1653 = scalar_select %p1652, %s19, 1
      %s1654 = smul.addr %s1653, 2
      %s1655 = scalar_lea.vmem %s7, %s1654
      // Predicated region
      $region45: #{simple_segmentation_forward.4} parent=43 // pred_check
        %p1656 = pneg %p168
      $region46: #{simple_segmentation_forward.4} parent=43 // pred_check_branch
        %1658 = sbr.rel (%p1656) target = $region48
      $region47: #{simple_segmentation_forward.4} parent=43 // pred_region
        _
      $region48: #{simple_segmentation_forward.4} parent=43 // pred_fallthru
        _
      // Predicated region
      $region49: #{simple_segmentation_forward.4} parent=43 // pred_check
        %p1659 = pneg %p194
      $region50: #{simple_segmentation_forward.4} parent=43 // pred_check_branch
        %1661 = sbr.rel (%p1659) target = $region52
      $region51: #{simple_segmentation_forward.4} parent=43 // pred_region
        _
      $region52: #{simple_segmentation_forward.4} parent=43 // pred_fallthru
        _
    $region44: #{simple_segmentation_forward.4} parent=5 // pred_fallthru
      _
    %p1662 = scmp.le.s32.totalorder 2, %s14
    // Predicated region
    $region53: #{simple_segmentation_forward.4} parent=5 // pred_check
      %p1663 = pneg %p1662
    $region54: #{simple_segmentation_forward.4} parent=5 // pred_check_branch
      %1665 = sbr.rel (%p1663) target = $region56
    $region55: #{simple_segmentation_forward.4} parent=5 // pred_region
      %s1666 = ssub.s32 %s14, 2
      // Predicated region
      $region57: #{simple_segmentation_forward.4} parent=55 // pred_check
        %p1667 = pneg %p174
      $region58: #{simple_segmentation_forward.4} parent=55 // pred_check_branch
        %1669 = sbr.rel (%p1667) target = $region60
      $region59: #{simple_segmentation_forward.4} parent=55 // pred_region
        %p1670 = scmp.lt.s32.totalorder %s20, 1
        %s1671 = scalar_select %p1670, %s20, 1
        %s1672 = smul.addr %s1671, 10
        %s1673 = smul.addr %s1672, 4
        %s1674 = scalar_lea.vmem %s6, %s1673
      $region60: #{simple_segmentation_forward.4} parent=55 // pred_fallthru
        _
      // Predicated region
      $region61: #{simple_segmentation_forward.4} parent=55 // pred_check
        %p1675 = pneg %p200
      $region62: #{simple_segmentation_forward.4} parent=55 // pred_check_branch
        %1677 = sbr.rel (%p1675) target = $region64
      $region63: #{simple_segmentation_forward.4} parent=55 // pred_region
        %p1678 = scmp.lt.s32.totalorder %s20, 1
        %s1679 = scalar_select %p1678, %s20, 1
        %s1680 = smul.addr %s1679, 2
        %s1681 = scalar_lea.vmem %s7, %s1680
      $region64: #{simple_segmentation_forward.4} parent=55 // pred_fallthru
        _
    $region56: #{simple_segmentation_forward.4} parent=5 // pred_fallthru
      _
  $region6: #{simple_segmentation_forward.4} parent=0 // loop_footer
    %s18 = sadd.s32 1, %s14
  $region7: #{simple_segmentation_forward.4} parent=0 // loop_footer_branch
    %13 = sbr.rel target = $region3
  $region8: #{simple_segmentation_forward.4} parent=0 // loop_exit
    _

</llo_original>
